<compile_context>
chip_gen: v6e
topology: v6e:2x2x1
jax: 0.10.0
libtpu: 0.0.40
codegen_flags: <defaults>
</compile_context>

<pallas_src>
import functools

import jax
import jax.numpy as jnp
from jax.experimental import pallas as pl
from jax.experimental.pallas import tpu as pltpu


def _elu(x):
    # ELU(alpha=1): x if x > 0 else exp(x) - 1  (min-guard keeps exp in range)
    return jnp.where(x > 0, x, jnp.exp(jnp.minimum(x, 0.0)) - 1.0)


def _dot(a, b):
    return jnp.dot(a, b, preferred_element_type=jnp.float32)


# ------------------------------ fused kernel -------------------------------- #
# One grid step = one molecule.  All n_layers of EGNN message passing run
# inside, with h resident; only per-molecule tensors stream per step.

def _encoder_layers_kernel(n_layers,
                           h0_ref, grow_ref, gcol_ref, gscat_ref, ea_ref, rad_ref,
                           emb_w_ref, emb_b_ref,
                           we_hr_ref, we_hc_ref, we_ea_ref, we_rad_ref, be1_ref,
                           we2_ref, be2_ref,
                           wn_h_ref, wn_agg_ref, bn1_ref, wn2_ref, bn2_ref,
                           h_out_ref):
    bf16 = jnp.bfloat16
    g_row = grow_ref[0]          # [e, n] bf16 one-hot gather (source nodes)
    g_col = gcol_ref[0]          # [e, n] bf16 one-hot gather (target nodes)
    g_scat = gscat_ref[0]        # [n, e] bf16 pre-transposed scatter (= g_row^T)
    ea = ea_ref[0]               # [e, in_edge_nf] bf16
    radial = rad_ref[0]          # [e, 1] f32 (precomputed in the wrapper)

    # node embedding: h = h0 @ W_emb + b   (f32 accumulation)
    h = _dot(h0_ref[0].astype(bf16), emb_w_ref[...]) + emb_b_ref[...]   # [n, Hp]

    for l in range(n_layers):    # static unroll (tiny trip count, n_layers=2)
        hb = h.astype(bf16)
        # ---- edge model (concat-free, projection-before-gather) ----
        hr = _dot(hb, we_hr_ref[l]).astype(bf16)                        # [n, Hp]
        hc = _dot(hb, we_hc_ref[l]).astype(bf16)                        # [n, Hp]
        pre = (_dot(g_row, hr) + _dot(g_col, hc)
               + _dot(ea, we_ea_ref[l])
               + radial * we_rad_ref[l]
               + be1_ref[l])                                            # [e, Hp]
        m = _elu(pre)
        m = _elu(_dot(m.astype(bf16), we2_ref[l]) + be2_ref[l])         # [e, Hp]

        # ---- unsorted_segment_sum(m, row) == g_row^T @ m (f32 accumulate) ----
        agg = _dot(g_scat, m.astype(bf16))                              # [n, Hp]

        # ---- node model (node_attr == current h folded into wn_h) ----
        h1 = _elu(_dot(hb, wn_h_ref[l])
                  + _dot(agg.astype(bf16), wn_agg_ref[l])
                  + bn1_ref[l])
        h = _dot(h1.astype(bf16), wn2_ref[l]) + bn2_ref[l]              # [n, Hp]

    h_out_ref[0] = h            # lane-dense [n, Hp] f32 store


# ------------------------------ JAX wrapper --------------------------------- #

def encoder_forward(params, h0, label, x, rows_local, cols_local, edge_attr, eps,
                    *, hidden_nf, latent_dim, n_layers):
    """h0:[B,n,in_node_nf]  x:[B,n,3]  edge_attr:[B,e,in_edge_nf]
    rows_local/cols_local:[B,e] int32 (per-molecule node indices)
    label:[B*n,7]  eps:[B*n,latent]  ->  z:[B*n,latent]"""
    bf16 = jnp.bfloat16
    B, n_nodes, _ = h0.shape
    hp = params["emb_b"].shape[1]

    # ---- graph operands (cheap XLA glue, loop-invariant, built per call) ----
    g_row = jax.nn.one_hot(rows_local, n_nodes, dtype=bf16)     # [B, e, n]
    g_col = jax.nn.one_hot(cols_local, n_nodes, dtype=bf16)     # [B, e, n]
    g_scat = jnp.swapaxes(g_row, 1, 2)                          # [B, n, e]
    gather_nodes = jax.vmap(lambda xb, ib: xb[ib])
    x_r = gather_nodes(x, rows_local)                           # [B, e, 3]
    x_c = gather_nodes(x, cols_local)                           # [B, e, 3]
    radial = jnp.sum((x_r - x_c) ** 2, axis=-1, keepdims=True)  # [B, e, 1] f32
    ea = edge_attr.astype(bf16)

    def per_mol(shape):         # one molecule per grid step
        n = len(shape)
        return pl.BlockSpec((1,) + tuple(shape[1:]),
                            lambda b, n=n: (b,) + (0,) * (n - 1))

    def resident(shape):        # whole-array VMEM resident (weights)
        n = len(shape)
        return pl.BlockSpec(tuple(shape), lambda b, n=n: (0,) * n)

    kernel_inputs = (
        h0, g_row, g_col, g_scat, ea, radial,
        params["emb_w"], params["emb_b"],
        params["we_hr"], params["we_hc"], params["we_ea"], params["we_rad"],
        params["be1"], params["we2"], params["be2"],
        params["wn_h"], params["wn_agg"], params["bn1"],
        params["wn2"], params["bn2"],
    )
    in_specs = ([per_mol(a.shape) for a in kernel_inputs[:6]]
                + [resident(a.shape) for a in kernel_inputs[6:]])

    h_all = pl.pallas_call(
        functools.partial(_encoder_layers_kernel, n_layers),
        grid=(B,),
        in_specs=in_specs,
        out_specs=pl.BlockSpec((1, n_nodes, hp), lambda b: (b, 0, 0)),
        out_shape=jax.ShapeDtypeStruct((B, n_nodes, hp), jnp.float32),
        compiler_params=pltpu.CompilerParams(
            dimension_semantics=("parallel",),        # v7x megacore sharding
            vmem_limit_bytes=48 * 1024 * 1024),       # headroom under v7x 64 MiB
    )(*kernel_inputs)

    # ---- VAE head + reparameterize: tiny, lane-narrow -> plain-JAX epilogue ----
    h_final = h_all.reshape(B * n_nodes, hp)[:, :hidden_nf]
    hl = jnp.concatenate([h_final, label], axis=1)               # [N, H+7]
    mu = hl @ params["wmu"] + params["bmu"]
    log_var = hl @ params["wvar"] + params["bvar"]
    # reparameterize(): z = mu + 0.01 * eps * exp(log_var / 2)
    return mu + 0.01 * eps * jnp.exp(0.5 * log_var)


# ------------------------------ parameter init ------------------------------ #

def xavier_uniform(key, fan_in, fan_out, gain=1.0):
    bound = gain * (6.0 / (fan_in + fan_out)) ** 0.5
    return jax.random.uniform(key, (fan_in, fan_out), jnp.float32, -bound, bound)


def init_encoder_params(key, in_node_nf, in_edge_nf, hidden_nf, latent_dim,
                        n_layers=2, gain2=1.0):
    """Initialize PyTorch-layout weights, then split / fold / zero-pad to a
    128-lane hidden width and cast MXU operands to bf16 (done once)."""
    hid = hidden_nf
    hp = ((hid + 127) // 128) * 128          # lane-dense padded hidden width
    bf16 = jnp.bfloat16
    keys = jax.random.split(key, 3 + 4 * n_layers)
    ki = iter(keys)

    emb_w = xavier_uniform(next(ki), in_node_nf, hid, gain2)
    wmu = xavier_uniform(next(ki), hid + 7, latent_dim, gain2)
    wvar = xavier_uniform(next(ki), hid + 7, latent_dim, gain2)

    edge_in = 2 * hid + 1 + in_edge_nf       # cat(h[row], h[col], radial, ea)
    node_in = 3 * hid                        # cat(h, agg, node_attr=h)

    def pad_out(w):                          # pad output-feature dim H -> Hp
        return jnp.pad(w, [(0, 0)] * (w.ndim - 1) + [(0, hp - w.shape[-1])])

    def pad_sq(w):                           # pad [H, H] -> [Hp, Hp]
        return jnp.pad(w, [(0, hp - w.shape[0]), (0, hp - w.shape[1])])

    we_hr, we_hc, we_ea, we_rad = [], [], [], []
    we2, wn_h, wn_agg, wn2 = [], [], [], []
    for _ in range(n_layers):
        we1 = xavier_uniform(next(ki), edge_in, hid)
        wn1 = xavier_uniform(next(ki), node_in, hid)
        w2e = xavier_uniform(next(ki), hid, hid)
        w2n = xavier_uniform(next(ki), hid, hid)
        # column-split of we1 (rows correspond to cat order)
        we_hr.append(pad_sq(we1[:hid]))
        we_hc.append(pad_sq(we1[hid:2 * hid]))
        we_rad.append(pad_out(we1[2 * hid:2 * hid + 1]))
        we_ea.append(pad_out(we1[2 * hid + 1:]))
        we2.append(pad_sq(w2e))
        # node_attr == current h (Encoder passes node_attr=h) -> fold rows
        wn_h.append(pad_sq(wn1[:hid] + wn1[2 * hid:]))
        wn_agg.append(pad_sq(wn1[hid:2 * hid]))
        wn2.append(pad_sq(w2n))

    def zeros1(f):
        return jnp.zeros((n_layers, 1, f), jnp.float32)

    return {
        # kernel-side (bf16 MXU operands, f32 biases / broadcast operands)
        "emb_w": jnp.pad(emb_w, [(0, 0), (0, hp - hid)]).astype(bf16),
        "emb_b": jnp.zeros((1, hp), jnp.float32),
        "we_hr": jnp.stack(we_hr).astype(bf16),
        "we_hc": jnp.stack(we_hc).astype(bf16),
        "we_ea": jnp.stack(we_ea).astype(bf16),
        "we_rad": jnp.stack(we_rad),               # VPU broadcast-mult: keep f32
        "be1": zeros1(hp),
        "we2": jnp.stack(we2).astype(bf16), "be2": zeros1(hp),
        "wn_h": jnp.stack(wn_h).astype(bf16),
        "wn_agg": jnp.stack(wn_agg).astype(bf16),
        "bn1": zeros1(hp),
        "wn2": jnp.stack(wn2).astype(bf16), "bn2": zeros1(hp),
        # VAE head stays unpadded f32 (tiny XLA epilogue in the wrapper)
        "wmu": wmu, "bmu": jnp.zeros((latent_dim,), jnp.float32),
        "wvar": wvar, "bvar": jnp.zeros((latent_dim,), jnp.float32),
    }


# ---------------------------------- main ------------------------------------ #

if __name__ == "__main__":
    batch, n_nodes = 2, 8
    in_node_nf, in_edge_nf = 5, 4
    hidden_nf, latent_dim = 32, 16
    n_layers = 2
    N = batch * n_nodes                      # 16 total nodes

    # fully connected (no self-loop) edges inside each molecule (local indices)
    loc_r, loc_c = [], []
    for i in range(n_nodes):
        for j in range(n_nodes):
            if i != j:
                loc_r.append(i)
                loc_c.append(j)
    rows_local = jnp.tile(jnp.asarray(loc_r, jnp.int32)[None, :], (batch, 1))
    cols_local = jnp.tile(jnp.asarray(loc_c, jnp.int32)[None, :], (batch, 1))
    e_mol = rows_local.shape[1]              # 56 edges per molecule

    key = jax.random.PRNGKey(0)
    k_p, k_h0, k_lbl, k_x, k_ea, k_eps = jax.random.split(key, 6)

    params = init_encoder_params(k_p, in_node_nf, in_edge_nf, hidden_nf,
                                 latent_dim, n_layers=n_layers)

    h0 = jax.random.normal(k_h0, (batch, n_nodes, in_node_nf), jnp.float32)
    x = jax.random.normal(k_x, (batch, n_nodes, 3), jnp.float32)
    edge_attr = jax.random.normal(k_ea, (batch, e_mol, in_edge_nf), jnp.float32)
    label = jax.random.normal(k_lbl, (N, 7), jnp.float32)
    eps = jax.random.normal(k_eps, (N, latent_dim), jnp.float32)  # randn_like(std)

    fwd = jax.jit(functools.partial(encoder_forward, hidden_nf=hidden_nf,
                                    latent_dim=latent_dim, n_layers=n_layers))
    z = fwd(params, h0, label, x, rows_local, cols_local, edge_attr, eps)
    z = jax.block_until_ready(z)
    assert z.shape == (N, latent_dim) and z.dtype == jnp.float32
    print("KERNEL_OK")
</pallas_src>

<mosaic_0001>
module attributes {stable_mosaic.version = 11 : i64} {
  func.func @_encoder_layers_kernel(%arg0: i32, %arg1: memref<1x8x5xf32, #tpu.memory_space<vmem>>, %arg2: memref<1x56x8xbf16, #tpu.memory_space<vmem>>, %arg3: memref<1x56x8xbf16, #tpu.memory_space<vmem>>, %arg4: memref<1x8x56xbf16, #tpu.memory_space<vmem>>, %arg5: memref<1x56x4xbf16, #tpu.memory_space<vmem>>, %arg6: memref<1x56x1xf32, #tpu.memory_space<vmem>>, %arg7: memref<5x128xbf16, #tpu.memory_space<vmem>>, %arg8: memref<1x128xf32, #tpu.memory_space<vmem>>, %arg9: memref<2x128x128xbf16, #tpu.memory_space<vmem>>, %arg10: memref<2x128x128xbf16, #tpu.memory_space<vmem>>, %arg11: memref<2x4x128xbf16, #tpu.memory_space<vmem>>, %arg12: memref<2x1x128xf32, #tpu.memory_space<vmem>>, %arg13: memref<2x1x128xf32, #tpu.memory_space<vmem>>, %arg14: memref<2x128x128xbf16, #tpu.memory_space<vmem>>, %arg15: memref<2x1x128xf32, #tpu.memory_space<vmem>>, %arg16: memref<2x128x128xbf16, #tpu.memory_space<vmem>>, %arg17: memref<2x128x128xbf16, #tpu.memory_space<vmem>>, %arg18: memref<2x1x128xf32, #tpu.memory_space<vmem>>, %arg19: memref<2x128x128xbf16, #tpu.memory_space<vmem>>, %arg20: memref<2x1x128xf32, #tpu.memory_space<vmem>>, %arg21: memref<1x8x128xf32, #tpu.memory_space<vmem>>) attributes {dimension_semantics = [#tpu.dimension_semantics<parallel>], iteration_bounds = array<i64: 2>, scalar_prefetch = 0 : i64, scratch_operands = 0 : i64, tpu.core_type = #tpu.core_type<tc>, window_params = [{transform_indices = @transform_0, window_bounds = array<i64: 1, 8, 5>}, {transform_indices = @transform_1, window_bounds = array<i64: 1, 56, 8>}, {transform_indices = @transform_2, window_bounds = array<i64: 1, 56, 8>}, {transform_indices = @transform_3, window_bounds = array<i64: 1, 8, 56>}, {transform_indices = @transform_4, window_bounds = array<i64: 1, 56, 4>}, {transform_indices = @transform_5, window_bounds = array<i64: 1, 56, 1>}, {pipeline_mode = #tpu.pipeline_mode<synchronous>, transform_indices = @transform_6, window_bounds = array<i64: 5, 128>}, {pipeline_mode = #tpu.pipeline_mode<synchronous>, transform_indices = @transform_7, window_bounds = array<i64: 1, 128>}, {pipeline_mode = #tpu.pipeline_mode<synchronous>, transform_indices = @transform_8, window_bounds = array<i64: 2, 128, 128>}, {pipeline_mode = #tpu.pipeline_mode<synchronous>, transform_indices = @transform_9, window_bounds = array<i64: 2, 128, 128>}, {pipeline_mode = #tpu.pipeline_mode<synchronous>, transform_indices = @transform_10, window_bounds = array<i64: 2, 4, 128>}, {pipeline_mode = #tpu.pipeline_mode<synchronous>, transform_indices = @transform_11, window_bounds = array<i64: 2, 1, 128>}, {pipeline_mode = #tpu.pipeline_mode<synchronous>, transform_indices = @transform_12, window_bounds = array<i64: 2, 1, 128>}, {pipeline_mode = #tpu.pipeline_mode<synchronous>, transform_indices = @transform_13, window_bounds = array<i64: 2, 128, 128>}, {pipeline_mode = #tpu.pipeline_mode<synchronous>, transform_indices = @transform_14, window_bounds = array<i64: 2, 1, 128>}, {pipeline_mode = #tpu.pipeline_mode<synchronous>, transform_indices = @transform_15, window_bounds = array<i64: 2, 128, 128>}, {pipeline_mode = #tpu.pipeline_mode<synchronous>, transform_indices = @transform_16, window_bounds = array<i64: 2, 128, 128>}, {pipeline_mode = #tpu.pipeline_mode<synchronous>, transform_indices = @transform_17, window_bounds = array<i64: 2, 1, 128>}, {pipeline_mode = #tpu.pipeline_mode<synchronous>, transform_indices = @transform_18, window_bounds = array<i64: 2, 128, 128>}, {pipeline_mode = #tpu.pipeline_mode<synchronous>, transform_indices = @transform_19, window_bounds = array<i64: 2, 1, 128>}, {transform_indices = @transform_20, window_bounds = array<i64: 1, 8, 128>}]} {
    %c0 = arith.constant 0 : index
    %c0_0 = arith.constant 0 : index
    %c0_1 = arith.constant 0 : index
    %0 = vector.load %arg2[%c0, %c0_0, %c0_1] : memref<1x56x8xbf16, #tpu.memory_space<vmem>>, vector<1x56x8xbf16>
    %1 = vector.shape_cast %0 : vector<1x56x8xbf16> to vector<56x8xbf16>
    %c0_2 = arith.constant 0 : index
    %c0_3 = arith.constant 0 : index
    %c0_4 = arith.constant 0 : index
    %2 = vector.load %arg3[%c0_2, %c0_3, %c0_4] : memref<1x56x8xbf16, #tpu.memory_space<vmem>>, vector<1x56x8xbf16>
    %3 = vector.shape_cast %2 : vector<1x56x8xbf16> to vector<56x8xbf16>
    %c0_5 = arith.constant 0 : index
    %c0_6 = arith.constant 0 : index
    %c0_7 = arith.constant 0 : index
    %4 = vector.load %arg4[%c0_5, %c0_6, %c0_7] : memref<1x8x56xbf16, #tpu.memory_space<vmem>>, vector<1x8x56xbf16>
    %5 = vector.shape_cast %4 : vector<1x8x56xbf16> to vector<8x56xbf16>
    %c0_8 = arith.constant 0 : index
    %c0_9 = arith.constant 0 : index
    %c0_10 = arith.constant 0 : index
    %6 = vector.load %arg5[%c0_8, %c0_9, %c0_10] : memref<1x56x4xbf16, #tpu.memory_space<vmem>>, vector<1x56x4xbf16>
    %7 = vector.shape_cast %6 : vector<1x56x4xbf16> to vector<56x4xbf16>
    %c0_11 = arith.constant 0 : index
    %c0_12 = arith.constant 0 : index
    %c0_13 = arith.constant 0 : index
    %8 = vector.load %arg6[%c0_11, %c0_12, %c0_13] : memref<1x56x1xf32, #tpu.memory_space<vmem>>, vector<1x56x1xf32>
    %9 = vector.shape_cast %8 : vector<1x56x1xf32> to vector<56x1xf32>
    %c0_14 = arith.constant 0 : index
    %c0_15 = arith.constant 0 : index
    %c0_16 = arith.constant 0 : index
    %10 = vector.load %arg1[%c0_14, %c0_15, %c0_16] : memref<1x8x5xf32, #tpu.memory_space<vmem>>, vector<1x8x5xf32>
    %11 = vector.shape_cast %10 : vector<1x8x5xf32> to vector<8x5xf32>
    %12 = arith.truncf %11 : vector<8x5xf32> to vector<8x5xbf16>
    %c0_17 = arith.constant 0 : index
    %c0_18 = arith.constant 0 : index
    %13 = vector.load %arg7[%c0_17, %c0_18] : memref<5x128xbf16, #tpu.memory_space<vmem>>, vector<5x128xbf16>
    %cst = arith.constant dense<0.000000e+00> : vector<8x128xf32>
    %14 = tpu.matmul %12, %13, %cst {dimension_numbers = #tpu.dot_dimension_numbers<[1], [0], [0], [1], [0, 0, 1, 1], [], []>} : vector<8x5xbf16>, vector<5x128xbf16>, vector<8x128xf32> -> vector<8x128xf32>
    %c0_19 = arith.constant 0 : index
    %c0_20 = arith.constant 0 : index
    %15 = vector.load %arg8[%c0_19, %c0_20] : memref<1x128xf32, #tpu.memory_space<vmem>>, vector<1x128xf32>
    %16 = vector.broadcast %15 : vector<1x128xf32> to vector<8x128xf32>
    %17 = arith.addf %14, %16 : vector<8x128xf32>
    %18 = arith.truncf %17 : vector<8x128xf32> to vector<8x128xbf16>
    %c0_21 = arith.constant 0 : index
    %c0_22 = arith.constant 0 : index
    %c0_23 = arith.constant 0 : index
    %19 = vector.load %arg9[%c0_21, %c0_22, %c0_23] : memref<2x128x128xbf16, #tpu.memory_space<vmem>>, vector<1x128x128xbf16>
    %20 = vector.shape_cast %19 : vector<1x128x128xbf16> to vector<128x128xbf16>
    %cst_24 = arith.constant dense<0.000000e+00> : vector<8x128xf32>
    %21 = tpu.matmul %18, %20, %cst_24 {dimension_numbers = #tpu.dot_dimension_numbers<[1], [0], [0], [1], [0, 0, 1, 1], [], []>} : vector<8x128xbf16>, vector<128x128xbf16>, vector<8x128xf32> -> vector<8x128xf32>
    %22 = arith.truncf %21 : vector<8x128xf32> to vector<8x128xbf16>
    %c0_25 = arith.constant 0 : index
    %c0_26 = arith.constant 0 : index
    %c0_27 = arith.constant 0 : index
    %23 = vector.load %arg10[%c0_25, %c0_26, %c0_27] : memref<2x128x128xbf16, #tpu.memory_space<vmem>>, vector<1x128x128xbf16>
    %24 = vector.shape_cast %23 : vector<1x128x128xbf16> to vector<128x128xbf16>
    %cst_28 = arith.constant dense<0.000000e+00> : vector<8x128xf32>
    %25 = tpu.matmul %18, %24, %cst_28 {dimension_numbers = #tpu.dot_dimension_numbers<[1], [0], [0], [1], [0, 0, 1, 1], [], []>} : vector<8x128xbf16>, vector<128x128xbf16>, vector<8x128xf32> -> vector<8x128xf32>
    %26 = arith.truncf %25 : vector<8x128xf32> to vector<8x128xbf16>
    %cst_29 = arith.constant dense<0.000000e+00> : vector<56x128xf32>
    %27 = tpu.matmul %1, %22, %cst_29 {dimension_numbers = #tpu.dot_dimension_numbers<[1], [0], [0], [1], [0, 0, 1, 1], [], []>} : vector<56x8xbf16>, vector<8x128xbf16>, vector<56x128xf32> -> vector<56x128xf32>
    %cst_30 = arith.constant dense<0.000000e+00> : vector<56x128xf32>
    %28 = tpu.matmul %3, %26, %cst_30 {dimension_numbers = #tpu.dot_dimension_numbers<[1], [0], [0], [1], [0, 0, 1, 1], [], []>} : vector<56x8xbf16>, vector<8x128xbf16>, vector<56x128xf32> -> vector<56x128xf32>
    %29 = arith.addf %27, %28 : vector<56x128xf32>
    %c0_31 = arith.constant 0 : index
    %c0_32 = arith.constant 0 : index
    %c0_33 = arith.constant 0 : index
    %30 = vector.load %arg11[%c0_31, %c0_32, %c0_33] : memref<2x4x128xbf16, #tpu.memory_space<vmem>>, vector<1x4x128xbf16>
    %31 = vector.shape_cast %30 : vector<1x4x128xbf16> to vector<4x128xbf16>
    %cst_34 = arith.constant dense<0.000000e+00> : vector<56x128xf32>
    %32 = tpu.matmul %7, %31, %cst_34 {dimension_numbers = #tpu.dot_dimension_numbers<[1], [0], [0], [1], [0, 0, 1, 1], [], []>} : vector<56x4xbf16>, vector<4x128xbf16>, vector<56x128xf32> -> vector<56x128xf32>
    %33 = arith.addf %29, %32 : vector<56x128xf32>
    %c0_35 = arith.constant 0 : index
    %c0_36 = arith.constant 0 : index
    %c0_37 = arith.constant 0 : index
    %34 = vector.load %arg12[%c0_35, %c0_36, %c0_37] : memref<2x1x128xf32, #tpu.memory_space<vmem>>, vector<1x1x128xf32>
    %35 = vector.shape_cast %34 : vector<1x1x128xf32> to vector<1x128xf32>
    %36 = vector.broadcast %9 : vector<56x1xf32> to vector<56x128xf32>
    %37 = vector.broadcast %35 : vector<1x128xf32> to vector<56x128xf32>
    %38 = arith.mulf %36, %37 : vector<56x128xf32>
    %39 = arith.addf %33, %38 : vector<56x128xf32>
    %c0_38 = arith.constant 0 : index
    %c0_39 = arith.constant 0 : index
    %c0_40 = arith.constant 0 : index
    %40 = vector.load %arg13[%c0_38, %c0_39, %c0_40] : memref<2x1x128xf32, #tpu.memory_space<vmem>>, vector<1x1x128xf32>
    %41 = vector.shape_cast %40 : vector<1x1x128xf32> to vector<1x128xf32>
    %42 = vector.broadcast %41 : vector<1x128xf32> to vector<56x128xf32>
    %43 = arith.addf %39, %42 : vector<56x128xf32>
    %cst_41 = arith.constant 0.000000e+00 : f32
    %44 = vector.broadcast %cst_41 : f32 to vector<56x128xf32>
    %45 = arith.cmpf ogt, %43, %44 : vector<56x128xf32>
    %cst_42 = arith.constant 0.000000e+00 : f32
    %46 = vector.broadcast %cst_42 : f32 to vector<56x128xf32>
    %47 = arith.minimumf %43, %46 : vector<56x128xf32>
    %48 = math.exp %47 : vector<56x128xf32>
    %cst_43 = arith.constant 1.000000e+00 : f32
    %49 = vector.broadcast %cst_43 : f32 to vector<56x128xf32>
    %50 = arith.subf %48, %49 : vector<56x128xf32>
    %51 = arith.select %45, %43, %50 : vector<56x128xi1>, vector<56x128xf32>
    %52 = arith.truncf %51 : vector<56x128xf32> to vector<56x128xbf16>
    %c0_44 = arith.constant 0 : index
    %c0_45 = arith.constant 0 : index
    %c0_46 = arith.constant 0 : index
    %53 = vector.load %arg14[%c0_44, %c0_45, %c0_46] : memref<2x128x128xbf16, #tpu.memory_space<vmem>>, vector<1x128x128xbf16>
    %54 = vector.shape_cast %53 : vector<1x128x128xbf16> to vector<128x128xbf16>
    %cst_47 = arith.constant dense<0.000000e+00> : vector<56x128xf32>
    %55 = tpu.matmul %52, %54, %cst_47 {dimension_numbers = #tpu.dot_dimension_numbers<[1], [0], [0], [1], [0, 0, 1, 1], [], []>} : vector<56x128xbf16>, vector<128x128xbf16>, vector<56x128xf32> -> vector<56x128xf32>
    %c0_48 = arith.constant 0 : index
    %c0_49 = arith.constant 0 : index
    %c0_50 = arith.constant 0 : index
    %56 = vector.load %arg15[%c0_48, %c0_49, %c0_50] : memref<2x1x128xf32, #tpu.memory_space<vmem>>, vector<1x1x128xf32>
    %57 = vector.shape_cast %56 : vector<1x1x128xf32> to vector<1x128xf32>
    %58 = vector.broadcast %57 : vector<1x128xf32> to vector<56x128xf32>
    %59 = arith.addf %55, %58 : vector<56x128xf32>
    %cst_51 = arith.constant 0.000000e+00 : f32
    %60 = vector.broadcast %cst_51 : f32 to vector<56x128xf32>
    %61 = arith.cmpf ogt, %59, %60 : vector<56x128xf32>
    %cst_52 = arith.constant 0.000000e+00 : f32
    %62 = vector.broadcast %cst_52 : f32 to vector<56x128xf32>
    %63 = arith.minimumf %59, %62 : vector<56x128xf32>
    %64 = math.exp %63 : vector<56x128xf32>
    %cst_53 = arith.constant 1.000000e+00 : f32
    %65 = vector.broadcast %cst_53 : f32 to vector<56x128xf32>
    %66 = arith.subf %64, %65 : vector<56x128xf32>
    %67 = arith.select %61, %59, %66 : vector<56x128xi1>, vector<56x128xf32>
    %68 = arith.truncf %67 : vector<56x128xf32> to vector<56x128xbf16>
    %cst_54 = arith.constant dense<0.000000e+00> : vector<8x128xf32>
    %69 = tpu.matmul %5, %68, %cst_54 {dimension_numbers = #tpu.dot_dimension_numbers<[1], [0], [0], [1], [0, 0, 1, 1], [], []>} : vector<8x56xbf16>, vector<56x128xbf16>, vector<8x128xf32> -> vector<8x128xf32>
    %c0_55 = arith.constant 0 : index
    %c0_56 = arith.constant 0 : index
    %c0_57 = arith.constant 0 : index
    %70 = vector.load %arg16[%c0_55, %c0_56, %c0_57] : memref<2x128x128xbf16, #tpu.memory_space<vmem>>, vector<1x128x128xbf16>
    %71 = vector.shape_cast %70 : vector<1x128x128xbf16> to vector<128x128xbf16>
    %cst_58 = arith.constant dense<0.000000e+00> : vector<8x128xf32>
    %72 = tpu.matmul %18, %71, %cst_58 {dimension_numbers = #tpu.dot_dimension_numbers<[1], [0], [0], [1], [0, 0, 1, 1], [], []>} : vector<8x128xbf16>, vector<128x128xbf16>, vector<8x128xf32> -> vector<8x128xf32>
    %73 = arith.truncf %69 : vector<8x128xf32> to vector<8x128xbf16>
    %c0_59 = arith.constant 0 : index
    %c0_60 = arith.constant 0 : index
    %c0_61 = arith.constant 0 : index
    %74 = vector.load %arg17[%c0_59, %c0_60, %c0_61] : memref<2x128x128xbf16, #tpu.memory_space<vmem>>, vector<1x128x128xbf16>
    %75 = vector.shape_cast %74 : vector<1x128x128xbf16> to vector<128x128xbf16>
    %cst_62 = arith.constant dense<0.000000e+00> : vector<8x128xf32>
    %76 = tpu.matmul %73, %75, %cst_62 {dimension_numbers = #tpu.dot_dimension_numbers<[1], [0], [0], [1], [0, 0, 1, 1], [], []>} : vector<8x128xbf16>, vector<128x128xbf16>, vector<8x128xf32> -> vector<8x128xf32>
    %77 = arith.addf %72, %76 : vector<8x128xf32>
    %c0_63 = arith.constant 0 : index
    %c0_64 = arith.constant 0 : index
    %c0_65 = arith.constant 0 : index
    %78 = vector.load %arg18[%c0_63, %c0_64, %c0_65] : memref<2x1x128xf32, #tpu.memory_space<vmem>>, vector<1x1x128xf32>
    %79 = vector.shape_cast %78 : vector<1x1x128xf32> to vector<1x128xf32>
    %80 = vector.broadcast %79 : vector<1x128xf32> to vector<8x128xf32>
    %81 = arith.addf %77, %80 : vector<8x128xf32>
    %cst_66 = arith.constant 0.000000e+00 : f32
    %82 = vector.broadcast %cst_66 : f32 to vector<8x128xf32>
    %83 = arith.cmpf ogt, %81, %82 : vector<8x128xf32>
    %cst_67 = arith.constant 0.000000e+00 : f32
    %84 = vector.broadcast %cst_67 : f32 to vector<8x128xf32>
    %85 = arith.minimumf %81, %84 : vector<8x128xf32>
    %86 = math.exp %85 : vector<8x128xf32>
    %cst_68 = arith.constant 1.000000e+00 : f32
    %87 = vector.broadcast %cst_68 : f32 to vector<8x128xf32>
    %88 = arith.subf %86, %87 : vector<8x128xf32>
    %89 = arith.select %83, %81, %88 : vector<8x128xi1>, vector<8x128xf32>
    %90 = arith.truncf %89 : vector<8x128xf32> to vector<8x128xbf16>
    %c0_69 = arith.constant 0 : index
    %c0_70 = arith.constant 0 : index
    %c0_71 = arith.constant 0 : index
    %91 = vector.load %arg19[%c0_69, %c0_70, %c0_71] : memref<2x128x128xbf16, #tpu.memory_space<vmem>>, vector<1x128x128xbf16>
    %92 = vector.shape_cast %91 : vector<1x128x128xbf16> to vector<128x128xbf16>
    %cst_72 = arith.constant dense<0.000000e+00> : vector<8x128xf32>
    %93 = tpu.matmul %90, %92, %cst_72 {dimension_numbers = #tpu.dot_dimension_numbers<[1], [0], [0], [1], [0, 0, 1, 1], [], []>} : vector<8x128xbf16>, vector<128x128xbf16>, vector<8x128xf32> -> vector<8x128xf32>
    %c0_73 = arith.constant 0 : index
    %c0_74 = arith.constant 0 : index
    %c0_75 = arith.constant 0 : index
    %94 = vector.load %arg20[%c0_73, %c0_74, %c0_75] : memref<2x1x128xf32, #tpu.memory_space<vmem>>, vector<1x1x128xf32>
    %95 = vector.shape_cast %94 : vector<1x1x128xf32> to vector<1x128xf32>
    %96 = vector.broadcast %95 : vector<1x128xf32> to vector<8x128xf32>
    %97 = arith.addf %93, %96 : vector<8x128xf32>
    %98 = arith.truncf %97 : vector<8x128xf32> to vector<8x128xbf16>
    %c1 = arith.constant 1 : index
    %c0_76 = arith.constant 0 : index
    %c0_77 = arith.constant 0 : index
    %99 = vector.load %arg9[%c1, %c0_76, %c0_77] : memref<2x128x128xbf16, #tpu.memory_space<vmem>>, vector<1x128x128xbf16>
    %100 = vector.shape_cast %99 : vector<1x128x128xbf16> to vector<128x128xbf16>
    %cst_78 = arith.constant dense<0.000000e+00> : vector<8x128xf32>
    %101 = tpu.matmul %98, %100, %cst_78 {dimension_numbers = #tpu.dot_dimension_numbers<[1], [0], [0], [1], [0, 0, 1, 1], [], []>} : vector<8x128xbf16>, vector<128x128xbf16>, vector<8x128xf32> -> vector<8x128xf32>
    %102 = arith.truncf %101 : vector<8x128xf32> to vector<8x128xbf16>
    %c1_79 = arith.constant 1 : index
    %c0_80 = arith.constant 0 : index
    %c0_81 = arith.constant 0 : index
    %103 = vector.load %arg10[%c1_79, %c0_80, %c0_81] : memref<2x128x128xbf16, #tpu.memory_space<vmem>>, vector<1x128x128xbf16>
    %104 = vector.shape_cast %103 : vector<1x128x128xbf16> to vector<128x128xbf16>
    %cst_82 = arith.constant dense<0.000000e+00> : vector<8x128xf32>
    %105 = tpu.matmul %98, %104, %cst_82 {dimension_numbers = #tpu.dot_dimension_numbers<[1], [0], [0], [1], [0, 0, 1, 1], [], []>} : vector<8x128xbf16>, vector<128x128xbf16>, vector<8x128xf32> -> vector<8x128xf32>
    %106 = arith.truncf %105 : vector<8x128xf32> to vector<8x128xbf16>
    %cst_83 = arith.constant dense<0.000000e+00> : vector<56x128xf32>
    %107 = tpu.matmul %1, %102, %cst_83 {dimension_numbers = #tpu.dot_dimension_numbers<[1], [0], [0], [1], [0, 0, 1, 1], [], []>} : vector<56x8xbf16>, vector<8x128xbf16>, vector<56x128xf32> -> vector<56x128xf32>
    %cst_84 = arith.constant dense<0.000000e+00> : vector<56x128xf32>
    %108 = tpu.matmul %3, %106, %cst_84 {dimension_numbers = #tpu.dot_dimension_numbers<[1], [0], [0], [1], [0, 0, 1, 1], [], []>} : vector<56x8xbf16>, vector<8x128xbf16>, vector<56x128xf32> -> vector<56x128xf32>
    %109 = arith.addf %107, %108 : vector<56x128xf32>
    %c1_85 = arith.constant 1 : index
    %c0_86 = arith.constant 0 : index
    %c0_87 = arith.constant 0 : index
    %110 = vector.load %arg11[%c1_85, %c0_86, %c0_87] : memref<2x4x128xbf16, #tpu.memory_space<vmem>>, vector<1x4x128xbf16>
    %111 = vector.shape_cast %110 : vector<1x4x128xbf16> to vector<4x128xbf16>
    %cst_88 = arith.constant dense<0.000000e+00> : vector<56x128xf32>
    %112 = tpu.matmul %7, %111, %cst_88 {dimension_numbers = #tpu.dot_dimension_numbers<[1], [0], [0], [1], [0, 0, 1, 1], [], []>} : vector<56x4xbf16>, vector<4x128xbf16>, vector<56x128xf32> -> vector<56x128xf32>
    %113 = arith.addf %109, %112 : vector<56x128xf32>
    %c1_89 = arith.constant 1 : index
    %c0_90 = arith.constant 0 : index
    %c0_91 = arith.constant 0 : index
    %114 = vector.load %arg12[%c1_89, %c0_90, %c0_91] : memref<2x1x128xf32, #tpu.memory_space<vmem>>, vector<1x1x128xf32>
    %115 = vector.shape_cast %114 : vector<1x1x128xf32> to vector<1x128xf32>
    %116 = vector.broadcast %9 : vector<56x1xf32> to vector<56x128xf32>
    %117 = vector.broadcast %115 : vector<1x128xf32> to vector<56x128xf32>
    %118 = arith.mulf %116, %117 : vector<56x128xf32>
    %119 = arith.addf %113, %118 : vector<56x128xf32>
    %c1_92 = arith.constant 1 : index
    %c0_93 = arith.constant 0 : index
    %c0_94 = arith.constant 0 : index
    %120 = vector.load %arg13[%c1_92, %c0_93, %c0_94] : memref<2x1x128xf32, #tpu.memory_space<vmem>>, vector<1x1x128xf32>
    %121 = vector.shape_cast %120 : vector<1x1x128xf32> to vector<1x128xf32>
    %122 = vector.broadcast %121 : vector<1x128xf32> to vector<56x128xf32>
    %123 = arith.addf %119, %122 : vector<56x128xf32>
    %cst_95 = arith.constant 0.000000e+00 : f32
    %124 = vector.broadcast %cst_95 : f32 to vector<56x128xf32>
    %125 = arith.cmpf ogt, %123, %124 : vector<56x128xf32>
    %cst_96 = arith.constant 0.000000e+00 : f32
    %126 = vector.broadcast %cst_96 : f32 to vector<56x128xf32>
    %127 = arith.minimumf %123, %126 : vector<56x128xf32>
    %128 = math.exp %127 : vector<56x128xf32>
    %cst_97 = arith.constant 1.000000e+00 : f32
    %129 = vector.broadcast %cst_97 : f32 to vector<56x128xf32>
    %130 = arith.subf %128, %129 : vector<56x128xf32>
    %131 = arith.select %125, %123, %130 : vector<56x128xi1>, vector<56x128xf32>
    %132 = arith.truncf %131 : vector<56x128xf32> to vector<56x128xbf16>
    %c1_98 = arith.constant 1 : index
    %c0_99 = arith.constant 0 : index
    %c0_100 = arith.constant 0 : index
    %133 = vector.load %arg14[%c1_98, %c0_99, %c0_100] : memref<2x128x128xbf16, #tpu.memory_space<vmem>>, vector<1x128x128xbf16>
    %134 = vector.shape_cast %133 : vector<1x128x128xbf16> to vector<128x128xbf16>
    %cst_101 = arith.constant dense<0.000000e+00> : vector<56x128xf32>
    %135 = tpu.matmul %132, %134, %cst_101 {dimension_numbers = #tpu.dot_dimension_numbers<[1], [0], [0], [1], [0, 0, 1, 1], [], []>} : vector<56x128xbf16>, vector<128x128xbf16>, vector<56x128xf32> -> vector<56x128xf32>
    %c1_102 = arith.constant 1 : index
    %c0_103 = arith.constant 0 : index
    %c0_104 = arith.constant 0 : index
    %136 = vector.load %arg15[%c1_102, %c0_103, %c0_104] : memref<2x1x128xf32, #tpu.memory_space<vmem>>, vector<1x1x128xf32>
    %137 = vector.shape_cast %136 : vector<1x1x128xf32> to vector<1x128xf32>
    %138 = vector.broadcast %137 : vector<1x128xf32> to vector<56x128xf32>
    %139 = arith.addf %135, %138 : vector<56x128xf32>
    %cst_105 = arith.constant 0.000000e+00 : f32
    %140 = vector.broadcast %cst_105 : f32 to vector<56x128xf32>
    %141 = arith.cmpf ogt, %139, %140 : vector<56x128xf32>
    %cst_106 = arith.constant 0.000000e+00 : f32
    %142 = vector.broadcast %cst_106 : f32 to vector<56x128xf32>
    %143 = arith.minimumf %139, %142 : vector<56x128xf32>
    %144 = math.exp %143 : vector<56x128xf32>
    %cst_107 = arith.constant 1.000000e+00 : f32
    %145 = vector.broadcast %cst_107 : f32 to vector<56x128xf32>
    %146 = arith.subf %144, %145 : vector<56x128xf32>
    %147 = arith.select %141, %139, %146 : vector<56x128xi1>, vector<56x128xf32>
    %148 = arith.truncf %147 : vector<56x128xf32> to vector<56x128xbf16>
    %cst_108 = arith.constant dense<0.000000e+00> : vector<8x128xf32>
    %149 = tpu.matmul %5, %148, %cst_108 {dimension_numbers = #tpu.dot_dimension_numbers<[1], [0], [0], [1], [0, 0, 1, 1], [], []>} : vector<8x56xbf16>, vector<56x128xbf16>, vector<8x128xf32> -> vector<8x128xf32>
    %c1_109 = arith.constant 1 : index
    %c0_110 = arith.constant 0 : index
    %c0_111 = arith.constant 0 : index
    %150 = vector.load %arg16[%c1_109, %c0_110, %c0_111] : memref<2x128x128xbf16, #tpu.memory_space<vmem>>, vector<1x128x128xbf16>
    %151 = vector.shape_cast %150 : vector<1x128x128xbf16> to vector<128x128xbf16>
    %cst_112 = arith.constant dense<0.000000e+00> : vector<8x128xf32>
    %152 = tpu.matmul %98, %151, %cst_112 {dimension_numbers = #tpu.dot_dimension_numbers<[1], [0], [0], [1], [0, 0, 1, 1], [], []>} : vector<8x128xbf16>, vector<128x128xbf16>, vector<8x128xf32> -> vector<8x128xf32>
    %153 = arith.truncf %149 : vector<8x128xf32> to vector<8x128xbf16>
    %c1_113 = arith.constant 1 : index
    %c0_114 = arith.constant 0 : index
    %c0_115 = arith.constant 0 : index
    %154 = vector.load %arg17[%c1_113, %c0_114, %c0_115] : memref<2x128x128xbf16, #tpu.memory_space<vmem>>, vector<1x128x128xbf16>
    %155 = vector.shape_cast %154 : vector<1x128x128xbf16> to vector<128x128xbf16>
    %cst_116 = arith.constant dense<0.000000e+00> : vector<8x128xf32>
    %156 = tpu.matmul %153, %155, %cst_116 {dimension_numbers = #tpu.dot_dimension_numbers<[1], [0], [0], [1], [0, 0, 1, 1], [], []>} : vector<8x128xbf16>, vector<128x128xbf16>, vector<8x128xf32> -> vector<8x128xf32>
    %157 = arith.addf %152, %156 : vector<8x128xf32>
    %c1_117 = arith.constant 1 : index
    %c0_118 = arith.constant 0 : index
    %c0_119 = arith.constant 0 : index
    %158 = vector.load %arg18[%c1_117, %c0_118, %c0_119] : memref<2x1x128xf32, #tpu.memory_space<vmem>>, vector<1x1x128xf32>
    %159 = vector.shape_cast %158 : vector<1x1x128xf32> to vector<1x128xf32>
    %160 = vector.broadcast %159 : vector<1x128xf32> to vector<8x128xf32>
    %161 = arith.addf %157, %160 : vector<8x128xf32>
    %cst_120 = arith.constant 0.000000e+00 : f32
    %162 = vector.broadcast %cst_120 : f32 to vector<8x128xf32>
    %163 = arith.cmpf ogt, %161, %162 : vector<8x128xf32>
    %cst_121 = arith.constant 0.000000e+00 : f32
    %164 = vector.broadcast %cst_121 : f32 to vector<8x128xf32>
    %165 = arith.minimumf %161, %164 : vector<8x128xf32>
    %166 = math.exp %165 : vector<8x128xf32>
    %cst_122 = arith.constant 1.000000e+00 : f32
    %167 = vector.broadcast %cst_122 : f32 to vector<8x128xf32>
    %168 = arith.subf %166, %167 : vector<8x128xf32>
    %169 = arith.select %163, %161, %168 : vector<8x128xi1>, vector<8x128xf32>
    %170 = arith.truncf %169 : vector<8x128xf32> to vector<8x128xbf16>
    %c1_123 = arith.constant 1 : index
    %c0_124 = arith.constant 0 : index
    %c0_125 = arith.constant 0 : index
    %171 = vector.load %arg19[%c1_123, %c0_124, %c0_125] : memref<2x128x128xbf16, #tpu.memory_space<vmem>>, vector<1x128x128xbf16>
    %172 = vector.shape_cast %171 : vector<1x128x128xbf16> to vector<128x128xbf16>
    %cst_126 = arith.constant dense<0.000000e+00> : vector<8x128xf32>
    %173 = tpu.matmul %170, %172, %cst_126 {dimension_numbers = #tpu.dot_dimension_numbers<[1], [0], [0], [1], [0, 0, 1, 1], [], []>} : vector<8x128xbf16>, vector<128x128xbf16>, vector<8x128xf32> -> vector<8x128xf32>
    %c1_127 = arith.constant 1 : index
    %c0_128 = arith.constant 0 : index
    %c0_129 = arith.constant 0 : index
    %174 = vector.load %arg20[%c1_127, %c0_128, %c0_129] : memref<2x1x128xf32, #tpu.memory_space<vmem>>, vector<1x1x128xf32>
    %175 = vector.shape_cast %174 : vector<1x1x128xf32> to vector<1x128xf32>
    %176 = vector.broadcast %175 : vector<1x128xf32> to vector<8x128xf32>
    %177 = arith.addf %173, %176 : vector<8x128xf32>
    %c0_130 = arith.constant 0 : index
    %c0_131 = arith.constant 0 : index
    %c0_132 = arith.constant 0 : index
    %178 = vector.load %arg21[%c0_130, %c0_131, %c0_132] : memref<1x8x128xf32, #tpu.memory_space<vmem>>, vector<1x8x128xf32>
    %179 = vector.shape_cast %178 : vector<1x8x128xf32> to vector<8x128xf32>
    %180 = vector.shape_cast %177 : vector<8x128xf32> to vector<1x8x128xf32>
    tpu.vector_store %arg21[%c0_130, %c0_131, %c0_132], %180 {strides = array<i32>} : memref<1x8x128xf32, #tpu.memory_space<vmem>>, vector<1x8x128xf32>,
    return
  }
  func.func @transform_0(%arg0: i32) -> (i32, i32, i32) {
    %c0_i32 = arith.constant 0 : i32
    %c0_i32_0 = arith.constant 0 : i32
    %c0_i32_1 = arith.constant 0 : i32
    return %arg0, %c0_i32, %c0_i32_0 : i32, i32, i32
  }
  func.func @transform_1(%arg0: i32) -> (i32, i32, i32) {
    %c0_i32 = arith.constant 0 : i32
    %c0_i32_0 = arith.constant 0 : i32
    %c0_i32_1 = arith.constant 0 : i32
    return %arg0, %c0_i32, %c0_i32_0 : i32, i32, i32
  }
  func.func @transform_2(%arg0: i32) -> (i32, i32, i32) {
    %c0_i32 = arith.constant 0 : i32
    %c0_i32_0 = arith.constant 0 : i32
    %c0_i32_1 = arith.constant 0 : i32
    return %arg0, %c0_i32, %c0_i32_0 : i32, i32, i32
  }
  func.func @transform_3(%arg0: i32) -> (i32, i32, i32) {
    %c0_i32 = arith.constant 0 : i32
    %c0_i32_0 = arith.constant 0 : i32
    %c0_i32_1 = arith.constant 0 : i32
    return %arg0, %c0_i32, %c0_i32_0 : i32, i32, i32
  }
  func.func @transform_4(%arg0: i32) -> (i32, i32, i32) {
    %c0_i32 = arith.constant 0 : i32
    %c0_i32_0 = arith.constant 0 : i32
    %c0_i32_1 = arith.constant 0 : i32
    return %arg0, %c0_i32, %c0_i32_0 : i32, i32, i32
  }
  func.func @transform_5(%arg0: i32) -> (i32, i32, i32) {
    %c0_i32 = arith.constant 0 : i32
    %c0_i32_0 = arith.constant 0 : i32
    %c0_i32_1 = arith.constant 0 : i32
    return %arg0, %c0_i32, %c0_i32_0 : i32, i32, i32
  }
  func.func @transform_6(%arg0: i32) -> (i32, i32) {
    %c0_i32 = arith.constant 0 : i32
    %c0_i32_0 = arith.constant 0 : i32
    %c0_i32_1 = arith.constant 0 : i32
    return %c0_i32, %c0_i32_0 : i32, i32
  }
  func.func @transform_7(%arg0: i32) -> (i32, i32) {
    %c0_i32 = arith.constant 0 : i32
    %c0_i32_0 = arith.constant 0 : i32
    %c0_i32_1 = arith.constant 0 : i32
    return %c0_i32, %c0_i32_0 : i32, i32
  }
  func.func @transform_8(%arg0: i32) -> (i32, i32, i32) {
    %c0_i32 = arith.constant 0 : i32
    %c0_i32_0 = arith.constant 0 : i32
    %c0_i32_1 = arith.constant 0 : i32
    %c0_i32_2 = arith.constant 0 : i32
    return %c0_i32, %c0_i32_0, %c0_i32_1 : i32, i32, i32
  }
  func.func @transform_9(%arg0: i32) -> (i32, i32, i32) {
    %c0_i32 = arith.constant 0 : i32
    %c0_i32_0 = arith.constant 0 : i32
    %c0_i32_1 = arith.constant 0 : i32
    %c0_i32_2 = arith.constant 0 : i32
    return %c0_i32, %c0_i32_0, %c0_i32_1 : i32, i32, i32
  }
  func.func @transform_10(%arg0: i32) -> (i32, i32, i32) {
    %c0_i32 = arith.constant 0 : i32
    %c0_i32_0 = arith.constant 0 : i32
    %c0_i32_1 = arith.constant 0 : i32
    %c0_i32_2 = arith.constant 0 : i32
    return %c0_i32, %c0_i32_0, %c0_i32_1 : i32, i32, i32
  }
  func.func @transform_11(%arg0: i32) -> (i32, i32, i32) {
    %c0_i32 = arith.constant 0 : i32
    %c0_i32_0 = arith.constant 0 : i32
    %c0_i32_1 = arith.constant 0 : i32
    %c0_i32_2 = arith.constant 0 : i32
    return %c0_i32, %c0_i32_0, %c0_i32_1 : i32, i32, i32
  }
  func.func @transform_12(%arg0: i32) -> (i32, i32, i32) {
    %c0_i32 = arith.constant 0 : i32
    %c0_i32_0 = arith.constant 0 : i32
    %c0_i32_1 = arith.constant 0 : i32
    %c0_i32_2 = arith.constant 0 : i32
    return %c0_i32, %c0_i32_0, %c0_i32_1 : i32, i32, i32
  }
  func.func @transform_13(%arg0: i32) -> (i32, i32, i32) {
    %c0_i32 = arith.constant 0 : i32
    %c0_i32_0 = arith.constant 0 : i32
    %c0_i32_1 = arith.constant 0 : i32
    %c0_i32_2 = arith.constant 0 : i32
    return %c0_i32, %c0_i32_0, %c0_i32_1 : i32, i32, i32
  }
  func.func @transform_14(%arg0: i32) -> (i32, i32, i32) {
    %c0_i32 = arith.constant 0 : i32
    %c0_i32_0 = arith.constant 0 : i32
    %c0_i32_1 = arith.constant 0 : i32
    %c0_i32_2 = arith.constant 0 : i32
    return %c0_i32, %c0_i32_0, %c0_i32_1 : i32, i32, i32
  }
  func.func @transform_15(%arg0: i32) -> (i32, i32, i32) {
    %c0_i32 = arith.constant 0 : i32
    %c0_i32_0 = arith.constant 0 : i32
    %c0_i32_1 = arith.constant 0 : i32
    %c0_i32_2 = arith.constant 0 : i32
    return %c0_i32, %c0_i32_0, %c0_i32_1 : i32, i32, i32
  }
  func.func @transform_16(%arg0: i32) -> (i32, i32, i32) {
    %c0_i32 = arith.constant 0 : i32
    %c0_i32_0 = arith.constant 0 : i32
    %c0_i32_1 = arith.constant 0 : i32
    %c0_i32_2 = arith.constant 0 : i32
    return %c0_i32, %c0_i32_0, %c0_i32_1 : i32, i32, i32
  }
  func.func @transform_17(%arg0: i32) -> (i32, i32, i32) {
    %c0_i32 = arith.constant 0 : i32
    %c0_i32_0 = arith.constant 0 : i32
    %c0_i32_1 = arith.constant 0 : i32
    %c0_i32_2 = arith.constant 0 : i32
    return %c0_i32, %c0_i32_0, %c0_i32_1 : i32, i32, i32
  }
  func.func @transform_18(%arg0: i32) -> (i32, i32, i32) {
    %c0_i32 = arith.constant 0 : i32
    %c0_i32_0 = arith.constant 0 : i32
    %c0_i32_1 = arith.constant 0 : i32
    %c0_i32_2 = arith.constant 0 : i32
    return %c0_i32, %c0_i32_0, %c0_i32_1 : i32, i32, i32
  }
  func.func @transform_19(%arg0: i32) -> (i32, i32, i32) {
    %c0_i32 = arith.constant 0 : i32
    %c0_i32_0 = arith.constant 0 : i32
    %c0_i32_1 = arith.constant 0 : i32
    %c0_i32_2 = arith.constant 0 : i32
    return %c0_i32, %c0_i32_0, %c0_i32_1 : i32, i32, i32
  }
  func.func @transform_20(%arg0: i32) -> (i32, i32, i32) {
    %c0_i32 = arith.constant 0 : i32
    %c0_i32_0 = arith.constant 0 : i32
    %c0_i32_1 = arith.constant 0 : i32
    return %arg0, %c0_i32, %c0_i32_0 : i32, i32, i32
  }
}

</mosaic_0001>

<llo_original>
// kernel: encoder_forward.1
$region0: #{encoder_forward.1}
  #allocation0 [shape = 'u32[]', space=smem, size = 0x4, offset = 0x4, fixed_abs, tag = 'smem constant byte address 0x4 - core index']
  #allocation1 [shape = 'u32[144,128]{1,0:T(1,128)}', space=vmem, size = 0x12000, scoped, tag = 'internal scratch']
  %s0 = inlined_call_operand.vmem [shape: f32[2,8,5], index: 0, kind: input, shape index: {}]
  %s1 = inlined_call_operand.vmem [shape: bf16[2,56,8], index: 1, kind: input, shape index: {}]
  %s2 = inlined_call_operand.vmem [shape: bf16[2,56,8], index: 2, kind: input, shape index: {}]
  %s3 = inlined_call_operand.vmem [shape: bf16[2,8,56], index: 3, kind: input, shape index: {}]
  %s4 = inlined_call_operand.vmem [shape: bf16[2,56,4], index: 4, kind: input, shape index: {}]
  %s5 = inlined_call_operand.vmem [shape: f32[2,56,1], index: 5, kind: input, shape index: {}]
  %s6 = inlined_call_operand.vmem [shape: bf16[5,128], index: 6, kind: input, shape index: {}]
  %s7 = inlined_call_operand.vmem [shape: f32[1,128], index: 7, kind: input, shape index: {}]
  %s8 = inlined_call_operand.vmem [shape: bf16[2,128,128], index: 8, kind: input, shape index: {}]
  %s9 = inlined_call_operand.vmem [shape: bf16[2,128,128], index: 9, kind: input, shape index: {}]
  %s10 = inlined_call_operand.vmem [shape: bf16[2,4,128], index: 10, kind: input, shape index: {}]
  %s11 = inlined_call_operand.vmem [shape: f32[2,1,128], index: 11, kind: input, shape index: {}]
  %s12 = inlined_call_operand.vmem [shape: f32[2,1,128], index: 12, kind: input, shape index: {}]
  %s13 = inlined_call_operand.vmem [shape: bf16[2,128,128], index: 13, kind: input, shape index: {}]
  %s14 = inlined_call_operand.vmem [shape: f32[2,1,128], index: 14, kind: input, shape index: {}]
  %s15 = inlined_call_operand.vmem [shape: bf16[2,128,128], index: 15, kind: input, shape index: {}]
  %s16 = inlined_call_operand.vmem [shape: bf16[2,128,128], index: 16, kind: input, shape index: {}]
  %s17 = inlined_call_operand.vmem [shape: f32[2,1,128], index: 17, kind: input, shape index: {}]
  %s18 = inlined_call_operand.vmem [shape: bf16[2,128,128], index: 18, kind: input, shape index: {}]
  %s19 = inlined_call_operand.vmem [shape: f32[2,1,128], index: 19, kind: input, shape index: {}]
  %s20 = inlined_call_operand.vmem [shape: f32[2,8,128], index: 20, kind: output, shape index: {}]
  %s21 = sld [smem:[#allocation0]]
  $region113: #{encoder_forward.1} parent=0
    _
  %s23 = ssub.s32 1, %s21
  %s24 = scalar_select 0, %s23, %s21
  loop: start=0, step=1, limit=4
  $region2: #{encoder_forward.1} parent=0 // loop_pre_header
    _
  $region3: #{encoder_forward.1} parent=0 // loop_header
    %s26 = sphi 0, %s30
    %p27 = scmp.ge.s32.totalorder %s26, 4
    %s36 = sphi 0, %s38
    %s39 = sphi 0, %s36
    %s40 = sphi 0, %s39
    %s56 = sphi 0, %s40
    %s62 = sphi 0, %s64
    %s65 = sphi 0, %s62
    %s66 = sphi 0, %s65
    %s82 = sphi 0, %s66
    %s88 = sphi 0, %s90
    %s91 = sphi 0, %s88
    %s92 = sphi 0, %s91
    %s108 = sphi 0, %s92
    %s114 = sphi 0, %s116
    %s117 = sphi 0, %s114
    %s118 = sphi 0, %s117
    %s134 = sphi 0, %s118
    %s140 = sphi 0, %s142
    %s143 = sphi 0, %s140
    %s144 = sphi 0, %s143
    %s160 = sphi 0, %s144
    %s166 = sphi 0, %s168
    %s169 = sphi 0, %s166
    %s170 = sphi 0, %s169
    %s186 = sphi 0, %s170
    %s190 = sphi 0, %s190
    %s192 = sphi 0, %s190
    %s193 = sphi 0, %s192
    %s207 = sphi 0, %s193
    %s211 = sphi 0, %s211
    %s213 = sphi 0, %s211
    %s214 = sphi 0, %s213
    %s228 = sphi 0, %s214
    %s232 = sphi 0, %s232
    %s234 = sphi 0, %s232
    %s235 = sphi 0, %s234
    %s249 = sphi 0, %s235
    %s253 = sphi 0, %s253
    %s255 = sphi 0, %s253
    %s256 = sphi 0, %s255
    %s270 = sphi 0, %s256
    %s274 = sphi 0, %s274
    %s276 = sphi 0, %s274
    %s277 = sphi 0, %s276
    %s291 = sphi 0, %s277
    %s295 = sphi 0, %s295
    %s297 = sphi 0, %s295
    %s298 = sphi 0, %s297
    %s312 = sphi 0, %s298
    %s316 = sphi 0, %s316
    %s318 = sphi 0, %s316
    %s319 = sphi 0, %s318
    %s333 = sphi 0, %s319
    %s337 = sphi 0, %s337
    %s339 = sphi 0, %s337
    %s340 = sphi 0, %s339
    %s354 = sphi 0, %s340
    %s358 = sphi 0, %s358
    %s360 = sphi 0, %s358
    %s361 = sphi 0, %s360
    %s375 = sphi 0, %s361
    %s379 = sphi 0, %s379
    %s381 = sphi 0, %s379
    %s382 = sphi 0, %s381
    %s396 = sphi 0, %s382
    %s400 = sphi 0, %s400
    %s402 = sphi 0, %s400
    %s403 = sphi 0, %s402
    %s417 = sphi 0, %s403
    %s421 = sphi 0, %s421
    %s423 = sphi 0, %s421
    %s424 = sphi 0, %s423
    %s438 = sphi 0, %s424
    %s442 = sphi 0, %s442
    %s444 = sphi 0, %s442
    %s445 = sphi 0, %s444
    %s459 = sphi 0, %s445
    %s463 = sphi 0, %s463
    %s465 = sphi 0, %s463
    %s466 = sphi 0, %s465
    %s480 = sphi 0, %s466
    %s486 = sphi 0, %s488
    %s489 = sphi 0, %s486
    %s490 = sphi 0, %s489
    %s506 = sphi 0, %s490
  $region4: #{encoder_forward.1} parent=0 // loop_header_branch
    %29 = sbr.rel (%p27) target = $region8
  $region5: #{encoder_forward.1} parent=0 // loop_body
    %s31 = ssub.s32 %s26, 1
    %s32 = ssub.s32 %s26, 2
    %s33 = sadd.s32 %s26, 1
    %s34 = ssub.s32 %s26, %s33
    %p35 = scmp.eq.s32.totalorder %s34, 0
    %s37 = sadd.s32 %s36, 1
    %s38 = scalar_select %p35, %s36, %s37
    %p41 = pneg %p35
    %p42 = scmp.eq.s32.totalorder %s26, 1
    %p43 = por %p41, %p42
    %p44 = scmp.ne.s32.totalorder %s36, %s39
    %p45 = scmp.eq.s32.totalorder %s26, 0
    %p46 = por %p44, %p45
    %p47 = scmp.ne.s32.totalorder %s36, %s39
    %p48 = scmp.eq.s32.totalorder %s31, 1
    %p49 = por %p47, %p48
    %p50 = scmp.ne.s32.totalorder %s39, %s40
    %p51 = scmp.eq.s32.totalorder %s31, 0
    %p52 = por %p50, %p51
    %p53 = scmp.ne.s32.totalorder %s39, %s40
    %p54 = scmp.eq.s32.totalorder %s32, 1
    %p55 = por %p53, %p54
    %p57 = scmp.ne.s32.totalorder %s40, %s56
    %p58 = scmp.eq.s32.totalorder %s32, 0
    %p59 = por %p57, %p58
    %s60 = ssub.s32 %s26, %s33
    %p61 = scmp.eq.s32.totalorder %s60, 0
    %s63 = sadd.s32 %s62, 1
    %s64 = scalar_select %p61, %s62, %s63
    %p67 = pneg %p61
    %p68 = scmp.eq.s32.totalorder %s26, 1
    %p69 = por %p67, %p68
    %p70 = scmp.ne.s32.totalorder %s62, %s65
    %p71 = scmp.eq.s32.totalorder %s26, 0
    %p72 = por %p70, %p71
    %p73 = scmp.ne.s32.totalorder %s62, %s65
    %p74 = scmp.eq.s32.totalorder %s31, 1
    %p75 = por %p73, %p74
    %p76 = scmp.ne.s32.totalorder %s65, %s66
    %p77 = scmp.eq.s32.totalorder %s31, 0
    %p78 = por %p76, %p77
    %p79 = scmp.ne.s32.totalorder %s65, %s66
    %p80 = scmp.eq.s32.totalorder %s32, 1
    %p81 = por %p79, %p80
    %p83 = scmp.ne.s32.totalorder %s66, %s82
    %p84 = scmp.eq.s32.totalorder %s32, 0
    %p85 = por %p83, %p84
    %s86 = ssub.s32 %s26, %s33
    %p87 = scmp.eq.s32.totalorder %s86, 0
    %s89 = sadd.s32 %s88, 1
    %s90 = scalar_select %p87, %s88, %s89
    %p93 = pneg %p87
    %p94 = scmp.eq.s32.totalorder %s26, 1
    %p95 = por %p93, %p94
    %p96 = scmp.ne.s32.totalorder %s88, %s91
    %p97 = scmp.eq.s32.totalorder %s26, 0
    %p98 = por %p96, %p97
    %p99 = scmp.ne.s32.totalorder %s88, %s91
    %p100 = scmp.eq.s32.totalorder %s31, 1
    %p101 = por %p99, %p100
    %p102 = scmp.ne.s32.totalorder %s91, %s92
    %p103 = scmp.eq.s32.totalorder %s31, 0
    %p104 = por %p102, %p103
    %p105 = scmp.ne.s32.totalorder %s91, %s92
    %p106 = scmp.eq.s32.totalorder %s32, 1
    %p107 = por %p105, %p106
    %p109 = scmp.ne.s32.totalorder %s92, %s108
    %p110 = scmp.eq.s32.totalorder %s32, 0
    %p111 = por %p109, %p110
    %s112 = ssub.s32 %s26, %s33
    %p113 = scmp.eq.s32.totalorder %s112, 0
    %s115 = sadd.s32 %s114, 1
    %s116 = scalar_select %p113, %s114, %s115
    %p119 = pneg %p113
    %p120 = scmp.eq.s32.totalorder %s26, 1
    %p121 = por %p119, %p120
    %p122 = scmp.ne.s32.totalorder %s114, %s117
    %p123 = scmp.eq.s32.totalorder %s26, 0
    %p124 = por %p122, %p123
    %p125 = scmp.ne.s32.totalorder %s114, %s117
    %p126 = scmp.eq.s32.totalorder %s31, 1
    %p127 = por %p125, %p126
    %p128 = scmp.ne.s32.totalorder %s117, %s118
    %p129 = scmp.eq.s32.totalorder %s31, 0
    %p130 = por %p128, %p129
    %p131 = scmp.ne.s32.totalorder %s117, %s118
    %p132 = scmp.eq.s32.totalorder %s32, 1
    %p133 = por %p131, %p132
    %p135 = scmp.ne.s32.totalorder %s118, %s134
    %p136 = scmp.eq.s32.totalorder %s32, 0
    %p137 = por %p135, %p136
    %s138 = ssub.s32 %s26, %s33
    %p139 = scmp.eq.s32.totalorder %s138, 0
    %s141 = sadd.s32 %s140, 1
    %s142 = scalar_select %p139, %s140, %s141
    %p145 = pneg %p139
    %p146 = scmp.eq.s32.totalorder %s26, 1
    %p147 = por %p145, %p146
    %p148 = scmp.ne.s32.totalorder %s140, %s143
    %p149 = scmp.eq.s32.totalorder %s26, 0
    %p150 = por %p148, %p149
    %p151 = scmp.ne.s32.totalorder %s140, %s143
    %p152 = scmp.eq.s32.totalorder %s31, 1
    %p153 = por %p151, %p152
    %p154 = scmp.ne.s32.totalorder %s143, %s144
    %p155 = scmp.eq.s32.totalorder %s31, 0
    %p156 = por %p154, %p155
    %p157 = scmp.ne.s32.totalorder %s143, %s144
    %p158 = scmp.eq.s32.totalorder %s32, 1
    %p159 = por %p157, %p158
    %p161 = scmp.ne.s32.totalorder %s144, %s160
    %p162 = scmp.eq.s32.totalorder %s32, 0
    %p163 = por %p161, %p162
    %s164 = ssub.s32 %s26, %s33
    %p165 = scmp.eq.s32.totalorder %s164, 0
    %s167 = sadd.s32 %s166, 1
    %s168 = scalar_select %p165, %s166, %s167
    %p171 = pneg %p165
    %p172 = scmp.eq.s32.totalorder %s26, 1
    %p173 = por %p171, %p172
    %p174 = scmp.ne.s32.totalorder %s166, %s169
    %p175 = scmp.eq.s32.totalorder %s26, 0
    %p176 = por %p174, %p175
    %p177 = scmp.ne.s32.totalorder %s166, %s169
    %p178 = scmp.eq.s32.totalorder %s31, 1
    %p179 = por %p177, %p178
    %p180 = scmp.ne.s32.totalorder %s169, %s170
    %p181 = scmp.eq.s32.totalorder %s31, 0
    %p182 = por %p180, %p181
    %p183 = scmp.ne.s32.totalorder %s169, %s170
    %p184 = scmp.eq.s32.totalorder %s32, 1
    %p185 = por %p183, %p184
    %p187 = scmp.ne.s32.totalorder %s170, %s186
    %p188 = scmp.eq.s32.totalorder %s32, 0
    %p189 = por %p187, %p188
    %s191 = sadd.s32 %s190, 1
    %p194 = scmp.eq.s32.totalorder %s26, 1
    %p195 = scmp.ne.s32.totalorder %s190, %s192
    %p196 = scmp.eq.s32.totalorder %s26, 0
    %p197 = por %p195, %p196
    %p198 = scmp.ne.s32.totalorder %s190, %s192
    %p199 = scmp.eq.s32.totalorder %s31, 1
    %p200 = por %p198, %p199
    %p201 = scmp.ne.s32.totalorder %s192, %s193
    %p202 = scmp.eq.s32.totalorder %s31, 0
    %p203 = por %p201, %p202
    %p204 = scmp.ne.s32.totalorder %s192, %s193
    %p205 = scmp.eq.s32.totalorder %s32, 1
    %p206 = por %p204, %p205
    %p208 = scmp.ne.s32.totalorder %s193, %s207
    %p209 = scmp.eq.s32.totalorder %s32, 0
    %p210 = por %p208, %p209
    %s212 = sadd.s32 %s211, 1
    %p215 = scmp.eq.s32.totalorder %s26, 1
    %p216 = scmp.ne.s32.totalorder %s211, %s213
    %p217 = scmp.eq.s32.totalorder %s26, 0
    %p218 = por %p216, %p217
    %p219 = scmp.ne.s32.totalorder %s211, %s213
    %p220 = scmp.eq.s32.totalorder %s31, 1
    %p221 = por %p219, %p220
    %p222 = scmp.ne.s32.totalorder %s213, %s214
    %p223 = scmp.eq.s32.totalorder %s31, 0
    %p224 = por %p222, %p223
    %p225 = scmp.ne.s32.totalorder %s213, %s214
    %p226 = scmp.eq.s32.totalorder %s32, 1
    %p227 = por %p225, %p226
    %p229 = scmp.ne.s32.totalorder %s214, %s228
    %p230 = scmp.eq.s32.totalorder %s32, 0
    %p231 = por %p229, %p230
    %s233 = sadd.s32 %s232, 1
    %p236 = scmp.eq.s32.totalorder %s26, 1
    %p237 = scmp.ne.s32.totalorder %s232, %s234
    %p238 = scmp.eq.s32.totalorder %s26, 0
    %p239 = por %p237, %p238
    %p240 = scmp.ne.s32.totalorder %s232, %s234
    %p241 = scmp.eq.s32.totalorder %s31, 1
    %p242 = por %p240, %p241
    %p243 = scmp.ne.s32.totalorder %s234, %s235
    %p244 = scmp.eq.s32.totalorder %s31, 0
    %p245 = por %p243, %p244
    %p246 = scmp.ne.s32.totalorder %s234, %s235
    %p247 = scmp.eq.s32.totalorder %s32, 1
    %p248 = por %p246, %p247
    %p250 = scmp.ne.s32.totalorder %s235, %s249
    %p251 = scmp.eq.s32.totalorder %s32, 0
    %p252 = por %p250, %p251
    %s254 = sadd.s32 %s253, 1
    %p257 = scmp.eq.s32.totalorder %s26, 1
    %p258 = scmp.ne.s32.totalorder %s253, %s255
    %p259 = scmp.eq.s32.totalorder %s26, 0
    %p260 = por %p258, %p259
    %p261 = scmp.ne.s32.totalorder %s253, %s255
    %p262 = scmp.eq.s32.totalorder %s31, 1
    %p263 = por %p261, %p262
    %p264 = scmp.ne.s32.totalorder %s255, %s256
    %p265 = scmp.eq.s32.totalorder %s31, 0
    %p266 = por %p264, %p265
    %p267 = scmp.ne.s32.totalorder %s255, %s256
    %p268 = scmp.eq.s32.totalorder %s32, 1
    %p269 = por %p267, %p268
    %p271 = scmp.ne.s32.totalorder %s256, %s270
    %p272 = scmp.eq.s32.totalorder %s32, 0
    %p273 = por %p271, %p272
    %s275 = sadd.s32 %s274, 1
    %p278 = scmp.eq.s32.totalorder %s26, 1
    %p279 = scmp.ne.s32.totalorder %s274, %s276
    %p280 = scmp.eq.s32.totalorder %s26, 0
    %p281 = por %p279, %p280
    %p282 = scmp.ne.s32.totalorder %s274, %s276
    %p283 = scmp.eq.s32.totalorder %s31, 1
    %p284 = por %p282, %p283
    %p285 = scmp.ne.s32.totalorder %s276, %s277
    %p286 = scmp.eq.s32.totalorder %s31, 0
    %p287 = por %p285, %p286
    %p288 = scmp.ne.s32.totalorder %s276, %s277
    %p289 = scmp.eq.s32.totalorder %s32, 1
    %p290 = por %p288, %p289
    %p292 = scmp.ne.s32.totalorder %s277, %s291
    %p293 = scmp.eq.s32.totalorder %s32, 0
    %p294 = por %p292, %p293
    %s296 = sadd.s32 %s295, 1
    %p299 = scmp.eq.s32.totalorder %s26, 1
    %p300 = scmp.ne.s32.totalorder %s295, %s297
    %p301 = scmp.eq.s32.totalorder %s26, 0
    %p302 = por %p300, %p301
    %p303 = scmp.ne.s32.totalorder %s295, %s297
    %p304 = scmp.eq.s32.totalorder %s31, 1
    %p305 = por %p303, %p304
    %p306 = scmp.ne.s32.totalorder %s297, %s298
    %p307 = scmp.eq.s32.totalorder %s31, 0
    %p308 = por %p306, %p307
    %p309 = scmp.ne.s32.totalorder %s297, %s298
    %p310 = scmp.eq.s32.totalorder %s32, 1
    %p311 = por %p309, %p310
    %p313 = scmp.ne.s32.totalorder %s298, %s312
    %p314 = scmp.eq.s32.totalorder %s32, 0
    %p315 = por %p313, %p314
    %s317 = sadd.s32 %s316, 1
    %p320 = scmp.eq.s32.totalorder %s26, 1
    %p321 = scmp.ne.s32.totalorder %s316, %s318
    %p322 = scmp.eq.s32.totalorder %s26, 0
    %p323 = por %p321, %p322
    %p324 = scmp.ne.s32.totalorder %s316, %s318
    %p325 = scmp.eq.s32.totalorder %s31, 1
    %p326 = por %p324, %p325
    %p327 = scmp.ne.s32.totalorder %s318, %s319
    %p328 = scmp.eq.s32.totalorder %s31, 0
    %p329 = por %p327, %p328
    %p330 = scmp.ne.s32.totalorder %s318, %s319
    %p331 = scmp.eq.s32.totalorder %s32, 1
    %p332 = por %p330, %p331
    %p334 = scmp.ne.s32.totalorder %s319, %s333
    %p335 = scmp.eq.s32.totalorder %s32, 0
    %p336 = por %p334, %p335
    %s338 = sadd.s32 %s337, 1
    %p341 = scmp.eq.s32.totalorder %s26, 1
    %p342 = scmp.ne.s32.totalorder %s337, %s339
    %p343 = scmp.eq.s32.totalorder %s26, 0
    %p344 = por %p342, %p343
    %p345 = scmp.ne.s32.totalorder %s337, %s339
    %p346 = scmp.eq.s32.totalorder %s31, 1
    %p347 = por %p345, %p346
    %p348 = scmp.ne.s32.totalorder %s339, %s340
    %p349 = scmp.eq.s32.totalorder %s31, 0
    %p350 = por %p348, %p349
    %p351 = scmp.ne.s32.totalorder %s339, %s340
    %p352 = scmp.eq.s32.totalorder %s32, 1
    %p353 = por %p351, %p352
    %p355 = scmp.ne.s32.totalorder %s340, %s354
    %p356 = scmp.eq.s32.totalorder %s32, 0
    %p357 = por %p355, %p356
    %s359 = sadd.s32 %s358, 1
    %p362 = scmp.eq.s32.totalorder %s26, 1
    %p363 = scmp.ne.s32.totalorder %s358, %s360
    %p364 = scmp.eq.s32.totalorder %s26, 0
    %p365 = por %p363, %p364
    %p366 = scmp.ne.s32.totalorder %s358, %s360
    %p367 = scmp.eq.s32.totalorder %s31, 1
    %p368 = por %p366, %p367
    %p369 = scmp.ne.s32.totalorder %s360, %s361
    %p370 = scmp.eq.s32.totalorder %s31, 0
    %p371 = por %p369, %p370
    %p372 = scmp.ne.s32.totalorder %s360, %s361
    %p373 = scmp.eq.s32.totalorder %s32, 1
    %p374 = por %p372, %p373
    %p376 = scmp.ne.s32.totalorder %s361, %s375
    %p377 = scmp.eq.s32.totalorder %s32, 0
    %p378 = por %p376, %p377
    %s380 = sadd.s32 %s379, 1
    %p383 = scmp.eq.s32.totalorder %s26, 1
    %p384 = scmp.ne.s32.totalorder %s379, %s381
    %p385 = scmp.eq.s32.totalorder %s26, 0
    %p386 = por %p384, %p385
    %p387 = scmp.ne.s32.totalorder %s379, %s381
    %p388 = scmp.eq.s32.totalorder %s31, 1
    %p389 = por %p387, %p388
    %p390 = scmp.ne.s32.totalorder %s381, %s382
    %p391 = scmp.eq.s32.totalorder %s31, 0
    %p392 = por %p390, %p391
    %p393 = scmp.ne.s32.totalorder %s381, %s382
    %p394 = scmp.eq.s32.totalorder %s32, 1
    %p395 = por %p393, %p394
    %p397 = scmp.ne.s32.totalorder %s382, %s396
    %p398 = scmp.eq.s32.totalorder %s32, 0
    %p399 = por %p397, %p398
    %s401 = sadd.s32 %s400, 1
    %p404 = scmp.eq.s32.totalorder %s26, 1
    %p405 = scmp.ne.s32.totalorder %s400, %s402
    %p406 = scmp.eq.s32.totalorder %s26, 0
    %p407 = por %p405, %p406
    %p408 = scmp.ne.s32.totalorder %s400, %s402
    %p409 = scmp.eq.s32.totalorder %s31, 1
    %p410 = por %p408, %p409
    %p411 = scmp.ne.s32.totalorder %s402, %s403
    %p412 = scmp.eq.s32.totalorder %s31, 0
    %p413 = por %p411, %p412
    %p414 = scmp.ne.s32.totalorder %s402, %s403
    %p415 = scmp.eq.s32.totalorder %s32, 1
    %p416 = por %p414, %p415
    %p418 = scmp.ne.s32.totalorder %s403, %s417
    %p419 = scmp.eq.s32.totalorder %s32, 0
    %p420 = por %p418, %p419
    %s422 = sadd.s32 %s421, 1
    %p425 = scmp.eq.s32.totalorder %s26, 1
    %p426 = scmp.ne.s32.totalorder %s421, %s423
    %p427 = scmp.eq.s32.totalorder %s26, 0
    %p428 = por %p426, %p427
    %p429 = scmp.ne.s32.totalorder %s421, %s423
    %p430 = scmp.eq.s32.totalorder %s31, 1
    %p431 = por %p429, %p430
    %p432 = scmp.ne.s32.totalorder %s423, %s424
    %p433 = scmp.eq.s32.totalorder %s31, 0
    %p434 = por %p432, %p433
    %p435 = scmp.ne.s32.totalorder %s423, %s424
    %p436 = scmp.eq.s32.totalorder %s32, 1
    %p437 = por %p435, %p436
    %p439 = scmp.ne.s32.totalorder %s424, %s438
    %p440 = scmp.eq.s32.totalorder %s32, 0
    %p441 = por %p439, %p440
    %s443 = sadd.s32 %s442, 1
    %p446 = scmp.eq.s32.totalorder %s26, 1
    %p447 = scmp.ne.s32.totalorder %s442, %s444
    %p448 = scmp.eq.s32.totalorder %s26, 0
    %p449 = por %p447, %p448
    %p450 = scmp.ne.s32.totalorder %s442, %s444
    %p451 = scmp.eq.s32.totalorder %s31, 1
    %p452 = por %p450, %p451
    %p453 = scmp.ne.s32.totalorder %s444, %s445
    %p454 = scmp.eq.s32.totalorder %s31, 0
    %p455 = por %p453, %p454
    %p456 = scmp.ne.s32.totalorder %s444, %s445
    %p457 = scmp.eq.s32.totalorder %s32, 1
    %p458 = por %p456, %p457
    %p460 = scmp.ne.s32.totalorder %s445, %s459
    %p461 = scmp.eq.s32.totalorder %s32, 0
    %p462 = por %p460, %p461
    %s464 = sadd.s32 %s463, 1
    %p467 = scmp.eq.s32.totalorder %s26, 1
    %p468 = scmp.ne.s32.totalorder %s463, %s465
    %p469 = scmp.eq.s32.totalorder %s26, 0
    %p470 = por %p468, %p469
    %p471 = scmp.ne.s32.totalorder %s463, %s465
    %p472 = scmp.eq.s32.totalorder %s31, 1
    %p473 = por %p471, %p472
    %p474 = scmp.ne.s32.totalorder %s465, %s466
    %p475 = scmp.eq.s32.totalorder %s31, 0
    %p476 = por %p474, %p475
    %p477 = scmp.ne.s32.totalorder %s465, %s466
    %p478 = scmp.eq.s32.totalorder %s32, 1
    %p479 = por %p477, %p478
    %p481 = scmp.ne.s32.totalorder %s466, %s480
    %p482 = scmp.eq.s32.totalorder %s32, 0
    %p483 = por %p481, %p482
    %s484 = ssub.s32 %s26, %s33
    %p485 = scmp.eq.s32.totalorder %s484, 0
    %s487 = sadd.s32 %s486, 1
    %s488 = scalar_select %p485, %s486, %s487
    %p491 = pneg %p485
    %p492 = scmp.eq.s32.totalorder %s26, 1
    %p493 = por %p491, %p492
    %p494 = scmp.ne.s32.totalorder %s486, %s489
    %p495 = scmp.eq.s32.totalorder %s26, 0
    %p496 = por %p494, %p495
    %p497 = scmp.ne.s32.totalorder %s486, %s489
    %p498 = scmp.eq.s32.totalorder %s31, 1
    %p499 = por %p497, %p498
    %p500 = scmp.ne.s32.totalorder %s489, %s490
    %p501 = scmp.eq.s32.totalorder %s31, 0
    %p502 = por %p500, %p501
    %p503 = scmp.ne.s32.totalorder %s489, %s490
    %p504 = scmp.eq.s32.totalorder %s32, 1
    %p505 = por %p503, %p504
    %p507 = scmp.ne.s32.totalorder %s490, %s506
    %p508 = scmp.eq.s32.totalorder %s32, 0
    %p509 = por %p507, %p508
    %p510 = scmp.le.s32.totalorder 1, %s26
    %p511 = scmp.lt.s32.totalorder %s26, 3
    %p512 = pnand %p510, %p511
    %p513 = pneg %p512
    // Predicated region
    $region9: #{encoder_forward.1} parent=5 // pred_check
      _
    $region10: #{encoder_forward.1} parent=5 // pred_check_branch
      %515 = sbr.rel (%p512) target = $region12
    $region11: #{encoder_forward.1} parent=5 // pred_region
      %s516 = ssub.s32 %s26, 1
      // Predicated region
      $region13: #{encoder_forward.1} parent=11 // pred_check
        %p517 = pneg %p203
      $region14: #{encoder_forward.1} parent=11 // pred_check_branch
        %519 = sbr.rel (%p517) target = $region16
      $region15: #{encoder_forward.1} parent=11 // pred_region
        _
      $region16: #{encoder_forward.1} parent=11 // pred_fallthru
        _
      // Predicated region
      $region17: #{encoder_forward.1} parent=11 // pred_check
        %p520 = pneg %p224
      $region18: #{encoder_forward.1} parent=11 // pred_check_branch
        %522 = sbr.rel (%p520) target = $region20
      $region19: #{encoder_forward.1} parent=11 // pred_region
        _
      $region20: #{encoder_forward.1} parent=11 // pred_fallthru
        _
      // Predicated region
      $region21: #{encoder_forward.1} parent=11 // pred_check
        %p523 = pneg %p245
      $region22: #{encoder_forward.1} parent=11 // pred_check_branch
        %525 = sbr.rel (%p523) target = $region24
      $region23: #{encoder_forward.1} parent=11 // pred_region
        _
      $region24: #{encoder_forward.1} parent=11 // pred_fallthru
        _
      // Predicated region
      $region25: #{encoder_forward.1} parent=11 // pred_check
        %p526 = pneg %p266
      $region26: #{encoder_forward.1} parent=11 // pred_check_branch
        %528 = sbr.rel (%p526) target = $region28
      $region27: #{encoder_forward.1} parent=11 // pred_region
        _
      $region28: #{encoder_forward.1} parent=11 // pred_fallthru
        _
      // Predicated region
      $region29: #{encoder_forward.1} parent=11 // pred_check
        %p529 = pneg %p287
      $region30: #{encoder_forward.1} parent=11 // pred_check_branch
        %531 = sbr.rel (%p529) target = $region32
      $region31: #{encoder_forward.1} parent=11 // pred_region
        _
      $region32: #{encoder_forward.1} parent=11 // pred_fallthru
        _
      // Predicated region
      $region33: #{encoder_forward.1} parent=11 // pred_check
        %p532 = pneg %p308
      $region34: #{encoder_forward.1} parent=11 // pred_check_branch
        %534 = sbr.rel (%p532) target = $region36
      $region35: #{encoder_forward.1} parent=11 // pred_region
        _
      $region36: #{encoder_forward.1} parent=11 // pred_fallthru
        _
      // Predicated region
      $region37: #{encoder_forward.1} parent=11 // pred_check
        %p535 = pneg %p329
      $region38: #{encoder_forward.1} parent=11 // pred_check_branch
        %537 = sbr.rel (%p535) target = $region40
      $region39: #{encoder_forward.1} parent=11 // pred_region
        _
      $region40: #{encoder_forward.1} parent=11 // pred_fallthru
        _
      // Predicated region
      $region41: #{encoder_forward.1} parent=11 // pred_check
        %p538 = pneg %p350
      $region42: #{encoder_forward.1} parent=11 // pred_check_branch
        %540 = sbr.rel (%p538) target = $region44
      $region43: #{encoder_forward.1} parent=11 // pred_region
        _
      $region44: #{encoder_forward.1} parent=11 // pred_fallthru
        _
      // Predicated region
      $region45: #{encoder_forward.1} parent=11 // pred_check
        %p541 = pneg %p371
      $region46: #{encoder_forward.1} parent=11 // pred_check_branch
        %543 = sbr.rel (%p541) target = $region48
      $region47: #{encoder_forward.1} parent=11 // pred_region
        _
      $region48: #{encoder_forward.1} parent=11 // pred_fallthru
        _
      // Predicated region
      $region49: #{encoder_forward.1} parent=11 // pred_check
        %p544 = pneg %p392
      $region50: #{encoder_forward.1} parent=11 // pred_check_branch
        %546 = sbr.rel (%p544) target = $region52
      $region51: #{encoder_forward.1} parent=11 // pred_region
        _
      $region52: #{encoder_forward.1} parent=11 // pred_fallthru
        _
      // Predicated region
      $region53: #{encoder_forward.1} parent=11 // pred_check
        %p547 = pneg %p413
      $region54: #{encoder_forward.1} parent=11 // pred_check_branch
        %549 = sbr.rel (%p547) target = $region56
      $region55: #{encoder_forward.1} parent=11 // pred_region
        _
      $region56: #{encoder_forward.1} parent=11 // pred_fallthru
        _
      // Predicated region
      $region57: #{encoder_forward.1} parent=11 // pred_check
        %p550 = pneg %p434
      $region58: #{encoder_forward.1} parent=11 // pred_check_branch
        %552 = sbr.rel (%p550) target = $region60
      $region59: #{encoder_forward.1} parent=11 // pred_region
        _
      $region60: #{encoder_forward.1} parent=11 // pred_fallthru
        _
      // Predicated region
      $region61: #{encoder_forward.1} parent=11 // pred_check
        %p553 = pneg %p455
      $region62: #{encoder_forward.1} parent=11 // pred_check_branch
        %555 = sbr.rel (%p553) target = $region64
      $region63: #{encoder_forward.1} parent=11 // pred_region
        _
      $region64: #{encoder_forward.1} parent=11 // pred_fallthru
        _
      // Predicated region
      $region65: #{encoder_forward.1} parent=11 // pred_check
        %p556 = pneg %p476
      $region66: #{encoder_forward.1} parent=11 // pred_check_branch
        %558 = sbr.rel (%p556) target = $region68
      $region67: #{encoder_forward.1} parent=11 // pred_region
        _
      $region68: #{encoder_forward.1} parent=11 // pred_fallthru
        _
    $region12: #{encoder_forward.1} parent=5 // pred_fallthru
      _
    %p559 = scmp.lt.s32.totalorder %s26, 2
    // Predicated region
    $region69: #{encoder_forward.1} parent=5 // pred_check
      %p560 = pneg %p559
    $region70: #{encoder_forward.1} parent=5 // pred_check_branch
      %562 = sbr.rel (%p560) target = $region72
    $region71: #{encoder_forward.1} parent=5 // pred_region
      // Predicated region
      $region73: #{encoder_forward.1} parent=71 // pred_check
        %p563 = pneg %p46
      $region74: #{encoder_forward.1} parent=71 // pred_check_branch
        %565 = sbr.rel (%p563) target = $region76
      $region75: #{encoder_forward.1} parent=71 // pred_region
        %p566 = scmp.lt.s32.totalorder %s26, 1
        %s567 = scalar_select %p566, %s26, 1
        %s568 = smul.addr %s567, 8
        %s569 = scalar_lea.vmem %s0, %s568
      $region76: #{encoder_forward.1} parent=71 // pred_fallthru
        _
      // Predicated region
      $region77: #{encoder_forward.1} parent=71 // pred_check
        %p570 = pneg %p72
      $region78: #{encoder_forward.1} parent=71 // pred_check_branch
        %572 = sbr.rel (%p570) target = $region80
      $region79: #{encoder_forward.1} parent=71 // pred_region
        %p573 = scmp.lt.s32.totalorder %s26, 1
        %s574 = scalar_select %p573, %s26, 1
        %s575 = smul.addr %s574, 7
        %s576 = smul.addr %s575, 4
        %s577 = scalar_lea.vmem %s1, %s576
      $region80: #{encoder_forward.1} parent=71 // pred_fallthru
        _
      // Predicated region
      $region81: #{encoder_forward.1} parent=71 // pred_check
        %p578 = pneg %p98
      $region82: #{encoder_forward.1} parent=71 // pred_check_branch
        %580 = sbr.rel (%p578) target = $region84
      $region83: #{encoder_forward.1} parent=71 // pred_region
        %p581 = scmp.lt.s32.totalorder %s26, 1
        %s582 = scalar_select %p581, %s26, 1
        %s583 = smul.addr %s582, 7
        %s584 = smul.addr %s583, 4
        %s585 = scalar_lea.vmem %s2, %s584
      $region84: #{encoder_forward.1} parent=71 // pred_fallthru
        _
      // Predicated region
      $region85: #{encoder_forward.1} parent=71 // pred_check
        %p586 = pneg %p124
      $region86: #{encoder_forward.1} parent=71 // pred_check_branch
        %588 = sbr.rel (%p586) target = $region88
      $region87: #{encoder_forward.1} parent=71 // pred_region
        %p589 = scmp.lt.s32.totalorder %s26, 1
        %s590 = scalar_select %p589, %s26, 1
        %s591 = smul.addr %s590, 4
        %s592 = scalar_lea.vmem %s3, %s591
      $region88: #{encoder_forward.1} parent=71 // pred_fallthru
        _
      // Predicated region
      $region89: #{encoder_forward.1} parent=71 // pred_check
        %p593 = pneg %p150
      $region90: #{encoder_forward.1} parent=71 // pred_check_branch
        %595 = sbr.rel (%p593) target = $region92
      $region91: #{encoder_forward.1} parent=71 // pred_region
        %p596 = scmp.lt.s32.totalorder %s26, 1
        %s597 = scalar_select %p596, %s26, 1
        %s598 = smul.addr %s597, 7
        %s599 = smul.addr %s598, 4
        %s600 = scalar_lea.vmem %s4, %s599
      $region92: #{encoder_forward.1} parent=71 // pred_fallthru
        _
      // Predicated region
      $region93: #{encoder_forward.1} parent=71 // pred_check
        %p601 = pneg %p176
      $region94: #{encoder_forward.1} parent=71 // pred_check_branch
        %603 = sbr.rel (%p601) target = $region96
      $region95: #{encoder_forward.1} parent=71 // pred_region
        %p604 = scmp.lt.s32.totalorder %s26, 1
        %s605 = scalar_select %p604, %s26, 1
        %s606 = smul.addr %s605, 7
        %s607 = smul.addr %s606, 8
        %s608 = scalar_lea.vmem %s5, %s607
      $region96: #{encoder_forward.1} parent=71 // pred_fallthru
        _
    $region72: #{encoder_forward.1} parent=5 // pred_fallthru
      _
    %p609 = scmp.le.s32.totalorder 1, %s26
    %p610 = scmp.lt.s32.totalorder %s26, 3
    %p611 = pnand %p609, %p610
    %p612 = pneg %p611
    // Predicated region
    $region97: #{encoder_forward.1} parent=5 // pred_check
      _
    $region98: #{encoder_forward.1} parent=5 // pred_check_branch
      %614 = sbr.rel (%p611) target = $region100
    $region99: #{encoder_forward.1} parent=5 // pred_region
      %s615 = ssub.s32 %s26, 1
      %p616 = scmp.lt.s32.totalorder %s31, 1
      %s617 = scalar_select %p616, %s31, 1
      %s618 = smul.addr %s617, 8
      %s619 = scalar_lea.vmem %s0, %s618
      %p620 = pneg %p52
      %p621 = pneg %p49
      %p622 = scmp.lt.s32.totalorder %s31, 1
      %s623 = scalar_select %p622, %s31, 1
      %s624 = smul.addr %s623, 7
      %s625 = smul.addr %s624, 4
      %s626 = scalar_lea.vmem %s1, %s625
      %p627 = pneg %p78
      %p628 = pneg %p75
      %p629 = scmp.lt.s32.totalorder %s31, 1
      %s630 = scalar_select %p629, %s31, 1
      %s631 = smul.addr %s630, 7
      %s632 = smul.addr %s631, 4
      %s633 = scalar_lea.vmem %s2, %s632
      %p634 = pneg %p104
      %p635 = pneg %p101
      %p636 = scmp.lt.s32.totalorder %s31, 1
      %s637 = scalar_select %p636, %s31, 1
      %s638 = smul.addr %s637, 4
      %s639 = scalar_lea.vmem %s3, %s638
      %p640 = pneg %p130
      %p641 = pneg %p127
      %p642 = scmp.lt.s32.totalorder %s31, 1
      %s643 = scalar_select %p642, %s31, 1
      %s644 = smul.addr %s643, 7
      %s645 = smul.addr %s644, 4
      %s646 = scalar_lea.vmem %s4, %s645
      %p647 = pneg %p156
      %p648 = pneg %p153
      %p649 = scmp.lt.s32.totalorder %s31, 1
      %s650 = scalar_select %p649, %s31, 1
      %s651 = smul.addr %s650, 7
      %s652 = smul.addr %s651, 8
      %s653 = scalar_lea.vmem %s5, %s652
      %p654 = pneg %p182
      %p655 = pneg %p179
      %p656 = pneg %p203
      %p657 = pneg %p200
      %p658 = pneg %p224
      %p659 = pneg %p221
      %p660 = pneg %p245
      %p661 = pneg %p242
      %p662 = pneg %p266
      %p663 = pneg %p263
      %p664 = pneg %p287
      %p665 = pneg %p284
      %p666 = pneg %p308
      %p667 = pneg %p305
      %p668 = pneg %p329
      %p669 = pneg %p326
      %p670 = pneg %p350
      %p671 = pneg %p347
      %p672 = pneg %p371
      %p673 = pneg %p368
      %p674 = pneg %p392
      %p675 = pneg %p389
      %p676 = pneg %p413
      %p677 = pneg %p410
      %p678 = pneg %p434
      %p679 = pneg %p431
      %p680 = pneg %p455
      %p681 = pneg %p452
      %p682 = pneg %p476
      %p683 = pneg %p473
      %p684 = pneg %p502
      %p685 = pneg %p499
      %p686 = scmp.lt.s32.totalorder %s31, 1
      %s687 = scalar_select %p686, %s31, 1
      %s688 = smul.addr %s687, 8
      %s689 = scalar_lea.vmem %s20, %s688
      %p690 = scmp.lt.s32.totalorder %s31, 1
      %s691 = scalar_select %p690, %s31, 1
      %s692 = smul.addr %s691, 8
      %s693 = scalar_lea.vmem %s0, %s692
      %p694 = scmp.lt.s32.totalorder %s31, 1
      %s695 = scalar_select %p694, %s31, 1
      %s696 = smul.addr %s695, 7
      %s697 = smul.addr %s696, 4
      %s698 = scalar_lea.vmem %s1, %s697
      %p699 = scmp.lt.s32.totalorder %s31, 1
      %s700 = scalar_select %p699, %s31, 1
      %s701 = smul.addr %s700, 7
      %s702 = smul.addr %s701, 4
      %s703 = scalar_lea.vmem %s2, %s702
      %p704 = scmp.lt.s32.totalorder %s31, 1
      %s705 = scalar_select %p704, %s31, 1
      %s706 = smul.addr %s705, 4
      %s707 = scalar_lea.vmem %s3, %s706
      %p708 = scmp.lt.s32.totalorder %s31, 1
      %s709 = scalar_select %p708, %s31, 1
      %s710 = smul.addr %s709, 7
      %s711 = smul.addr %s710, 4
      %s712 = scalar_lea.vmem %s4, %s711
      %p713 = scmp.lt.s32.totalorder %s31, 1
      %s714 = scalar_select %p713, %s31, 1
      %s715 = smul.addr %s714, 7
      %s716 = smul.addr %s715, 8
      %s717 = scalar_lea.vmem %s5, %s716
      %p718 = scmp.lt.s32.totalorder %s31, 1
      %s719 = scalar_select %p718, %s31, 1
      %s720 = smul.addr %s719, 8
      %s721 = scalar_lea.vmem %s20, %s720
      %v723 = vld [vmem:[%s698] sm:$0xf]
      %v724 = vld [vmem:[%s698 + $0x4] sm:$0xf]
      %v725 = vld [vmem:[%s698 + $0x8] sm:$0xf]
      %v726 = vld [vmem:[%s698 + $0xc] sm:$0xf]
      %v727 = vld [vmem:[%s698 + $0x10] sm:$0xf]
      %v728 = vld [vmem:[%s698 + $0x14] sm:$0xf]
      %v729 = vld [vmem:[%s698 + $0x18] sm:$0xf]
      %v730 = vld [vmem:[%s703] sm:$0xf]
      %v731 = vld [vmem:[%s703 + $0x4] sm:$0xf]
      %v732 = vld [vmem:[%s703 + $0x8] sm:$0xf]
      %v733 = vld [vmem:[%s703 + $0xc] sm:$0xf]
      %v734 = vld [vmem:[%s703 + $0x10] sm:$0xf]
      %v735 = vld [vmem:[%s703 + $0x14] sm:$0xf]
      %v736 = vld [vmem:[%s703 + $0x18] sm:$0xf]
      %v737 = vld [vmem:[%s707] sm:$0xf]
      %v738 = vld [vmem:[%s712] sm:$0xf]
      %v739 = vld [vmem:[%s712 + $0x4] sm:$0xf]
      %v740 = vld [vmem:[%s712 + $0x8] sm:$0xf]
      %v741 = vld [vmem:[%s712 + $0xc] sm:$0xf]
      %v742 = vld [vmem:[%s712 + $0x10] sm:$0xf]
      %v743 = vld [vmem:[%s712 + $0x14] sm:$0xf]
      %v744 = vld [vmem:[%s712 + $0x18] sm:$0xf]
      %v745 = vld [vmem:[%s717] sm:$0xff]
      %v746 = vld [vmem:[%s717 + $0x8] sm:$0xff]
      %v747 = vld [vmem:[%s717 + $0x10] sm:$0xff]
      %v748 = vld [vmem:[%s717 + $0x18] sm:$0xff]
      %v749 = vld [vmem:[%s717 + $0x20] sm:$0xff]
      %v750 = vld [vmem:[%s717 + $0x28] sm:$0xff]
      %v751 = vld [vmem:[%s717 + $0x30] sm:$0xff]
      %v752 = vld [vmem:[%s693] sm:$0xff]
      %v753 = vpack.c.bf16 %v752, %v752
      %v754 = vld [vmem:[%s6] sm:$0x7]
      %v755 = vld [vmem:[%s7] sm:$0x1]
      %v757 = vlaneseq
      %v758 = vshrl.u32 %v757, 7
      %v759 = vsub.s32 0, %v758
      %v760 = vrot.slane %v755, %v759
      %vm762 = vcmask 39936
      %v764 = vsel %vm762, %v753, 0
      %vm766 = vcmask 1041408
      %vm767 = vcmask 1042432
      %v768 = vsel %vm766, 4294967295, 65535
      %v769 = vsel %vm767, %v768, 0
      %v771 = vand.u32 %v754, %v769
      %773 = vmatprep.subr.bf16.mxu0 0
      %774 = vmatpush1.bf16.msra.mxu0 0
      %775 = vmatprep.subr.bf16.mxu0 0
      %776 = vmatpush1.bf16.msra.mxu0 0
      %777 = vmatprep.subr.bf16.mxu0 0
      %778 = vmatpush1.bf16.msra.mxu0 0
      %779 = vmatprep.subr.bf16.mxu0 0
      %780 = vmatpush1.bf16.msra.mxu0 0
      %781 = vmatprep.subr.bf16.mxu0 0
      %782 = vmatpush1.bf16.msra.mxu0 0
      %783 = vmatprep.subr.bf16.mxu0 0
      %784 = vmatpush1.bf16.msra.mxu0 0
      %785 = vmatprep.subr.bf16.mxu0 0
      %786 = vmatpush1.bf16.msra.mxu0 0
      %787 = vmatprep.subr.bf16.mxu0 0
      %788 = vmatpush1.bf16.msra.mxu0 %v771
      %789 = vmatprep.subr.bf16.mxu0 0
      %790 = vmatpush2.bf16.msra.mxu0 0
      %791 = vmatprep.subr.bf16.mxu0 0
      %792 = vmatpush2.bf16.msra.mxu0 0
      %793 = vmatprep.subr.bf16.mxu0 0
      %794 = vmatpush2.bf16.msra.mxu0 0
      %795 = vmatprep.subr.bf16.mxu0 0
      %796 = vmatpush2.bf16.msra.mxu0 0
      %797 = vmatprep.subr.bf16.mxu0 0
      %798 = vmatpush2.bf16.msra.mxu0 0
      %799 = vmatprep.subr.bf16.mxu0 0
      %800 = vmatpush2.bf16.msra.mxu0 0
      %801 = vmatprep.subr.bf16.mxu0 0
      %802 = vmatpush2.bf16.msra.mxu0 0
      %803 = vmatprep.subr.bf16.mxu0 0
      %804 = vmatpush2.bf16.msra.mxu0 0
      %805 = vmatprep.mubr.bf16.mxu0 0
      %806 = vmatmul.mubr.bf16.gmra.mxu0 %v764
      %v807 = vpop.f32.mrf.mxu0
      %v808 = vadd.f32 %v760, %v807
      %v809 = vpop.f32.mrf.mxu0
      %v810 = vpop.f32.mrf.mxu0
      %v811 = vpop.f32.mrf.mxu0
      %812 = vdwg.mxu0
      %v813 = vpack.c.bf16 %v808, %v808
      %v814 = vld [vmem:[%s8] sm:$0xf]
      %v815 = vld [vmem:[%s8 + $0x4] sm:$0xf]
      %v816 = vld [vmem:[%s8 + $0x8] sm:$0xf]
      %v817 = vld [vmem:[%s8 + $0xc] sm:$0xf]
      %v818 = vld [vmem:[%s8 + $0x10] sm:$0xf]
      %v819 = vld [vmem:[%s8 + $0x14] sm:$0xf]
      %v820 = vld [vmem:[%s8 + $0x18] sm:$0xf]
      %v821 = vld [vmem:[%s8 + $0x1c] sm:$0xf]
      %v822 = vld [vmem:[%s8 + $0x20] sm:$0xf]
      %v823 = vld [vmem:[%s8 + $0x24] sm:$0xf]
      %v824 = vld [vmem:[%s8 + $0x28] sm:$0xf]
      %v825 = vld [vmem:[%s8 + $0x2c] sm:$0xf]
      %v826 = vld [vmem:[%s8 + $0x30] sm:$0xf]
      %v827 = vld [vmem:[%s8 + $0x34] sm:$0xf]
      %v828 = vld [vmem:[%s8 + $0x38] sm:$0xf]
      %v829 = vld [vmem:[%s8 + $0x3c] sm:$0xf]
      %v846 = vunpack.c.l.b16 %v814
      %v847 = vunpack.c.l.b16 %v815
      %v848 = vunpack.c.l.b16 %v816
      %v849 = vunpack.c.l.b16 %v817
      %v850 = vunpack.c.l.b16 %v818
      %v851 = vunpack.c.l.b16 %v819
      %v852 = vunpack.c.l.b16 %v820
      %v853 = vunpack.c.l.b16 %v821
      %v854 = vunpack.c.l.b16 %v822
      %v855 = vunpack.c.l.b16 %v823
      %v856 = vunpack.c.l.b16 %v824
      %v857 = vunpack.c.l.b16 %v825
      %v858 = vunpack.c.l.b16 %v826
      %v859 = vunpack.c.l.b16 %v827
      %v860 = vunpack.c.l.b16 %v828
      %v861 = vunpack.c.l.b16 %v829
      %v862 = vpack.c.b16 %v847, %v846
      %v863 = vpack.c.b16 %v849, %v848
      %v864 = vpack.c.b16 %v851, %v850
      %v865 = vpack.c.b16 %v853, %v852
      %v866 = vpack.c.b16 %v855, %v854
      %v867 = vpack.c.b16 %v857, %v856
      %v868 = vpack.c.b16 %v859, %v858
      %v869 = vpack.c.b16 %v861, %v860
      %878 = vmatprep.subr.bf16.mxu0 0
      %879 = vmatpush1.bf16.msra.mxu0 %v869
      %880 = vmatprep.subr.bf16.mxu0 0
      %881 = vmatpush1.bf16.msra.mxu0 %v868
      %882 = vmatprep.subr.bf16.mxu0 0
      %883 = vmatpush1.bf16.msra.mxu0 %v867
      %884 = vmatprep.subr.bf16.mxu0 0
      %885 = vmatpush1.bf16.msra.mxu0 %v866
      %886 = vmatprep.subr.bf16.mxu0 0
      %887 = vmatpush1.bf16.msra.mxu0 %v865
      %888 = vmatprep.subr.bf16.mxu0 0
      %889 = vmatpush1.bf16.msra.mxu0 %v864
      %890 = vmatprep.subr.bf16.mxu0 0
      %891 = vmatpush1.bf16.msra.mxu0 %v863
      %892 = vmatprep.subr.bf16.mxu0 0
      %893 = vmatpush1.bf16.msra.mxu0 %v862
      %894 = vmatprep.subr.bf16.mxu0 0
      %895 = vmatpush2.bf16.msra.mxu0 0
      %896 = vmatprep.subr.bf16.mxu0 0
      %897 = vmatpush2.bf16.msra.mxu0 0
      %898 = vmatprep.subr.bf16.mxu0 0
      %899 = vmatpush2.bf16.msra.mxu0 0
      %900 = vmatprep.subr.bf16.mxu0 0
      %901 = vmatpush2.bf16.msra.mxu0 0
      %902 = vmatprep.subr.bf16.mxu0 0
      %903 = vmatpush2.bf16.msra.mxu0 0
      %904 = vmatprep.subr.bf16.mxu0 0
      %905 = vmatpush2.bf16.msra.mxu0 0
      %906 = vmatprep.subr.bf16.mxu0 0
      %907 = vmatpush2.bf16.msra.mxu0 0
      %908 = vmatprep.subr.bf16.mxu0 0
      %909 = vmatpush2.bf16.msra.mxu0 0
      %910 = vmatprep.mubr.bf16.mxu0 0
      %911 = vmatmul.mubr.bf16.gmra.mxu0 %v813
      %v912 = vpop.f32.mrf.mxu0
      %v913 = vadd.f32 0.0, %v912
      %v914 = vpop.f32.mrf.mxu0
      %v915 = vpop.f32.mrf.mxu0
      %v916 = vpop.f32.mrf.mxu0
      %917 = vdwg.mxu0
      %v918 = vpack.c.bf16 %v913, %v913
      %v919 = vld [vmem:[%s9] sm:$0xf]
      %v920 = vld [vmem:[%s9 + $0x4] sm:$0xf]
      %v921 = vld [vmem:[%s9 + $0x8] sm:$0xf]
      %v922 = vld [vmem:[%s9 + $0xc] sm:$0xf]
      %v923 = vld [vmem:[%s9 + $0x10] sm:$0xf]
      %v924 = vld [vmem:[%s9 + $0x14] sm:$0xf]
      %v925 = vld [vmem:[%s9 + $0x18] sm:$0xf]
      %v926 = vld [vmem:[%s9 + $0x1c] sm:$0xf]
      %v927 = vld [vmem:[%s9 + $0x20] sm:$0xf]
      %v928 = vld [vmem:[%s9 + $0x24] sm:$0xf]
      %v929 = vld [vmem:[%s9 + $0x28] sm:$0xf]
      %v930 = vld [vmem:[%s9 + $0x2c] sm:$0xf]
      %v931 = vld [vmem:[%s9 + $0x30] sm:$0xf]
      %v932 = vld [vmem:[%s9 + $0x34] sm:$0xf]
      %v933 = vld [vmem:[%s9 + $0x38] sm:$0xf]
      %v934 = vld [vmem:[%s9 + $0x3c] sm:$0xf]
      %v951 = vunpack.c.l.b16 %v919
      %v952 = vunpack.c.l.b16 %v920
      %v953 = vunpack.c.l.b16 %v921
      %v954 = vunpack.c.l.b16 %v922
      %v955 = vunpack.c.l.b16 %v923
      %v956 = vunpack.c.l.b16 %v924
      %v957 = vunpack.c.l.b16 %v925
      %v958 = vunpack.c.l.b16 %v926
      %v959 = vunpack.c.l.b16 %v927
      %v960 = vunpack.c.l.b16 %v928
      %v961 = vunpack.c.l.b16 %v929
      %v962 = vunpack.c.l.b16 %v930
      %v963 = vunpack.c.l.b16 %v931
      %v964 = vunpack.c.l.b16 %v932
      %v965 = vunpack.c.l.b16 %v933
      %v966 = vunpack.c.l.b16 %v934
      %v967 = vpack.c.b16 %v952, %v951
      %v968 = vpack.c.b16 %v954, %v953
      %v969 = vpack.c.b16 %v956, %v955
      %v970 = vpack.c.b16 %v958, %v957
      %v971 = vpack.c.b16 %v960, %v959
      %v972 = vpack.c.b16 %v962, %v961
      %v973 = vpack.c.b16 %v964, %v963
      %v974 = vpack.c.b16 %v966, %v965
      %983 = vmatprep.subr.bf16.mxu0 0
      %984 = vmatpush1.bf16.msra.mxu0 %v974
      %985 = vmatprep.subr.bf16.mxu0 0
      %986 = vmatpush1.bf16.msra.mxu0 %v973
      %987 = vmatprep.subr.bf16.mxu0 0
      %988 = vmatpush1.bf16.msra.mxu0 %v972
      %989 = vmatprep.subr.bf16.mxu0 0
      %990 = vmatpush1.bf16.msra.mxu0 %v971
      %991 = vmatprep.subr.bf16.mxu0 0
      %992 = vmatpush1.bf16.msra.mxu0 %v970
      %993 = vmatprep.subr.bf16.mxu0 0
      %994 = vmatpush1.bf16.msra.mxu0 %v969
      %995 = vmatprep.subr.bf16.mxu0 0
      %996 = vmatpush1.bf16.msra.mxu0 %v968
      %997 = vmatprep.subr.bf16.mxu0 0
      %998 = vmatpush1.bf16.msra.mxu0 %v967
      %999 = vmatprep.subr.bf16.mxu0 0
      %1000 = vmatpush2.bf16.msra.mxu0 0
      %1001 = vmatprep.subr.bf16.mxu0 0
      %1002 = vmatpush2.bf16.msra.mxu0 0
      %1003 = vmatprep.subr.bf16.mxu0 0
      %1004 = vmatpush2.bf16.msra.mxu0 0
      %1005 = vmatprep.subr.bf16.mxu0 0
      %1006 = vmatpush2.bf16.msra.mxu0 0
      %1007 = vmatprep.subr.bf16.mxu0 0
      %1008 = vmatpush2.bf16.msra.mxu0 0
      %1009 = vmatprep.subr.bf16.mxu0 0
      %1010 = vmatpush2.bf16.msra.mxu0 0
      %1011 = vmatprep.subr.bf16.mxu0 0
      %1012 = vmatpush2.bf16.msra.mxu0 0
      %1013 = vmatprep.subr.bf16.mxu0 0
      %1014 = vmatpush2.bf16.msra.mxu0 0
      %1015 = vmatprep.mubr.bf16.mxu0 0
      %1016 = vmatmul.mubr.bf16.gmra.mxu0 %v813
      %v1017 = vpop.f32.mrf.mxu0
      %v1018 = vadd.f32 0.0, %v1017
      %v1019 = vpop.f32.mrf.mxu0
      %v1020 = vpop.f32.mrf.mxu0
      %v1021 = vpop.f32.mrf.mxu0
      %1022 = vdwg.mxu0
      %v1023 = vpack.c.bf16 %v1018, %v1018
      %v1031 = vunpack.c.l.b16 %v730
      %v1032 = vunpack.c.l.b16 %v731
      %v1033 = vunpack.c.l.b16 %v732
      %v1034 = vunpack.c.l.b16 %v733
      %v1035 = vunpack.c.l.b16 %v734
      %v1036 = vunpack.c.l.b16 %v735
      %v1037 = vunpack.c.l.b16 %v736
      %v1038 = vpack.c.b16 %v1032, %v1031
      %v1039 = vpack.c.b16 %v1034, %v1033
      %v1040 = vpack.c.b16 %v1036, %v1035
      %v1041 = vpack.c.b16 %v1037, %v1037
      %vm1042 = vcmask 64512
      %v1044 = vsel %vm1042, %v1038, 0
      %v1047 = vsel %vm1042, %v1039, 0
      %v1050 = vsel %vm1042, %v1040, 0
      %v1053 = vsel %vm1042, %v1041, 0
      %vm1055 = vcmask 1043456
      %v1057 = vsel %vm1055, %v1023, 0
      %1059 = vmatprep.subr.bf16.mxu0 0
      %1060 = vmatpush1.bf16.msra.mxu0 0
      %1061 = vmatprep.subr.bf16.mxu0 0
      %1062 = vmatpush1.bf16.msra.mxu0 0
      %1063 = vmatprep.subr.bf16.mxu0 0
      %1064 = vmatpush1.bf16.msra.mxu0 0
      %1065 = vmatprep.subr.bf16.mxu0 0
      %1066 = vmatpush1.bf16.msra.mxu0 0
      %1067 = vmatprep.subr.bf16.mxu0 0
      %1068 = vmatpush1.bf16.msra.mxu0 0
      %1069 = vmatprep.subr.bf16.mxu0 0
      %1070 = vmatpush1.bf16.msra.mxu0 0
      %1071 = vmatprep.subr.bf16.mxu0 0
      %1072 = vmatpush1.bf16.msra.mxu0 0
      %1073 = vmatprep.subr.bf16.mxu0 0
      %1074 = vmatpush1.bf16.msra.mxu0 %v1057
      %1075 = vmatprep.subr.bf16.mxu0 0
      %1076 = vmatpush2.bf16.msra.mxu0 0
      %1077 = vmatprep.subr.bf16.mxu0 0
      %1078 = vmatpush2.bf16.msra.mxu0 0
      %1079 = vmatprep.subr.bf16.mxu0 0
      %1080 = vmatpush2.bf16.msra.mxu0 0
      %1081 = vmatprep.subr.bf16.mxu0 0
      %1082 = vmatpush2.bf16.msra.mxu0 0
      %1083 = vmatprep.subr.bf16.mxu0 0
      %1084 = vmatpush2.bf16.msra.mxu0 0
      %1085 = vmatprep.subr.bf16.mxu0 0
      %1086 = vmatpush2.bf16.msra.mxu0 0
      %1087 = vmatprep.subr.bf16.mxu0 0
      %1088 = vmatpush2.bf16.msra.mxu0 0
      %1089 = vmatprep.subr.bf16.mxu0 0
      %1090 = vmatpush2.bf16.msra.mxu0 0
      %1091 = vmatprep.mubr.bf16.mxu0 0
      %1092 = vmatmul.mubr.bf16.gmra.mxu0 %v1044
      %v1093 = vpop.f32.mrf.mxu0
      %v1094 = vadd.f32 0.0, %v1093
      %v1095 = vpop.f32.mrf.mxu0
      %v1096 = vpop.f32.mrf.mxu0
      %v1097 = vadd.f32 0.0, %v1096
      %v1098 = vpop.f32.mrf.mxu0
      %1099 = vmatprep.mubr.bf16.mxu0 0
      %1100 = vmatmul.mubr.bf16.gmra.mxu0 %v1047
      %v1101 = vpop.f32.mrf.mxu0
      %v1102 = vadd.f32 0.0, %v1101
      %v1103 = vpop.f32.mrf.mxu0
      %v1104 = vpop.f32.mrf.mxu0
      %v1105 = vadd.f32 0.0, %v1104
      %v1106 = vpop.f32.mrf.mxu0
      %1107 = vmatprep.mubr.bf16.mxu0 0
      %1108 = vmatmul.mubr.bf16.gmra.mxu0 %v1050
      %v1109 = vpop.f32.mrf.mxu0
      %v1110 = vadd.f32 0.0, %v1109
      %v1111 = vpop.f32.mrf.mxu0
      %v1112 = vpop.f32.mrf.mxu0
      %v1113 = vadd.f32 0.0, %v1112
      %v1114 = vpop.f32.mrf.mxu0
      %1115 = vmatprep.mubr.bf16.mxu0 0
      %1116 = vmatmul.mubr.bf16.gmra.mxu0 %v1053
      %v1117 = vpop.f32.mrf.mxu0
      %v1118 = vadd.f32 0.0, %v1117
      %v1119 = vpop.f32.mrf.mxu0
      %v1120 = vpop.f32.mrf.mxu0
      %v1121 = vpop.f32.mrf.mxu0
      %1122 = vdwg.mxu0
      %v1130 = vunpack.c.l.b16 %v723
      %v1131 = vunpack.c.l.b16 %v724
      %v1132 = vunpack.c.l.b16 %v725
      %v1133 = vunpack.c.l.b16 %v726
      %v1134 = vunpack.c.l.b16 %v727
      %v1135 = vunpack.c.l.b16 %v728
      %v1136 = vunpack.c.l.b16 %v729
      %v1137 = vpack.c.b16 %v1131, %v1130
      %v1138 = vpack.c.b16 %v1133, %v1132
      %v1139 = vpack.c.b16 %v1135, %v1134
      %v1140 = vpack.c.b16 %v1136, %v1136
      %v1142 = vsel %vm1042, %v1137, 0
      %v1145 = vsel %vm1042, %v1138, 0
      %v1148 = vsel %vm1042, %v1139, 0
      %v1151 = vsel %vm1042, %v1140, 0
      %v1154 = vsel %vm1055, %v918, 0
      %1156 = vmatprep.subr.bf16.mxu0 0
      %1157 = vmatpush1.bf16.msra.mxu0 0
      %1158 = vmatprep.subr.bf16.mxu0 0
      %1159 = vmatpush1.bf16.msra.mxu0 0
      %1160 = vmatprep.subr.bf16.mxu0 0
      %1161 = vmatpush1.bf16.msra.mxu0 0
      %1162 = vmatprep.subr.bf16.mxu0 0
      %1163 = vmatpush1.bf16.msra.mxu0 0
      %1164 = vmatprep.subr.bf16.mxu0 0
      %1165 = vmatpush1.bf16.msra.mxu0 0
      %1166 = vmatprep.subr.bf16.mxu0 0
      %1167 = vmatpush1.bf16.msra.mxu0 0
      %1168 = vmatprep.subr.bf16.mxu0 0
      %1169 = vmatpush1.bf16.msra.mxu0 0
      %1170 = vmatprep.subr.bf16.mxu0 0
      %1171 = vmatpush1.bf16.msra.mxu0 %v1154
      %1172 = vmatprep.subr.bf16.mxu0 0
      %1173 = vmatpush2.bf16.msra.mxu0 0
      %1174 = vmatprep.subr.bf16.mxu0 0
      %1175 = vmatpush2.bf16.msra.mxu0 0
      %1176 = vmatprep.subr.bf16.mxu0 0
      %1177 = vmatpush2.bf16.msra.mxu0 0
      %1178 = vmatprep.subr.bf16.mxu0 0
      %1179 = vmatpush2.bf16.msra.mxu0 0
      %1180 = vmatprep.subr.bf16.mxu0 0
      %1181 = vmatpush2.bf16.msra.mxu0 0
      %1182 = vmatprep.subr.bf16.mxu0 0
      %1183 = vmatpush2.bf16.msra.mxu0 0
      %1184 = vmatprep.subr.bf16.mxu0 0
      %1185 = vmatpush2.bf16.msra.mxu0 0
      %1186 = vmatprep.subr.bf16.mxu0 0
      %1187 = vmatpush2.bf16.msra.mxu0 0
      %1188 = vmatprep.mubr.bf16.mxu0 0
      %1189 = vmatmul.mubr.bf16.gmra.mxu0 %v1142
      %v1190 = vpop.f32.mrf.mxu0
      %v1191 = vadd.f32 %v1094, %v1190
      %v1192 = vpop.f32.mrf.mxu0
      %v1193 = vpop.f32.mrf.mxu0
      %v1194 = vadd.f32 %v1097, %v1193
      %v1195 = vpop.f32.mrf.mxu0
      %1196 = vmatprep.mubr.bf16.mxu0 0
      %1197 = vmatmul.mubr.bf16.gmra.mxu0 %v1145
      %v1198 = vpop.f32.mrf.mxu0
      %v1199 = vadd.f32 %v1102, %v1198
      %v1200 = vpop.f32.mrf.mxu0
      %v1201 = vpop.f32.mrf.mxu0
      %v1202 = vadd.f32 %v1105, %v1201
      %v1203 = vpop.f32.mrf.mxu0
      %1204 = vmatprep.mubr.bf16.mxu0 0
      %1205 = vmatmul.mubr.bf16.gmra.mxu0 %v1148
      %v1206 = vpop.f32.mrf.mxu0
      %v1207 = vadd.f32 %v1110, %v1206
      %v1208 = vpop.f32.mrf.mxu0
      %v1209 = vpop.f32.mrf.mxu0
      %v1210 = vadd.f32 %v1113, %v1209
      %v1211 = vpop.f32.mrf.mxu0
      %1212 = vmatprep.mubr.bf16.mxu0 0
      %1213 = vmatmul.mubr.bf16.gmra.mxu0 %v1151
      %v1214 = vpop.f32.mrf.mxu0
      %v1215 = vadd.f32 %v1118, %v1214
      %v1216 = vpop.f32.mrf.mxu0
      %v1217 = vpop.f32.mrf.mxu0
      %v1218 = vpop.f32.mrf.mxu0
      %1219 = vdwg.mxu0
      %v1220 = vld [vmem:[%s10] sm:$0x3]
      %v1228 = vunpack.c.l.b16 %v738
      %v1229 = vunpack.c.l.b16 %v739
      %v1230 = vunpack.c.l.b16 %v740
      %v1231 = vunpack.c.l.b16 %v741
      %v1232 = vunpack.c.l.b16 %v742
      %v1233 = vunpack.c.l.b16 %v743
      %v1234 = vunpack.c.l.b16 %v744
      %v1235 = vpack.c.b16 %v1229, %v1228
      %v1236 = vpack.c.b16 %v1231, %v1230
      %v1237 = vpack.c.b16 %v1233, %v1232
      %v1238 = vpack.c.b16 %v1234, %v1234
      %vm1239 = vcmask 31744
      %v1241 = vsel %vm1239, %v1235, 0
      %v1244 = vsel %vm1239, %v1236, 0
      %v1247 = vsel %vm1239, %v1237, 0
      %v1250 = vsel %vm1239, %v1238, 0
      %v1253 = vsel %vm766, %v1220, 0
      %1255 = vmatprep.subr.bf16.mxu0 0
      %1256 = vmatpush1.bf16.msra.mxu0 0
      %1257 = vmatprep.subr.bf16.mxu0 0
      %1258 = vmatpush1.bf16.msra.mxu0 0
      %1259 = vmatprep.subr.bf16.mxu0 0
      %1260 = vmatpush1.bf16.msra.mxu0 0
      %1261 = vmatprep.subr.bf16.mxu0 0
      %1262 = vmatpush1.bf16.msra.mxu0 0
      %1263 = vmatprep.subr.bf16.mxu0 0
      %1264 = vmatpush1.bf16.msra.mxu0 0
      %1265 = vmatprep.subr.bf16.mxu0 0
      %1266 = vmatpush1.bf16.msra.mxu0 0
      %1267 = vmatprep.subr.bf16.mxu0 0
      %1268 = vmatpush1.bf16.msra.mxu0 0
      %1269 = vmatprep.subr.bf16.mxu0 0
      %1270 = vmatpush1.bf16.msra.mxu0 %v1253
      %1271 = vmatprep.subr.bf16.mxu0 0
      %1272 = vmatpush2.bf16.msra.mxu0 0
      %1273 = vmatprep.subr.bf16.mxu0 0
      %1274 = vmatpush2.bf16.msra.mxu0 0
      %1275 = vmatprep.subr.bf16.mxu0 0
      %1276 = vmatpush2.bf16.msra.mxu0 0
      %1277 = vmatprep.subr.bf16.mxu0 0
      %1278 = vmatpush2.bf16.msra.mxu0 0
      %1279 = vmatprep.subr.bf16.mxu0 0
      %1280 = vmatpush2.bf16.msra.mxu0 0
      %1281 = vmatprep.subr.bf16.mxu0 0
      %1282 = vmatpush2.bf16.msra.mxu0 0
      %1283 = vmatprep.subr.bf16.mxu0 0
      %1284 = vmatpush2.bf16.msra.mxu0 0
      %1285 = vmatprep.subr.bf16.mxu0 0
      %1286 = vmatpush2.bf16.msra.mxu0 0
      %1287 = vmatprep.mubr.bf16.mxu0 0
      %1288 = vmatmul.mubr.bf16.gmra.mxu0 %v1241
      %v1289 = vpop.f32.mrf.mxu0
      %v1290 = vadd.f32 0.0, %v1289
      %v1291 = vpop.f32.mrf.mxu0
      %v1292 = vpop.f32.mrf.mxu0
      %v1293 = vadd.f32 0.0, %v1292
      %v1294 = vpop.f32.mrf.mxu0
      %1295 = vmatprep.mubr.bf16.mxu0 0
      %1296 = vmatmul.mubr.bf16.gmra.mxu0 %v1244
      %v1297 = vpop.f32.mrf.mxu0
      %v1298 = vadd.f32 0.0, %v1297
      %v1299 = vpop.f32.mrf.mxu0
      %v1300 = vpop.f32.mrf.mxu0
      %v1301 = vadd.f32 0.0, %v1300
      %v1302 = vpop.f32.mrf.mxu0
      %1303 = vmatprep.mubr.bf16.mxu0 0
      %1304 = vmatmul.mubr.bf16.gmra.mxu0 %v1247
      %v1305 = vpop.f32.mrf.mxu0
      %v1306 = vadd.f32 0.0, %v1305
      %v1307 = vpop.f32.mrf.mxu0
      %v1308 = vpop.f32.mrf.mxu0
      %v1309 = vadd.f32 0.0, %v1308
      %v1310 = vpop.f32.mrf.mxu0
      %1311 = vmatprep.mubr.bf16.mxu0 0
      %1312 = vmatmul.mubr.bf16.gmra.mxu0 %v1250
      %v1313 = vpop.f32.mrf.mxu0
      %v1314 = vadd.f32 0.0, %v1313
      %v1315 = vpop.f32.mrf.mxu0
      %v1316 = vpop.f32.mrf.mxu0
      %v1317 = vpop.f32.mrf.mxu0
      %1318 = vdwg.mxu0
      %v1319 = vadd.f32 %v1191, %v1290
      %v1320 = vadd.f32 %v1194, %v1293
      %v1321 = vadd.f32 %v1199, %v1298
      %v1322 = vadd.f32 %v1202, %v1301
      %v1323 = vadd.f32 %v1207, %v1306
      %v1324 = vadd.f32 %v1210, %v1309
      %v1325 = vadd.f32 %v1215, %v1314
      %v1326 = vld [vmem:[%s11] sm:$0x1]
      %1328 = vset.pattern.permute.xlu0 0
      %1329 = vperm.xlu0 %1328, %v745
      %v1330 = vpop.permute.xlu0 %1329
      %1333 = vset.pattern.permute.xlu0 0
      %1334 = vperm.xlu0 %1333, %v746
      %v1335 = vpop.permute.xlu0 %1334
      %1338 = vset.pattern.permute.xlu0 0
      %1339 = vperm.xlu0 %1338, %v747
      %v1340 = vpop.permute.xlu0 %1339
      %1343 = vset.pattern.permute.xlu0 0
      %1344 = vperm.xlu0 %1343, %v748
      %v1345 = vpop.permute.xlu0 %1344
      %1348 = vset.pattern.permute.xlu0 0
      %1349 = vperm.xlu0 %1348, %v749
      %v1350 = vpop.permute.xlu0 %1349
      %1353 = vset.pattern.permute.xlu0 0
      %1354 = vperm.xlu0 %1353, %v750
      %v1355 = vpop.permute.xlu0 %1354
      %1358 = vset.pattern.permute.xlu0 0
      %1359 = vperm.xlu0 %1358, %v751
      %v1360 = vpop.permute.xlu0 %1359
      %v1363 = vlaneseq
      %v1364 = vshrl.u32 %v1363, 7
      %v1365 = vsub.s32 0, %v1364
      %v1366 = vrot.slane %v1326, %v1365
      %v1368 = vmul.f32 %v1330, %v1366
      %v1369 = vmul.f32 %v1335, %v1366
      %v1370 = vmul.f32 %v1340, %v1366
      %v1371 = vmul.f32 %v1345, %v1366
      %v1372 = vmul.f32 %v1350, %v1366
      %v1373 = vmul.f32 %v1355, %v1366
      %v1374 = vmul.f32 %v1360, %v1366
      %v1375 = vadd.f32 %v1319, %v1368
      %v1376 = vadd.f32 %v1320, %v1369
      %v1377 = vadd.f32 %v1321, %v1370
      %v1378 = vadd.f32 %v1322, %v1371
      %v1379 = vadd.f32 %v1323, %v1372
      %v1380 = vadd.f32 %v1324, %v1373
      %v1381 = vadd.f32 %v1325, %v1374
      %v1382 = vld [vmem:[%s12] sm:$0x1]
      %v1384 = vlaneseq
      %v1385 = vshrl.u32 %v1384, 7
      %v1386 = vsub.s32 0, %v1385
      %v1387 = vrot.slane %v1382, %v1386
      %v1389 = vadd.f32 %v1375, %v1387
      %v1390 = vadd.f32 %v1376, %v1387
      %v1391 = vadd.f32 %v1377, %v1387
      %v1392 = vadd.f32 %v1378, %v1387
      %v1393 = vadd.f32 %v1379, %v1387
      %v1394 = vadd.f32 %v1380, %v1387
      %v1395 = vadd.f32 %v1381, %v1387
      %vm1396 = vcmp.gt.f32.partialorder %v1389, 0.0
      %vm1397 = vcmp.gt.f32.partialorder %v1390, 0.0
      %vm1398 = vcmp.gt.f32.partialorder %v1391, 0.0
      %vm1399 = vcmp.gt.f32.partialorder %v1392, 0.0
      %vm1400 = vcmp.gt.f32.partialorder %v1393, 0.0
      %vm1401 = vcmp.gt.f32.partialorder %v1394, 0.0
      %vm1402 = vcmp.gt.f32.partialorder %v1395, 0.0
      %v1403 = vmin.f32 %v1389, 0.0
      %v1404 = vmin.f32 %v1390, 0.0
      %v1405 = vmin.f32 %v1391, 0.0
      %v1406 = vmin.f32 %v1392, 0.0
      %v1407 = vmin.f32 %v1393, 0.0
      %v1408 = vmin.f32 %v1394, 0.0
      %v1409 = vmin.f32 %v1395, 0.0
      %v1410 = vmul.f32 %v1403, 1.442695
      %v1411 = vpow.pop %v1410
      %v1412 = vmul.f32 %v1404, 1.442695
      %v1413 = vpow.pop %v1412
      %v1414 = vmul.f32 %v1405, 1.442695
      %v1415 = vpow.pop %v1414
      %v1416 = vmul.f32 %v1406, 1.442695
      %v1417 = vpow.pop %v1416
      %v1418 = vmul.f32 %v1407, 1.442695
      %v1419 = vpow.pop %v1418
      %v1420 = vmul.f32 %v1408, 1.442695
      %v1421 = vpow.pop %v1420
      %v1422 = vmul.f32 %v1409, 1.442695
      %v1423 = vpow.pop %v1422
      %v1424 = vsub.f32 %v1411, 1.0
      %v1425 = vsub.f32 %v1413, 1.0
      %v1426 = vsub.f32 %v1415, 1.0
      %v1427 = vsub.f32 %v1417, 1.0
      %v1428 = vsub.f32 %v1419, 1.0
      %v1429 = vsub.f32 %v1421, 1.0
      %v1430 = vsub.f32 %v1423, 1.0
      %v1431 = vsel %vm1396, %v1389, %v1424
      %v1432 = vsel %vm1397, %v1390, %v1425
      %v1433 = vsel %vm1398, %v1391, %v1426
      %v1434 = vsel %vm1399, %v1392, %v1427
      %v1435 = vsel %vm1400, %v1393, %v1428
      %v1436 = vsel %vm1401, %v1394, %v1429
      %v1437 = vsel %vm1402, %v1395, %v1430
      %v1438 = vpack.c.bf16 %v1432, %v1431
      %v1439 = vpack.c.bf16 %v1434, %v1433
      %v1440 = vpack.c.bf16 %v1436, %v1435
      %v1441 = vpack.c.bf16 %v1437, %v1437
      %v1442 = vld [vmem:[%s13] sm:$0xf]
      %v1443 = vld [vmem:[%s13 + $0x4] sm:$0xf]
      %v1444 = vld [vmem:[%s13 + $0x8] sm:$0xf]
      %v1445 = vld [vmem:[%s13 + $0xc] sm:$0xf]
      %v1446 = vld [vmem:[%s13 + $0x10] sm:$0xf]
      %v1447 = vld [vmem:[%s13 + $0x14] sm:$0xf]
      %v1448 = vld [vmem:[%s13 + $0x18] sm:$0xf]
      %v1449 = vld [vmem:[%s13 + $0x1c] sm:$0xf]
      %v1450 = vld [vmem:[%s13 + $0x20] sm:$0xf]
      %v1451 = vld [vmem:[%s13 + $0x24] sm:$0xf]
      %v1452 = vld [vmem:[%s13 + $0x28] sm:$0xf]
      %v1453 = vld [vmem:[%s13 + $0x2c] sm:$0xf]
      %v1454 = vld [vmem:[%s13 + $0x30] sm:$0xf]
      %v1455 = vld [vmem:[%s13 + $0x34] sm:$0xf]
      %v1456 = vld [vmem:[%s13 + $0x38] sm:$0xf]
      %v1457 = vld [vmem:[%s13 + $0x3c] sm:$0xf]
      %v1458 = vld [vmem:[%s14] sm:$0x1]
      %v1460 = vlaneseq
      %v1461 = vshrl.u32 %v1460, 7
      %v1462 = vsub.s32 0, %v1461
      %v1463 = vrot.slane %v1458, %v1462
      %v1481 = vunpack.c.l.b16 %v1442
      %v1482 = vunpack.c.l.b16 %v1443
      %v1483 = vunpack.c.l.b16 %v1444
      %v1484 = vunpack.c.l.b16 %v1445
      %v1485 = vunpack.c.l.b16 %v1446
      %v1486 = vunpack.c.l.b16 %v1447
      %v1487 = vunpack.c.l.b16 %v1448
      %v1488 = vunpack.c.l.b16 %v1449
      %v1489 = vunpack.c.l.b16 %v1450
      %v1490 = vunpack.c.l.b16 %v1451
      %v1491 = vunpack.c.l.b16 %v1452
      %v1492 = vunpack.c.l.b16 %v1453
      %v1493 = vunpack.c.l.b16 %v1454
      %v1494 = vunpack.c.l.b16 %v1455
      %v1495 = vunpack.c.l.b16 %v1456
      %v1496 = vunpack.c.l.b16 %v1457
      %v1497 = vpack.c.b16 %v1482, %v1481
      %v1498 = vpack.c.b16 %v1484, %v1483
      %v1499 = vpack.c.b16 %v1486, %v1485
      %v1500 = vpack.c.b16 %v1488, %v1487
      %v1501 = vpack.c.b16 %v1490, %v1489
      %v1502 = vpack.c.b16 %v1492, %v1491
      %v1503 = vpack.c.b16 %v1494, %v1493
      %v1504 = vpack.c.b16 %v1496, %v1495
      %1513 = vmatprep.subr.bf16.mxu0 0
      %1514 = vmatpush1.bf16.msra.mxu0 %v1504
      %1515 = vmatprep.subr.bf16.mxu0 0
      %1516 = vmatpush1.bf16.msra.mxu0 %v1503
      %1517 = vmatprep.subr.bf16.mxu0 0
      %1518 = vmatpush1.bf16.msra.mxu0 %v1502
      %1519 = vmatprep.subr.bf16.mxu0 0
      %1520 = vmatpush1.bf16.msra.mxu0 %v1501
      %1521 = vmatprep.subr.bf16.mxu0 0
      %1522 = vmatpush1.bf16.msra.mxu0 %v1500
      %1523 = vmatprep.subr.bf16.mxu0 0
      %1524 = vmatpush1.bf16.msra.mxu0 %v1499
      %1525 = vmatprep.subr.bf16.mxu0 0
      %1526 = vmatpush1.bf16.msra.mxu0 %v1498
      %1527 = vmatprep.subr.bf16.mxu0 0
      %1528 = vmatpush1.bf16.msra.mxu0 %v1497
      %1529 = vmatprep.subr.bf16.mxu0 0
      %1530 = vmatpush2.bf16.msra.mxu0 0
      %1531 = vmatprep.subr.bf16.mxu0 0
      %1532 = vmatpush2.bf16.msra.mxu0 0
      %1533 = vmatprep.subr.bf16.mxu0 0
      %1534 = vmatpush2.bf16.msra.mxu0 0
      %1535 = vmatprep.subr.bf16.mxu0 0
      %1536 = vmatpush2.bf16.msra.mxu0 0
      %1537 = vmatprep.subr.bf16.mxu0 0
      %1538 = vmatpush2.bf16.msra.mxu0 0
      %1539 = vmatprep.subr.bf16.mxu0 0
      %1540 = vmatpush2.bf16.msra.mxu0 0
      %1541 = vmatprep.subr.bf16.mxu0 0
      %1542 = vmatpush2.bf16.msra.mxu0 0
      %1543 = vmatprep.subr.bf16.mxu0 0
      %1544 = vmatpush2.bf16.msra.mxu0 0
      %1545 = vmatprep.mubr.bf16.mxu0 0
      %1546 = vmatmul.mubr.bf16.gmra.mxu0 %v1438
      %v1547 = vpop.f32.mrf.mxu0
      %v1548 = vadd.f32 %v1463, %v1547
      %v1549 = vpop.f32.mrf.mxu0
      %v1550 = vpop.f32.mrf.mxu0
      %v1551 = vadd.f32 %v1463, %v1550
      %v1552 = vpop.f32.mrf.mxu0
      %1553 = vmatprep.mubr.bf16.mxu0 0
      %1554 = vmatmul.mubr.bf16.gmra.mxu0 %v1439
      %v1555 = vpop.f32.mrf.mxu0
      %v1556 = vadd.f32 %v1463, %v1555
      %v1557 = vpop.f32.mrf.mxu0
      %v1558 = vpop.f32.mrf.mxu0
      %v1559 = vadd.f32 %v1463, %v1558
      %v1560 = vpop.f32.mrf.mxu0
      %1561 = vmatprep.mubr.bf16.mxu0 0
      %1562 = vmatmul.mubr.bf16.gmra.mxu0 %v1440
      %v1563 = vpop.f32.mrf.mxu0
      %v1564 = vadd.f32 %v1463, %v1563
      %v1565 = vpop.f32.mrf.mxu0
      %v1566 = vpop.f32.mrf.mxu0
      %v1567 = vadd.f32 %v1463, %v1566
      %v1568 = vpop.f32.mrf.mxu0
      %1569 = vmatprep.mubr.bf16.mxu0 0
      %1570 = vmatmul.mubr.bf16.gmra.mxu0 %v1441
      %v1571 = vpop.f32.mrf.mxu0
      %v1572 = vadd.f32 %v1463, %v1571
      %v1573 = vpop.f32.mrf.mxu0
      %v1574 = vpop.f32.mrf.mxu0
      %v1575 = vpop.f32.mrf.mxu0
      %1576 = vdwg.mxu0
      %vm1577 = vcmp.gt.f32.partialorder %v1548, 0.0
      %vm1578 = vcmp.gt.f32.partialorder %v1551, 0.0
      %vm1579 = vcmp.gt.f32.partialorder %v1556, 0.0
      %vm1580 = vcmp.gt.f32.partialorder %v1559, 0.0
      %vm1581 = vcmp.gt.f32.partialorder %v1564, 0.0
      %vm1582 = vcmp.gt.f32.partialorder %v1567, 0.0
      %vm1583 = vcmp.gt.f32.partialorder %v1572, 0.0
      %v1584 = vmin.f32 %v1548, 0.0
      %v1585 = vmin.f32 %v1551, 0.0
      %v1586 = vmin.f32 %v1556, 0.0
      %v1587 = vmin.f32 %v1559, 0.0
      %v1588 = vmin.f32 %v1564, 0.0
      %v1589 = vmin.f32 %v1567, 0.0
      %v1590 = vmin.f32 %v1572, 0.0
      %v1591 = vmul.f32 %v1584, 1.442695
      %v1592 = vpow.pop %v1591
      %v1593 = vmul.f32 %v1585, 1.442695
      %v1594 = vpow.pop %v1593
      %v1595 = vmul.f32 %v1586, 1.442695
      %v1596 = vpow.pop %v1595
      %v1597 = vmul.f32 %v1587, 1.442695
      %v1598 = vpow.pop %v1597
      %v1599 = vmul.f32 %v1588, 1.442695
      %v1600 = vpow.pop %v1599
      %v1601 = vmul.f32 %v1589, 1.442695
      %v1602 = vpow.pop %v1601
      %v1603 = vmul.f32 %v1590, 1.442695
      %v1604 = vpow.pop %v1603
      %v1605 = vsub.f32 %v1592, 1.0
      %v1606 = vsub.f32 %v1594, 1.0
      %v1607 = vsub.f32 %v1596, 1.0
      %v1608 = vsub.f32 %v1598, 1.0
      %v1609 = vsub.f32 %v1600, 1.0
      %v1610 = vsub.f32 %v1602, 1.0
      %v1611 = vsub.f32 %v1604, 1.0
      %v1612 = vsel %vm1577, %v1548, %v1605
      %v1613 = vsel %vm1578, %v1551, %v1606
      %v1614 = vsel %vm1579, %v1556, %v1607
      %v1615 = vsel %vm1580, %v1559, %v1608
      %v1616 = vsel %vm1581, %v1564, %v1609
      %v1617 = vsel %vm1582, %v1567, %v1610
      %v1618 = vsel %vm1583, %v1572, %v1611
      %v1619 = vpack.c.bf16 %v1613, %v1612
      %v1620 = vpack.c.bf16 %v1615, %v1614
      %v1621 = vpack.c.bf16 %v1617, %v1616
      %v1622 = vpack.c.bf16 %v1618, %v1618
      %vm1623 = vcmask 457728
      %v1625 = vsel %vm1623, %v737, 0
      %v1628 = vsel %vm1055, %v1622, 0
      %1630 = vmatprep.subr.bf16.mxu0 0
      %1631 = vmatpush1.bf16.msra.mxu0 0
      %1632 = vmatprep.subr.bf16.mxu0 0
      %1633 = vmatpush1.bf16.msra.mxu0 0
      %1634 = vmatprep.subr.bf16.mxu0 0
      %1635 = vmatpush1.bf16.msra.mxu0 0
      %1636 = vmatprep.subr.bf16.mxu0 0
      %1637 = vmatpush1.bf16.msra.mxu0 0
      %1638 = vmatprep.subr.bf16.mxu0 0
      %1639 = vmatpush1.bf16.msra.mxu0 %v1628
      %1640 = vmatprep.subr.bf16.mxu0 0
      %1641 = vmatpush1.bf16.msra.mxu0 %v1621
      %1642 = vmatprep.subr.bf16.mxu0 0
      %1643 = vmatpush1.bf16.msra.mxu0 %v1620
      %1644 = vmatprep.subr.bf16.mxu0 0
      %1645 = vmatpush1.bf16.msra.mxu0 %v1619
      %1646 = vmatprep.subr.bf16.mxu0 0
      %1647 = vmatpush2.bf16.msra.mxu0 0
      %1648 = vmatprep.subr.bf16.mxu0 0
      %1649 = vmatpush2.bf16.msra.mxu0 0
      %1650 = vmatprep.subr.bf16.mxu0 0
      %1651 = vmatpush2.bf16.msra.mxu0 0
      %1652 = vmatprep.subr.bf16.mxu0 0
      %1653 = vmatpush2.bf16.msra.mxu0 0
      %1654 = vmatprep.subr.bf16.mxu0 0
      %1655 = vmatpush2.bf16.msra.mxu0 0
      %1656 = vmatprep.subr.bf16.mxu0 0
      %1657 = vmatpush2.bf16.msra.mxu0 0
      %1658 = vmatprep.subr.bf16.mxu0 0
      %1659 = vmatpush2.bf16.msra.mxu0 0
      %1660 = vmatprep.subr.bf16.mxu0 0
      %1661 = vmatpush2.bf16.msra.mxu0 0
      %1662 = vmatprep.mubr.bf16.mxu0 0
      %1663 = vmatmul.mubr.bf16.gmra.mxu0 %v1625
      %v1664 = vpop.f32.mrf.mxu0
      %v1665 = vadd.f32 0.0, %v1664
      %v1666 = vpop.f32.mrf.mxu0
      %v1667 = vpop.f32.mrf.mxu0
      %v1668 = vpop.f32.mrf.mxu0
      %1669 = vdwg.mxu0
      %v1670 = vld [vmem:[%s15] sm:$0xf]
      %v1671 = vld [vmem:[%s15 + $0x4] sm:$0xf]
      %v1672 = vld [vmem:[%s15 + $0x8] sm:$0xf]
      %v1673 = vld [vmem:[%s15 + $0xc] sm:$0xf]
      %v1674 = vld [vmem:[%s15 + $0x10] sm:$0xf]
      %v1675 = vld [vmem:[%s15 + $0x14] sm:$0xf]
      %v1676 = vld [vmem:[%s15 + $0x18] sm:$0xf]
      %v1677 = vld [vmem:[%s15 + $0x1c] sm:$0xf]
      %v1678 = vld [vmem:[%s15 + $0x20] sm:$0xf]
      %v1679 = vld [vmem:[%s15 + $0x24] sm:$0xf]
      %v1680 = vld [vmem:[%s15 + $0x28] sm:$0xf]
      %v1681 = vld [vmem:[%s15 + $0x2c] sm:$0xf]
      %v1682 = vld [vmem:[%s15 + $0x30] sm:$0xf]
      %v1683 = vld [vmem:[%s15 + $0x34] sm:$0xf]
      %v1684 = vld [vmem:[%s15 + $0x38] sm:$0xf]
      %v1685 = vld [vmem:[%s15 + $0x3c] sm:$0xf]
      %v1686 = vpack.c.bf16 %v1665, %v1665
      %v1687 = vld [vmem:[%s16] sm:$0xf]
      %v1688 = vld [vmem:[%s16 + $0x4] sm:$0xf]
      %v1689 = vld [vmem:[%s16 + $0x8] sm:$0xf]
      %v1690 = vld [vmem:[%s16 + $0xc] sm:$0xf]
      %v1691 = vld [vmem:[%s16 + $0x10] sm:$0xf]
      %v1692 = vld [vmem:[%s16 + $0x14] sm:$0xf]
      %v1693 = vld [vmem:[%s16 + $0x18] sm:$0xf]
      %v1694 = vld [vmem:[%s16 + $0x1c] sm:$0xf]
      %v1695 = vld [vmem:[%s16 + $0x20] sm:$0xf]
      %v1696 = vld [vmem:[%s16 + $0x24] sm:$0xf]
      %v1697 = vld [vmem:[%s16 + $0x28] sm:$0xf]
      %v1698 = vld [vmem:[%s16 + $0x2c] sm:$0xf]
      %v1699 = vld [vmem:[%s16 + $0x30] sm:$0xf]
      %v1700 = vld [vmem:[%s16 + $0x34] sm:$0xf]
      %v1701 = vld [vmem:[%s16 + $0x38] sm:$0xf]
      %v1702 = vld [vmem:[%s16 + $0x3c] sm:$0xf]
      %v1719 = vunpack.c.l.b16 %v1687
      %v1720 = vunpack.c.l.b16 %v1688
      %v1721 = vunpack.c.l.b16 %v1689
      %v1722 = vunpack.c.l.b16 %v1690
      %v1723 = vunpack.c.l.b16 %v1691
      %v1724 = vunpack.c.l.b16 %v1692
      %v1725 = vunpack.c.l.b16 %v1693
      %v1726 = vunpack.c.l.b16 %v1694
      %v1727 = vunpack.c.l.b16 %v1695
      %v1728 = vunpack.c.l.b16 %v1696
      %v1729 = vunpack.c.l.b16 %v1697
      %v1730 = vunpack.c.l.b16 %v1698
      %v1731 = vunpack.c.l.b16 %v1699
      %v1732 = vunpack.c.l.b16 %v1700
      %v1733 = vunpack.c.l.b16 %v1701
      %v1734 = vunpack.c.l.b16 %v1702
      %v1735 = vpack.c.b16 %v1720, %v1719
      %v1736 = vpack.c.b16 %v1722, %v1721
      %v1737 = vpack.c.b16 %v1724, %v1723
      %v1738 = vpack.c.b16 %v1726, %v1725
      %v1739 = vpack.c.b16 %v1728, %v1727
      %v1740 = vpack.c.b16 %v1730, %v1729
      %v1741 = vpack.c.b16 %v1732, %v1731
      %v1742 = vpack.c.b16 %v1734, %v1733
      %1751 = vmatprep.subr.bf16.mxu0 0
      %1752 = vmatpush1.bf16.msra.mxu0 %v1742
      %1753 = vmatprep.subr.bf16.mxu0 0
      %1754 = vmatpush1.bf16.msra.mxu0 %v1741
      %1755 = vmatprep.subr.bf16.mxu0 0
      %1756 = vmatpush1.bf16.msra.mxu0 %v1740
      %1757 = vmatprep.subr.bf16.mxu0 0
      %1758 = vmatpush1.bf16.msra.mxu0 %v1739
      %1759 = vmatprep.subr.bf16.mxu0 0
      %1760 = vmatpush1.bf16.msra.mxu0 %v1738
      %1761 = vmatprep.subr.bf16.mxu0 0
      %1762 = vmatpush1.bf16.msra.mxu0 %v1737
      %1763 = vmatprep.subr.bf16.mxu0 0
      %1764 = vmatpush1.bf16.msra.mxu0 %v1736
      %1765 = vmatprep.subr.bf16.mxu0 0
      %1766 = vmatpush1.bf16.msra.mxu0 %v1735
      %1767 = vmatprep.subr.bf16.mxu0 0
      %1768 = vmatpush2.bf16.msra.mxu0 0
      %1769 = vmatprep.subr.bf16.mxu0 0
      %1770 = vmatpush2.bf16.msra.mxu0 0
      %1771 = vmatprep.subr.bf16.mxu0 0
      %1772 = vmatpush2.bf16.msra.mxu0 0
      %1773 = vmatprep.subr.bf16.mxu0 0
      %1774 = vmatpush2.bf16.msra.mxu0 0
      %1775 = vmatprep.subr.bf16.mxu0 0
      %1776 = vmatpush2.bf16.msra.mxu0 0
      %1777 = vmatprep.subr.bf16.mxu0 0
      %1778 = vmatpush2.bf16.msra.mxu0 0
      %1779 = vmatprep.subr.bf16.mxu0 0
      %1780 = vmatpush2.bf16.msra.mxu0 0
      %1781 = vmatprep.subr.bf16.mxu0 0
      %1782 = vmatpush2.bf16.msra.mxu0 0
      %1783 = vmatprep.mubr.bf16.mxu0 0
      %1784 = vmatmul.mubr.bf16.gmra.mxu0 %v1686
      %v1785 = vpop.f32.mrf.mxu0
      %v1786 = vadd.f32 0.0, %v1785
      %v1787 = vpop.f32.mrf.mxu0
      %v1788 = vpop.f32.mrf.mxu0
      %v1789 = vpop.f32.mrf.mxu0
      %1790 = vdwg.mxu0
      %v1807 = vunpack.c.l.b16 %v1670
      %v1808 = vunpack.c.l.b16 %v1671
      %v1809 = vunpack.c.l.b16 %v1672
      %v1810 = vunpack.c.l.b16 %v1673
      %v1811 = vunpack.c.l.b16 %v1674
      %v1812 = vunpack.c.l.b16 %v1675
      %v1813 = vunpack.c.l.b16 %v1676
      %v1814 = vunpack.c.l.b16 %v1677
      %v1815 = vunpack.c.l.b16 %v1678
      %v1816 = vunpack.c.l.b16 %v1679
      %v1817 = vunpack.c.l.b16 %v1680
      %v1818 = vunpack.c.l.b16 %v1681
      %v1819 = vunpack.c.l.b16 %v1682
      %v1820 = vunpack.c.l.b16 %v1683
      %v1821 = vunpack.c.l.b16 %v1684
      %v1822 = vunpack.c.l.b16 %v1685
      %v1823 = vpack.c.b16 %v1808, %v1807
      %v1824 = vpack.c.b16 %v1810, %v1809
      %v1825 = vpack.c.b16 %v1812, %v1811
      %v1826 = vpack.c.b16 %v1814, %v1813
      %v1827 = vpack.c.b16 %v1816, %v1815
      %v1828 = vpack.c.b16 %v1818, %v1817
      %v1829 = vpack.c.b16 %v1820, %v1819
      %v1830 = vpack.c.b16 %v1822, %v1821
      %1839 = vmatprep.subr.bf16.mxu0 0
      %1840 = vmatpush1.bf16.msra.mxu0 %v1830
      %1841 = vmatprep.subr.bf16.mxu0 0
      %1842 = vmatpush1.bf16.msra.mxu0 %v1829
      %1843 = vmatprep.subr.bf16.mxu0 0
      %1844 = vmatpush1.bf16.msra.mxu0 %v1828
      %1845 = vmatprep.subr.bf16.mxu0 0
      %1846 = vmatpush1.bf16.msra.mxu0 %v1827
      %1847 = vmatprep.subr.bf16.mxu0 0
      %1848 = vmatpush1.bf16.msra.mxu0 %v1826
      %1849 = vmatprep.subr.bf16.mxu0 0
      %1850 = vmatpush1.bf16.msra.mxu0 %v1825
      %1851 = vmatprep.subr.bf16.mxu0 0
      %1852 = vmatpush1.bf16.msra.mxu0 %v1824
      %1853 = vmatprep.subr.bf16.mxu0 0
      %1854 = vmatpush1.bf16.msra.mxu0 %v1823
      %1855 = vmatprep.subr.bf16.mxu0 0
      %1856 = vmatpush2.bf16.msra.mxu0 0
      %1857 = vmatprep.subr.bf16.mxu0 0
      %1858 = vmatpush2.bf16.msra.mxu0 0
      %1859 = vmatprep.subr.bf16.mxu0 0
      %1860 = vmatpush2.bf16.msra.mxu0 0
      %1861 = vmatprep.subr.bf16.mxu0 0
      %1862 = vmatpush2.bf16.msra.mxu0 0
      %1863 = vmatprep.subr.bf16.mxu0 0
      %1864 = vmatpush2.bf16.msra.mxu0 0
      %1865 = vmatprep.subr.bf16.mxu0 0
      %1866 = vmatpush2.bf16.msra.mxu0 0
      %1867 = vmatprep.subr.bf16.mxu0 0
      %1868 = vmatpush2.bf16.msra.mxu0 0
      %1869 = vmatprep.subr.bf16.mxu0 0
      %1870 = vmatpush2.bf16.msra.mxu0 0
      %1871 = vmatprep.mubr.bf16.mxu0 0
      %1872 = vmatmul.mubr.bf16.gmra.mxu0 %v813
      %v1873 = vpop.f32.mrf.mxu0
      %v1874 = vadd.f32 %v1786, %v1873
      %v1875 = vpop.f32.mrf.mxu0
      %v1876 = vpop.f32.mrf.mxu0
      %v1877 = vpop.f32.mrf.mxu0
      %1878 = vdwg.mxu0
      %v1879 = vld [vmem:[%s17] sm:$0x1]
      %v1881 = vlaneseq
      %v1882 = vshrl.u32 %v1881, 7
      %v1883 = vsub.s32 0, %v1882
      %v1884 = vrot.slane %v1879, %v1883
      %v1886 = vadd.f32 %v1874, %v1884
      %vm1887 = vcmp.gt.f32.partialorder %v1886, 0.0
      %v1888 = vmin.f32 %v1886, 0.0
      %v1889 = vmul.f32 %v1888, 1.442695
      %v1890 = vpow.pop %v1889
      %v1891 = vsub.f32 %v1890, 1.0
      %v1892 = vsel %vm1887, %v1886, %v1891
      %v1893 = vpack.c.bf16 %v1892, %v1892
      %v1894 = vld [vmem:[%s18] sm:$0xf]
      %v1895 = vld [vmem:[%s18 + $0x4] sm:$0xf]
      %v1896 = vld [vmem:[%s18 + $0x8] sm:$0xf]
      %v1897 = vld [vmem:[%s18 + $0xc] sm:$0xf]
      %v1898 = vld [vmem:[%s18 + $0x10] sm:$0xf]
      %v1899 = vld [vmem:[%s18 + $0x14] sm:$0xf]
      %v1900 = vld [vmem:[%s18 + $0x18] sm:$0xf]
      %v1901 = vld [vmem:[%s18 + $0x1c] sm:$0xf]
      %v1902 = vld [vmem:[%s18 + $0x20] sm:$0xf]
      %v1903 = vld [vmem:[%s18 + $0x24] sm:$0xf]
      %v1904 = vld [vmem:[%s18 + $0x28] sm:$0xf]
      %v1905 = vld [vmem:[%s18 + $0x2c] sm:$0xf]
      %v1906 = vld [vmem:[%s18 + $0x30] sm:$0xf]
      %v1907 = vld [vmem:[%s18 + $0x34] sm:$0xf]
      %v1908 = vld [vmem:[%s18 + $0x38] sm:$0xf]
      %v1909 = vld [vmem:[%s18 + $0x3c] sm:$0xf]
      %v1910 = vld [vmem:[%s19] sm:$0x1]
      %v1912 = vlaneseq
      %v1913 = vshrl.u32 %v1912, 7
      %v1914 = vsub.s32 0, %v1913
      %v1915 = vrot.slane %v1910, %v1914
      %v1933 = vunpack.c.l.b16 %v1894
      %v1934 = vunpack.c.l.b16 %v1895
      %v1935 = vunpack.c.l.b16 %v1896
      %v1936 = vunpack.c.l.b16 %v1897
      %v1937 = vunpack.c.l.b16 %v1898
      %v1938 = vunpack.c.l.b16 %v1899
      %v1939 = vunpack.c.l.b16 %v1900
      %v1940 = vunpack.c.l.b16 %v1901
      %v1941 = vunpack.c.l.b16 %v1902
      %v1942 = vunpack.c.l.b16 %v1903
      %v1943 = vunpack.c.l.b16 %v1904
      %v1944 = vunpack.c.l.b16 %v1905
      %v1945 = vunpack.c.l.b16 %v1906
      %v1946 = vunpack.c.l.b16 %v1907
      %v1947 = vunpack.c.l.b16 %v1908
      %v1948 = vunpack.c.l.b16 %v1909
      %v1949 = vpack.c.b16 %v1934, %v1933
      %v1950 = vpack.c.b16 %v1936, %v1935
      %v1951 = vpack.c.b16 %v1938, %v1937
      %v1952 = vpack.c.b16 %v1940, %v1939
      %v1953 = vpack.c.b16 %v1942, %v1941
      %v1954 = vpack.c.b16 %v1944, %v1943
      %v1955 = vpack.c.b16 %v1946, %v1945
      %v1956 = vpack.c.b16 %v1948, %v1947
      %1965 = vmatprep.subr.bf16.mxu0 0
      %1966 = vmatpush1.bf16.msra.mxu0 %v1956
      %1967 = vmatprep.subr.bf16.mxu0 0
      %1968 = vmatpush1.bf16.msra.mxu0 %v1955
      %1969 = vmatprep.subr.bf16.mxu0 0
      %1970 = vmatpush1.bf16.msra.mxu0 %v1954
      %1971 = vmatprep.subr.bf16.mxu0 0
      %1972 = vmatpush1.bf16.msra.mxu0 %v1953
      %1973 = vmatprep.subr.bf16.mxu0 0
      %1974 = vmatpush1.bf16.msra.mxu0 %v1952
      %1975 = vmatprep.subr.bf16.mxu0 0
      %1976 = vmatpush1.bf16.msra.mxu0 %v1951
      %1977 = vmatprep.subr.bf16.mxu0 0
      %1978 = vmatpush1.bf16.msra.mxu0 %v1950
      %1979 = vmatprep.subr.bf16.mxu0 0
      %1980 = vmatpush1.bf16.msra.mxu0 %v1949
      %1981 = vmatprep.subr.bf16.mxu0 0
      %1982 = vmatpush2.bf16.msra.mxu0 0
      %1983 = vmatprep.subr.bf16.mxu0 0
      %1984 = vmatpush2.bf16.msra.mxu0 0
      %1985 = vmatprep.subr.bf16.mxu0 0
      %1986 = vmatpush2.bf16.msra.mxu0 0
      %1987 = vmatprep.subr.bf16.mxu0 0
      %1988 = vmatpush2.bf16.msra.mxu0 0
      %1989 = vmatprep.subr.bf16.mxu0 0
      %1990 = vmatpush2.bf16.msra.mxu0 0
      %1991 = vmatprep.subr.bf16.mxu0 0
      %1992 = vmatpush2.bf16.msra.mxu0 0
      %1993 = vmatprep.subr.bf16.mxu0 0
      %1994 = vmatpush2.bf16.msra.mxu0 0
      %1995 = vmatprep.subr.bf16.mxu0 0
      %1996 = vmatpush2.bf16.msra.mxu0 0
      %1997 = vmatprep.mubr.bf16.mxu0 0
      %1998 = vmatmul.mubr.bf16.gmra.mxu0 %v1893
      %v1999 = vpop.f32.mrf.mxu0
      %v2000 = vadd.f32 %v1915, %v1999
      %v2001 = vpop.f32.mrf.mxu0
      %v2002 = vpop.f32.mrf.mxu0
      %v2003 = vpop.f32.mrf.mxu0
      %2004 = vdwg.mxu0
      %v2005 = vpack.c.bf16 %v2000, %v2000
      %s2006 = scalar_lea.vmem %s8, 64
      %v2007 = vld [vmem:[%s2006] sm:$0xf]
      %v2008 = vld [vmem:[%s2006 + $0x4] sm:$0xf]
      %v2009 = vld [vmem:[%s2006 + $0x8] sm:$0xf]
      %v2010 = vld [vmem:[%s2006 + $0xc] sm:$0xf]
      %v2011 = vld [vmem:[%s2006 + $0x10] sm:$0xf]
      %v2012 = vld [vmem:[%s2006 + $0x14] sm:$0xf]
      %v2013 = vld [vmem:[%s2006 + $0x18] sm:$0xf]
      %v2014 = vld [vmem:[%s2006 + $0x1c] sm:$0xf]
      %v2015 = vld [vmem:[%s2006 + $0x20] sm:$0xf]
      %v2016 = vld [vmem:[%s2006 + $0x24] sm:$0xf]
      %v2017 = vld [vmem:[%s2006 + $0x28] sm:$0xf]
      %v2018 = vld [vmem:[%s2006 + $0x2c] sm:$0xf]
      %v2019 = vld [vmem:[%s2006 + $0x30] sm:$0xf]
      %v2020 = vld [vmem:[%s2006 + $0x34] sm:$0xf]
      %v2021 = vld [vmem:[%s2006 + $0x38] sm:$0xf]
      %v2022 = vld [vmem:[%s2006 + $0x3c] sm:$0xf]
      %v2039 = vunpack.c.l.b16 %v2007
      %v2040 = vunpack.c.l.b16 %v2008
      %v2041 = vunpack.c.l.b16 %v2009
      %v2042 = vunpack.c.l.b16 %v2010
      %v2043 = vunpack.c.l.b16 %v2011
      %v2044 = vunpack.c.l.b16 %v2012
      %v2045 = vunpack.c.l.b16 %v2013
      %v2046 = vunpack.c.l.b16 %v2014
      %v2047 = vunpack.c.l.b16 %v2015
      %v2048 = vunpack.c.l.b16 %v2016
      %v2049 = vunpack.c.l.b16 %v2017
      %v2050 = vunpack.c.l.b16 %v2018
      %v2051 = vunpack.c.l.b16 %v2019
      %v2052 = vunpack.c.l.b16 %v2020
      %v2053 = vunpack.c.l.b16 %v2021
      %v2054 = vunpack.c.l.b16 %v2022
      %v2055 = vpack.c.b16 %v2040, %v2039
      %v2056 = vpack.c.b16 %v2042, %v2041
      %v2057 = vpack.c.b16 %v2044, %v2043
      %v2058 = vpack.c.b16 %v2046, %v2045
      %v2059 = vpack.c.b16 %v2048, %v2047
      %v2060 = vpack.c.b16 %v2050, %v2049
      %v2061 = vpack.c.b16 %v2052, %v2051
      %v2062 = vpack.c.b16 %v2054, %v2053
      %2071 = vmatprep.subr.bf16.mxu0 0
      %2072 = vmatpush1.bf16.msra.mxu0 %v2062
      %2073 = vmatprep.subr.bf16.mxu0 0
      %2074 = vmatpush1.bf16.msra.mxu0 %v2061
      %2075 = vmatprep.subr.bf16.mxu0 0
      %2076 = vmatpush1.bf16.msra.mxu0 %v2060
      %2077 = vmatprep.subr.bf16.mxu0 0
      %2078 = vmatpush1.bf16.msra.mxu0 %v2059
      %2079 = vmatprep.subr.bf16.mxu0 0
      %2080 = vmatpush1.bf16.msra.mxu0 %v2058
      %2081 = vmatprep.subr.bf16.mxu0 0
      %2082 = vmatpush1.bf16.msra.mxu0 %v2057
      %2083 = vmatprep.subr.bf16.mxu0 0
      %2084 = vmatpush1.bf16.msra.mxu0 %v2056
      %2085 = vmatprep.subr.bf16.mxu0 0
      %2086 = vmatpush1.bf16.msra.mxu0 %v2055
      %2087 = vmatprep.subr.bf16.mxu0 0
      %2088 = vmatpush2.bf16.msra.mxu0 0
      %2089 = vmatprep.subr.bf16.mxu0 0
      %2090 = vmatpush2.bf16.msra.mxu0 0
      %2091 = vmatprep.subr.bf16.mxu0 0
      %2092 = vmatpush2.bf16.msra.mxu0 0
      %2093 = vmatprep.subr.bf16.mxu0 0
      %2094 = vmatpush2.bf16.msra.mxu0 0
      %2095 = vmatprep.subr.bf16.mxu0 0
      %2096 = vmatpush2.bf16.msra.mxu0 0
      %2097 = vmatprep.subr.bf16.mxu0 0
      %2098 = vmatpush2.bf16.msra.mxu0 0
      %2099 = vmatprep.subr.bf16.mxu0 0
      %2100 = vmatpush2.bf16.msra.mxu0 0
      %2101 = vmatprep.subr.bf16.mxu0 0
      %2102 = vmatpush2.bf16.msra.mxu0 0
      %2103 = vmatprep.mubr.bf16.mxu0 0
      %2104 = vmatmul.mubr.bf16.gmra.mxu0 %v2005
      %v2105 = vpop.f32.mrf.mxu0
      %v2106 = vadd.f32 0.0, %v2105
      %v2107 = vpop.f32.mrf.mxu0
      %v2108 = vpop.f32.mrf.mxu0
      %v2109 = vpop.f32.mrf.mxu0
      %2110 = vdwg.mxu0
      %v2111 = vpack.c.bf16 %v2106, %v2106
      %s2112 = scalar_lea.vmem %s9, 64
      %v2113 = vld [vmem:[%s2112] sm:$0xf]
      %v2114 = vld [vmem:[%s2112 + $0x4] sm:$0xf]
      %v2115 = vld [vmem:[%s2112 + $0x8] sm:$0xf]
      %v2116 = vld [vmem:[%s2112 + $0xc] sm:$0xf]
      %v2117 = vld [vmem:[%s2112 + $0x10] sm:$0xf]
      %v2118 = vld [vmem:[%s2112 + $0x14] sm:$0xf]
      %v2119 = vld [vmem:[%s2112 + $0x18] sm:$0xf]
      %v2120 = vld [vmem:[%s2112 + $0x1c] sm:$0xf]
      %v2121 = vld [vmem:[%s2112 + $0x20] sm:$0xf]
      %v2122 = vld [vmem:[%s2112 + $0x24] sm:$0xf]
      %v2123 = vld [vmem:[%s2112 + $0x28] sm:$0xf]
      %v2124 = vld [vmem:[%s2112 + $0x2c] sm:$0xf]
      %v2125 = vld [vmem:[%s2112 + $0x30] sm:$0xf]
      %v2126 = vld [vmem:[%s2112 + $0x34] sm:$0xf]
      %v2127 = vld [vmem:[%s2112 + $0x38] sm:$0xf]
      %v2128 = vld [vmem:[%s2112 + $0x3c] sm:$0xf]
      %v2145 = vunpack.c.l.b16 %v2113
      %v2146 = vunpack.c.l.b16 %v2114
      %v2147 = vunpack.c.l.b16 %v2115
      %v2148 = vunpack.c.l.b16 %v2116
      %v2149 = vunpack.c.l.b16 %v2117
      %v2150 = vunpack.c.l.b16 %v2118
      %v2151 = vunpack.c.l.b16 %v2119
      %v2152 = vunpack.c.l.b16 %v2120
      %v2153 = vunpack.c.l.b16 %v2121
      %v2154 = vunpack.c.l.b16 %v2122
      %v2155 = vunpack.c.l.b16 %v2123
      %v2156 = vunpack.c.l.b16 %v2124
      %v2157 = vunpack.c.l.b16 %v2125
      %v2158 = vunpack.c.l.b16 %v2126
      %v2159 = vunpack.c.l.b16 %v2127
      %v2160 = vunpack.c.l.b16 %v2128
      %v2161 = vpack.c.b16 %v2146, %v2145
      %v2162 = vpack.c.b16 %v2148, %v2147
      %v2163 = vpack.c.b16 %v2150, %v2149
      %v2164 = vpack.c.b16 %v2152, %v2151
      %v2165 = vpack.c.b16 %v2154, %v2153
      %v2166 = vpack.c.b16 %v2156, %v2155
      %v2167 = vpack.c.b16 %v2158, %v2157
      %v2168 = vpack.c.b16 %v2160, %v2159
      %2177 = vmatprep.subr.bf16.mxu0 0
      %2178 = vmatpush1.bf16.msra.mxu0 %v2168
      %2179 = vmatprep.subr.bf16.mxu0 0
      %2180 = vmatpush1.bf16.msra.mxu0 %v2167
      %2181 = vmatprep.subr.bf16.mxu0 0
      %2182 = vmatpush1.bf16.msra.mxu0 %v2166
      %2183 = vmatprep.subr.bf16.mxu0 0
      %2184 = vmatpush1.bf16.msra.mxu0 %v2165
      %2185 = vmatprep.subr.bf16.mxu0 0
      %2186 = vmatpush1.bf16.msra.mxu0 %v2164
      %2187 = vmatprep.subr.bf16.mxu0 0
      %2188 = vmatpush1.bf16.msra.mxu0 %v2163
      %2189 = vmatprep.subr.bf16.mxu0 0
      %2190 = vmatpush1.bf16.msra.mxu0 %v2162
      %2191 = vmatprep.subr.bf16.mxu0 0
      %2192 = vmatpush1.bf16.msra.mxu0 %v2161
      %2193 = vmatprep.subr.bf16.mxu0 0
      %2194 = vmatpush2.bf16.msra.mxu0 0
      %2195 = vmatprep.subr.bf16.mxu0 0
      %2196 = vmatpush2.bf16.msra.mxu0 0
      %2197 = vmatprep.subr.bf16.mxu0 0
      %2198 = vmatpush2.bf16.msra.mxu0 0
      %2199 = vmatprep.subr.bf16.mxu0 0
      %2200 = vmatpush2.bf16.msra.mxu0 0
      %2201 = vmatprep.subr.bf16.mxu0 0
      %2202 = vmatpush2.bf16.msra.mxu0 0
      %2203 = vmatprep.subr.bf16.mxu0 0
      %2204 = vmatpush2.bf16.msra.mxu0 0
      %2205 = vmatprep.subr.bf16.mxu0 0
      %2206 = vmatpush2.bf16.msra.mxu0 0
      %2207 = vmatprep.subr.bf16.mxu0 0
      %2208 = vmatpush2.bf16.msra.mxu0 0
      %2209 = vmatprep.mubr.bf16.mxu0 0
      %2210 = vmatmul.mubr.bf16.gmra.mxu0 %v2005
      %v2211 = vpop.f32.mrf.mxu0
      %v2212 = vadd.f32 0.0, %v2211
      %v2213 = vpop.f32.mrf.mxu0
      %v2214 = vpop.f32.mrf.mxu0
      %v2215 = vpop.f32.mrf.mxu0
      %2216 = vdwg.mxu0
      %v2217 = vpack.c.bf16 %v2212, %v2212
      %v2219 = vsel %vm1055, %v2217, 0
      %2221 = vmatprep.subr.bf16.mxu0 0
      %2222 = vmatpush1.bf16.msra.mxu0 0
      %2223 = vmatprep.subr.bf16.mxu0 0
      %2224 = vmatpush1.bf16.msra.mxu0 0
      %2225 = vmatprep.subr.bf16.mxu0 0
      %2226 = vmatpush1.bf16.msra.mxu0 0
      %2227 = vmatprep.subr.bf16.mxu0 0
      %2228 = vmatpush1.bf16.msra.mxu0 0
      %2229 = vmatprep.subr.bf16.mxu0 0
      %2230 = vmatpush1.bf16.msra.mxu0 0
      %2231 = vmatprep.subr.bf16.mxu0 0
      %2232 = vmatpush1.bf16.msra.mxu0 0
      %2233 = vmatprep.subr.bf16.mxu0 0
      %2234 = vmatpush1.bf16.msra.mxu0 0
      %2235 = vmatprep.subr.bf16.mxu0 0
      %2236 = vmatpush1.bf16.msra.mxu0 %v2219
      %2237 = vmatprep.subr.bf16.mxu0 0
      %2238 = vmatpush2.bf16.msra.mxu0 0
      %2239 = vmatprep.subr.bf16.mxu0 0
      %2240 = vmatpush2.bf16.msra.mxu0 0
      %2241 = vmatprep.subr.bf16.mxu0 0
      %2242 = vmatpush2.bf16.msra.mxu0 0
      %2243 = vmatprep.subr.bf16.mxu0 0
      %2244 = vmatpush2.bf16.msra.mxu0 0
      %2245 = vmatprep.subr.bf16.mxu0 0
      %2246 = vmatpush2.bf16.msra.mxu0 0
      %2247 = vmatprep.subr.bf16.mxu0 0
      %2248 = vmatpush2.bf16.msra.mxu0 0
      %2249 = vmatprep.subr.bf16.mxu0 0
      %2250 = vmatpush2.bf16.msra.mxu0 0
      %2251 = vmatprep.subr.bf16.mxu0 0
      %2252 = vmatpush2.bf16.msra.mxu0 0
      %2253 = vmatprep.mubr.bf16.mxu0 0
      %2254 = vmatmul.mubr.bf16.gmra.mxu0 %v1044
      %v2255 = vpop.f32.mrf.mxu0
      %v2256 = vadd.f32 0.0, %v2255
      %v2257 = vpop.f32.mrf.mxu0
      %v2258 = vpop.f32.mrf.mxu0
      %v2259 = vadd.f32 0.0, %v2258
      %v2260 = vpop.f32.mrf.mxu0
      %2261 = vmatprep.mubr.bf16.mxu0 0
      %2262 = vmatmul.mubr.bf16.gmra.mxu0 %v1047
      %v2263 = vpop.f32.mrf.mxu0
      %v2264 = vadd.f32 0.0, %v2263
      %v2265 = vpop.f32.mrf.mxu0
      %v2266 = vpop.f32.mrf.mxu0
      %v2267 = vadd.f32 0.0, %v2266
      %v2268 = vpop.f32.mrf.mxu0
      %2269 = vmatprep.mubr.bf16.mxu0 0
      %2270 = vmatmul.mubr.bf16.gmra.mxu0 %v1050
      %v2271 = vpop.f32.mrf.mxu0
      %v2272 = vadd.f32 0.0, %v2271
      %v2273 = vpop.f32.mrf.mxu0
      %v2274 = vpop.f32.mrf.mxu0
      %v2275 = vadd.f32 0.0, %v2274
      %v2276 = vpop.f32.mrf.mxu0
      %2277 = vmatprep.mubr.bf16.mxu0 0
      %2278 = vmatmul.mubr.bf16.gmra.mxu0 %v1053
      %v2279 = vpop.f32.mrf.mxu0
      %v2280 = vadd.f32 0.0, %v2279
      %v2281 = vpop.f32.mrf.mxu0
      %v2282 = vpop.f32.mrf.mxu0
      %v2283 = vpop.f32.mrf.mxu0
      %2284 = vdwg.mxu0
      %v2286 = vsel %vm1055, %v2111, 0
      %2288 = vmatprep.subr.bf16.mxu0 0
      %2289 = vmatpush1.bf16.msra.mxu0 0
      %2290 = vmatprep.subr.bf16.mxu0 0
      %2291 = vmatpush1.bf16.msra.mxu0 0
      %2292 = vmatprep.subr.bf16.mxu0 0
      %2293 = vmatpush1.bf16.msra.mxu0 0
      %2294 = vmatprep.subr.bf16.mxu0 0
      %2295 = vmatpush1.bf16.msra.mxu0 0
      %2296 = vmatprep.subr.bf16.mxu0 0
      %2297 = vmatpush1.bf16.msra.mxu0 0
      %2298 = vmatprep.subr.bf16.mxu0 0
      %2299 = vmatpush1.bf16.msra.mxu0 0
      %2300 = vmatprep.subr.bf16.mxu0 0
      %2301 = vmatpush1.bf16.msra.mxu0 0
      %2302 = vmatprep.subr.bf16.mxu0 0
      %2303 = vmatpush1.bf16.msra.mxu0 %v2286
      %2304 = vmatprep.subr.bf16.mxu0 0
      %2305 = vmatpush2.bf16.msra.mxu0 0
      %2306 = vmatprep.subr.bf16.mxu0 0
      %2307 = vmatpush2.bf16.msra.mxu0 0
      %2308 = vmatprep.subr.bf16.mxu0 0
      %2309 = vmatpush2.bf16.msra.mxu0 0
      %2310 = vmatprep.subr.bf16.mxu0 0
      %2311 = vmatpush2.bf16.msra.mxu0 0
      %2312 = vmatprep.subr.bf16.mxu0 0
      %2313 = vmatpush2.bf16.msra.mxu0 0
      %2314 = vmatprep.subr.bf16.mxu0 0
      %2315 = vmatpush2.bf16.msra.mxu0 0
      %2316 = vmatprep.subr.bf16.mxu0 0
      %2317 = vmatpush2.bf16.msra.mxu0 0
      %2318 = vmatprep.subr.bf16.mxu0 0
      %2319 = vmatpush2.bf16.msra.mxu0 0
      %2320 = vmatprep.mubr.bf16.mxu0 0
      %2321 = vmatmul.mubr.bf16.gmra.mxu0 %v1142
      %v2322 = vpop.f32.mrf.mxu0
      %v2323 = vadd.f32 %v2256, %v2322
      %v2324 = vpop.f32.mrf.mxu0
      %v2325 = vpop.f32.mrf.mxu0
      %v2326 = vadd.f32 %v2259, %v2325
      %v2327 = vpop.f32.mrf.mxu0
      %2328 = vmatprep.mubr.bf16.mxu0 0
      %2329 = vmatmul.mubr.bf16.gmra.mxu0 %v1145
      %v2330 = vpop.f32.mrf.mxu0
      %v2331 = vadd.f32 %v2264, %v2330
      %v2332 = vpop.f32.mrf.mxu0
      %v2333 = vpop.f32.mrf.mxu0
      %v2334 = vadd.f32 %v2267, %v2333
      %v2335 = vpop.f32.mrf.mxu0
      %2336 = vmatprep.mubr.bf16.mxu0 0
      %2337 = vmatmul.mubr.bf16.gmra.mxu0 %v1148
      %v2338 = vpop.f32.mrf.mxu0
      %v2339 = vadd.f32 %v2272, %v2338
      %v2340 = vpop.f32.mrf.mxu0
      %v2341 = vpop.f32.mrf.mxu0
      %v2342 = vadd.f32 %v2275, %v2341
      %v2343 = vpop.f32.mrf.mxu0
      %2344 = vmatprep.mubr.bf16.mxu0 0
      %2345 = vmatmul.mubr.bf16.gmra.mxu0 %v1151
      %v2346 = vpop.f32.mrf.mxu0
      %v2347 = vadd.f32 %v2280, %v2346
      %v2348 = vpop.f32.mrf.mxu0
      %v2349 = vpop.f32.mrf.mxu0
      %v2350 = vpop.f32.mrf.mxu0
      %2351 = vdwg.mxu0
      %s2352 = scalar_lea.vmem %s10, 2
      %v2353 = vld [vmem:[%s2352] sm:$0x3]
      %v2355 = vsel %vm766, %v2353, 0
      %2357 = vmatprep.subr.bf16.mxu0 0
      %2358 = vmatpush1.bf16.msra.mxu0 0
      %2359 = vmatprep.subr.bf16.mxu0 0
      %2360 = vmatpush1.bf16.msra.mxu0 0
      %2361 = vmatprep.subr.bf16.mxu0 0
      %2362 = vmatpush1.bf16.msra.mxu0 0
      %2363 = vmatprep.subr.bf16.mxu0 0
      %2364 = vmatpush1.bf16.msra.mxu0 0
      %2365 = vmatprep.subr.bf16.mxu0 0
      %2366 = vmatpush1.bf16.msra.mxu0 0
      %2367 = vmatprep.subr.bf16.mxu0 0
      %2368 = vmatpush1.bf16.msra.mxu0 0
      %2369 = vmatprep.subr.bf16.mxu0 0
      %2370 = vmatpush1.bf16.msra.mxu0 0
      %2371 = vmatprep.subr.bf16.mxu0 0
      %2372 = vmatpush1.bf16.msra.mxu0 %v2355
      %2373 = vmatprep.subr.bf16.mxu0 0
      %2374 = vmatpush2.bf16.msra.mxu0 0
      %2375 = vmatprep.subr.bf16.mxu0 0
      %2376 = vmatpush2.bf16.msra.mxu0 0
      %2377 = vmatprep.subr.bf16.mxu0 0
      %2378 = vmatpush2.bf16.msra.mxu0 0
      %2379 = vmatprep.subr.bf16.mxu0 0
      %2380 = vmatpush2.bf16.msra.mxu0 0
      %2381 = vmatprep.subr.bf16.mxu0 0
      %2382 = vmatpush2.bf16.msra.mxu0 0
      %2383 = vmatprep.subr.bf16.mxu0 0
      %2384 = vmatpush2.bf16.msra.mxu0 0
      %2385 = vmatprep.subr.bf16.mxu0 0
      %2386 = vmatpush2.bf16.msra.mxu0 0
      %2387 = vmatprep.subr.bf16.mxu0 0
      %2388 = vmatpush2.bf16.msra.mxu0 0
      %2389 = vmatprep.mubr.bf16.mxu0 0
      %2390 = vmatmul.mubr.bf16.gmra.mxu0 %v1241
      %v2391 = vpop.f32.mrf.mxu0
      %v2392 = vadd.f32 0.0, %v2391
      %v2393 = vpop.f32.mrf.mxu0
      %v2394 = vpop.f32.mrf.mxu0
      %v2395 = vadd.f32 0.0, %v2394
      %v2396 = vpop.f32.mrf.mxu0
      %2397 = vmatprep.mubr.bf16.mxu0 0
      %2398 = vmatmul.mubr.bf16.gmra.mxu0 %v1244
      %v2399 = vpop.f32.mrf.mxu0
      %v2400 = vadd.f32 0.0, %v2399
      %v2401 = vpop.f32.mrf.mxu0
      %v2402 = vpop.f32.mrf.mxu0
      %v2403 = vadd.f32 0.0, %v2402
      %v2404 = vpop.f32.mrf.mxu0
      %2405 = vmatprep.mubr.bf16.mxu0 0
      %2406 = vmatmul.mubr.bf16.gmra.mxu0 %v1247
      %v2407 = vpop.f32.mrf.mxu0
      %v2408 = vadd.f32 0.0, %v2407
      %v2409 = vpop.f32.mrf.mxu0
      %v2410 = vpop.f32.mrf.mxu0
      %v2411 = vadd.f32 0.0, %v2410
      %v2412 = vpop.f32.mrf.mxu0
      %2413 = vmatprep.mubr.bf16.mxu0 0
      %2414 = vmatmul.mubr.bf16.gmra.mxu0 %v1250
      %v2415 = vpop.f32.mrf.mxu0
      %v2416 = vadd.f32 0.0, %v2415
      %v2417 = vpop.f32.mrf.mxu0
      %v2418 = vpop.f32.mrf.mxu0
      %v2419 = vpop.f32.mrf.mxu0
      %2420 = vdwg.mxu0
      %v2421 = vadd.f32 %v2323, %v2392
      %v2422 = vadd.f32 %v2326, %v2395
      %v2423 = vadd.f32 %v2331, %v2400
      %v2424 = vadd.f32 %v2334, %v2403
      %v2425 = vadd.f32 %v2339, %v2408
      %v2426 = vadd.f32 %v2342, %v2411
      %v2427 = vadd.f32 %v2347, %v2416
      %s2428 = scalar_lea.vmem %s11, 1
      %v2429 = vld [vmem:[%s2428] sm:$0x1]
      %v2431 = vlaneseq
      %v2432 = vshrl.u32 %v2431, 7
      %v2433 = vsub.s32 0, %v2432
      %v2434 = vrot.slane %v2429, %v2433
      %v2436 = vmul.f32 %v1330, %v2434
      %v2437 = vmul.f32 %v1335, %v2434
      %v2438 = vmul.f32 %v1340, %v2434
      %v2439 = vmul.f32 %v1345, %v2434
      %v2440 = vmul.f32 %v1350, %v2434
      %v2441 = vmul.f32 %v1355, %v2434
      %v2442 = vmul.f32 %v1360, %v2434
      %v2443 = vadd.f32 %v2421, %v2436
      %v2444 = vadd.f32 %v2422, %v2437
      %v2445 = vadd.f32 %v2423, %v2438
      %v2446 = vadd.f32 %v2424, %v2439
      %v2447 = vadd.f32 %v2425, %v2440
      %v2448 = vadd.f32 %v2426, %v2441
      %v2449 = vadd.f32 %v2427, %v2442
      %s2450 = scalar_lea.vmem %s12, 1
      %v2451 = vld [vmem:[%s2450] sm:$0x1]
      %v2453 = vlaneseq
      %v2454 = vshrl.u32 %v2453, 7
      %v2455 = vsub.s32 0, %v2454
      %v2456 = vrot.slane %v2451, %v2455
      %v2458 = vadd.f32 %v2443, %v2456
      %v2459 = vadd.f32 %v2444, %v2456
      %v2460 = vadd.f32 %v2445, %v2456
      %v2461 = vadd.f32 %v2446, %v2456
      %v2462 = vadd.f32 %v2447, %v2456
      %v2463 = vadd.f32 %v2448, %v2456
      %v2464 = vadd.f32 %v2449, %v2456
      %vm2465 = vcmp.gt.f32.partialorder %v2458, 0.0
      %vm2466 = vcmp.gt.f32.partialorder %v2459, 0.0
      %vm2467 = vcmp.gt.f32.partialorder %v2460, 0.0
      %vm2468 = vcmp.gt.f32.partialorder %v2461, 0.0
      %vm2469 = vcmp.gt.f32.partialorder %v2462, 0.0
      %vm2470 = vcmp.gt.f32.partialorder %v2463, 0.0
      %vm2471 = vcmp.gt.f32.partialorder %v2464, 0.0
      %v2472 = vmin.f32 %v2458, 0.0
      %v2473 = vmin.f32 %v2459, 0.0
      %v2474 = vmin.f32 %v2460, 0.0
      %v2475 = vmin.f32 %v2461, 0.0
      %v2476 = vmin.f32 %v2462, 0.0
      %v2477 = vmin.f32 %v2463, 0.0
      %v2478 = vmin.f32 %v2464, 0.0
      %v2479 = vmul.f32 %v2472, 1.442695
      %v2480 = vpow.pop %v2479
      %v2481 = vmul.f32 %v2473, 1.442695
      %v2482 = vpow.pop %v2481
      %v2483 = vmul.f32 %v2474, 1.442695
      %v2484 = vpow.pop %v2483
      %v2485 = vmul.f32 %v2475, 1.442695
      %v2486 = vpow.pop %v2485
      %v2487 = vmul.f32 %v2476, 1.442695
      %v2488 = vpow.pop %v2487
      %v2489 = vmul.f32 %v2477, 1.442695
      %v2490 = vpow.pop %v2489
      %v2491 = vmul.f32 %v2478, 1.442695
      %v2492 = vpow.pop %v2491
      %v2493 = vsub.f32 %v2480, 1.0
      %v2494 = vsub.f32 %v2482, 1.0
      %v2495 = vsub.f32 %v2484, 1.0
      %v2496 = vsub.f32 %v2486, 1.0
      %v2497 = vsub.f32 %v2488, 1.0
      %v2498 = vsub.f32 %v2490, 1.0
      %v2499 = vsub.f32 %v2492, 1.0
      %v2500 = vsel %vm2465, %v2458, %v2493
      %v2501 = vsel %vm2466, %v2459, %v2494
      %v2502 = vsel %vm2467, %v2460, %v2495
      %v2503 = vsel %vm2468, %v2461, %v2496
      %v2504 = vsel %vm2469, %v2462, %v2497
      %v2505 = vsel %vm2470, %v2463, %v2498
      %v2506 = vsel %vm2471, %v2464, %v2499
      %v2507 = vpack.c.bf16 %v2501, %v2500
      %v2508 = vpack.c.bf16 %v2503, %v2502
      %v2509 = vpack.c.bf16 %v2505, %v2504
      %v2510 = vpack.c.bf16 %v2506, %v2506
      %s2511 = scalar_lea.vmem %s13, 64
      %v2512 = vld [vmem:[%s2511] sm:$0xf]
      %v2513 = vld [vmem:[%s2511 + $0x4] sm:$0xf]
      %v2514 = vld [vmem:[%s2511 + $0x8] sm:$0xf]
      %v2515 = vld [vmem:[%s2511 + $0xc] sm:$0xf]
      %v2516 = vld [vmem:[%s2511 + $0x10] sm:$0xf]
      %v2517 = vld [vmem:[%s2511 + $0x14] sm:$0xf]
      %v2518 = vld [vmem:[%s2511 + $0x18] sm:$0xf]
      %v2519 = vld [vmem:[%s2511 + $0x1c] sm:$0xf]
      %v2520 = vld [vmem:[%s2511 + $0x20] sm:$0xf]
      %v2521 = vld [vmem:[%s2511 + $0x24] sm:$0xf]
      %v2522 = vld [vmem:[%s2511 + $0x28] sm:$0xf]
      %v2523 = vld [vmem:[%s2511 + $0x2c] sm:$0xf]
      %v2524 = vld [vmem:[%s2511 + $0x30] sm:$0xf]
      %v2525 = vld [vmem:[%s2511 + $0x34] sm:$0xf]
      %v2526 = vld [vmem:[%s2511 + $0x38] sm:$0xf]
      %v2527 = vld [vmem:[%s2511 + $0x3c] sm:$0xf]
      %s2528 = scalar_lea.vmem %s14, 1
      %v2529 = vld [vmem:[%s2528] sm:$0x1]
      %v2531 = vlaneseq
      %v2532 = vshrl.u32 %v2531, 7
      %v2533 = vsub.s32 0, %v2532
      %v2534 = vrot.slane %v2529, %v2533
      %v2552 = vunpack.c.l.b16 %v2512
      %v2553 = vunpack.c.l.b16 %v2513
      %v2554 = vunpack.c.l.b16 %v2514
      %v2555 = vunpack.c.l.b16 %v2515
      %v2556 = vunpack.c.l.b16 %v2516
      %v2557 = vunpack.c.l.b16 %v2517
      %v2558 = vunpack.c.l.b16 %v2518
      %v2559 = vunpack.c.l.b16 %v2519
      %v2560 = vunpack.c.l.b16 %v2520
      %v2561 = vunpack.c.l.b16 %v2521
      %v2562 = vunpack.c.l.b16 %v2522
      %v2563 = vunpack.c.l.b16 %v2523
      %v2564 = vunpack.c.l.b16 %v2524
      %v2565 = vunpack.c.l.b16 %v2525
      %v2566 = vunpack.c.l.b16 %v2526
      %v2567 = vunpack.c.l.b16 %v2527
      %v2568 = vpack.c.b16 %v2553, %v2552
      %v2569 = vpack.c.b16 %v2555, %v2554
      %v2570 = vpack.c.b16 %v2557, %v2556
      %v2571 = vpack.c.b16 %v2559, %v2558
      %v2572 = vpack.c.b16 %v2561, %v2560
      %v2573 = vpack.c.b16 %v2563, %v2562
      %v2574 = vpack.c.b16 %v2565, %v2564
      %v2575 = vpack.c.b16 %v2567, %v2566
      %2584 = vmatprep.subr.bf16.mxu0 0
      %2585 = vmatpush1.bf16.msra.mxu0 %v2575
      %2586 = vmatprep.subr.bf16.mxu0 0
      %2587 = vmatpush1.bf16.msra.mxu0 %v2574
      %2588 = vmatprep.subr.bf16.mxu0 0
      %2589 = vmatpush1.bf16.msra.mxu0 %v2573
      %2590 = vmatprep.subr.bf16.mxu0 0
      %2591 = vmatpush1.bf16.msra.mxu0 %v2572
      %2592 = vmatprep.subr.bf16.mxu0 0
      %2593 = vmatpush1.bf16.msra.mxu0 %v2571
      %2594 = vmatprep.subr.bf16.mxu0 0
      %2595 = vmatpush1.bf16.msra.mxu0 %v2570
      %2596 = vmatprep.subr.bf16.mxu0 0
      %2597 = vmatpush1.bf16.msra.mxu0 %v2569
      %2598 = vmatprep.subr.bf16.mxu0 0
      %2599 = vmatpush1.bf16.msra.mxu0 %v2568
      %2600 = vmatprep.subr.bf16.mxu0 0
      %2601 = vmatpush2.bf16.msra.mxu0 0
      %2602 = vmatprep.subr.bf16.mxu0 0
      %2603 = vmatpush2.bf16.msra.mxu0 0
      %2604 = vmatprep.subr.bf16.mxu0 0
      %2605 = vmatpush2.bf16.msra.mxu0 0
      %2606 = vmatprep.subr.bf16.mxu0 0
      %2607 = vmatpush2.bf16.msra.mxu0 0
      %2608 = vmatprep.subr.bf16.mxu0 0
      %2609 = vmatpush2.bf16.msra.mxu0 0
      %2610 = vmatprep.subr.bf16.mxu0 0
      %2611 = vmatpush2.bf16.msra.mxu0 0
      %2612 = vmatprep.subr.bf16.mxu0 0
      %2613 = vmatpush2.bf16.msra.mxu0 0
      %2614 = vmatprep.subr.bf16.mxu0 0
      %2615 = vmatpush2.bf16.msra.mxu0 0
      %2616 = vmatprep.mubr.bf16.mxu0 0
      %2617 = vmatmul.mubr.bf16.gmra.mxu0 %v2507
      %v2618 = vpop.f32.mrf.mxu0
      %v2619 = vadd.f32 %v2534, %v2618
      %v2620 = vpop.f32.mrf.mxu0
      %v2621 = vpop.f32.mrf.mxu0
      %v2622 = vadd.f32 %v2534, %v2621
      %v2623 = vpop.f32.mrf.mxu0
      %2624 = vmatprep.mubr.bf16.mxu0 0
      %2625 = vmatmul.mubr.bf16.gmra.mxu0 %v2508
      %v2626 = vpop.f32.mrf.mxu0
      %v2627 = vadd.f32 %v2534, %v2626
      %v2628 = vpop.f32.mrf.mxu0
      %v2629 = vpop.f32.mrf.mxu0
      %v2630 = vadd.f32 %v2534, %v2629
      %v2631 = vpop.f32.mrf.mxu0
      %2632 = vmatprep.mubr.bf16.mxu0 0
      %2633 = vmatmul.mubr.bf16.gmra.mxu0 %v2509
      %v2634 = vpop.f32.mrf.mxu0
      %v2635 = vadd.f32 %v2534, %v2634
      %v2636 = vpop.f32.mrf.mxu0
      %v2637 = vpop.f32.mrf.mxu0
      %v2638 = vadd.f32 %v2534, %v2637
      %v2639 = vpop.f32.mrf.mxu0
      %2640 = vmatprep.mubr.bf16.mxu0 0
      %2641 = vmatmul.mubr.bf16.gmra.mxu0 %v2510
      %v2642 = vpop.f32.mrf.mxu0
      %v2643 = vadd.f32 %v2534, %v2642
      %v2644 = vpop.f32.mrf.mxu0
      %v2645 = vpop.f32.mrf.mxu0
      %v2646 = vpop.f32.mrf.mxu0
      %2647 = vdwg.mxu0
      %vm2648 = vcmp.gt.f32.partialorder %v2619, 0.0
      %vm2649 = vcmp.gt.f32.partialorder %v2622, 0.0
      %vm2650 = vcmp.gt.f32.partialorder %v2627, 0.0
      %vm2651 = vcmp.gt.f32.partialorder %v2630, 0.0
      %vm2652 = vcmp.gt.f32.partialorder %v2635, 0.0
      %vm2653 = vcmp.gt.f32.partialorder %v2638, 0.0
      %vm2654 = vcmp.gt.f32.partialorder %v2643, 0.0
      %v2655 = vmin.f32 %v2619, 0.0
      %v2656 = vmin.f32 %v2622, 0.0
      %v2657 = vmin.f32 %v2627, 0.0
      %v2658 = vmin.f32 %v2630, 0.0
      %v2659 = vmin.f32 %v2635, 0.0
      %v2660 = vmin.f32 %v2638, 0.0
      %v2661 = vmin.f32 %v2643, 0.0
      %v2662 = vmul.f32 %v2655, 1.442695
      %v2663 = vpow.pop %v2662
      %v2664 = vmul.f32 %v2656, 1.442695
      %v2665 = vpow.pop %v2664
      %v2666 = vmul.f32 %v2657, 1.442695
      %v2667 = vpow.pop %v2666
      %v2668 = vmul.f32 %v2658, 1.442695
      %v2669 = vpow.pop %v2668
      %v2670 = vmul.f32 %v2659, 1.442695
      %v2671 = vpow.pop %v2670
      %v2672 = vmul.f32 %v2660, 1.442695
      %v2673 = vpow.pop %v2672
      %v2674 = vmul.f32 %v2661, 1.442695
      %v2675 = vpow.pop %v2674
      %v2676 = vsub.f32 %v2663, 1.0
      %v2677 = vsub.f32 %v2665, 1.0
      %v2678 = vsub.f32 %v2667, 1.0
      %v2679 = vsub.f32 %v2669, 1.0
      %v2680 = vsub.f32 %v2671, 1.0
      %v2681 = vsub.f32 %v2673, 1.0
      %v2682 = vsub.f32 %v2675, 1.0
      %v2683 = vsel %vm2648, %v2619, %v2676
      %v2684 = vsel %vm2649, %v2622, %v2677
      %v2685 = vsel %vm2650, %v2627, %v2678
      %v2686 = vsel %vm2651, %v2630, %v2679
      %v2687 = vsel %vm2652, %v2635, %v2680
      %v2688 = vsel %vm2653, %v2638, %v2681
      %v2689 = vsel %vm2654, %v2643, %v2682
      %v2690 = vpack.c.bf16 %v2684, %v2683
      %v2691 = vpack.c.bf16 %v2686, %v2685
      %v2692 = vpack.c.bf16 %v2688, %v2687
      %v2693 = vpack.c.bf16 %v2689, %v2689
      %v2695 = vsel %vm1055, %v2693, 0
      %2697 = vmatprep.subr.bf16.mxu0 0
      %2698 = vmatpush1.bf16.msra.mxu0 0
      %2699 = vmatprep.subr.bf16.mxu0 0
      %2700 = vmatpush1.bf16.msra.mxu0 0
      %2701 = vmatprep.subr.bf16.mxu0 0
      %2702 = vmatpush1.bf16.msra.mxu0 0
      %2703 = vmatprep.subr.bf16.mxu0 0
      %2704 = vmatpush1.bf16.msra.mxu0 0
      %2705 = vmatprep.subr.bf16.mxu0 0
      %2706 = vmatpush1.bf16.msra.mxu0 %v2695
      %2707 = vmatprep.subr.bf16.mxu0 0
      %2708 = vmatpush1.bf16.msra.mxu0 %v2692
      %2709 = vmatprep.subr.bf16.mxu0 0
      %2710 = vmatpush1.bf16.msra.mxu0 %v2691
      %2711 = vmatprep.subr.bf16.mxu0 0
      %2712 = vmatpush1.bf16.msra.mxu0 %v2690
      %2713 = vmatprep.subr.bf16.mxu0 0
      %2714 = vmatpush2.bf16.msra.mxu0 0
      %2715 = vmatprep.subr.bf16.mxu0 0
      %2716 = vmatpush2.bf16.msra.mxu0 0
      %2717 = vmatprep.subr.bf16.mxu0 0
      %2718 = vmatpush2.bf16.msra.mxu0 0
      %2719 = vmatprep.subr.bf16.mxu0 0
      %2720 = vmatpush2.bf16.msra.mxu0 0
      %2721 = vmatprep.subr.bf16.mxu0 0
      %2722 = vmatpush2.bf16.msra.mxu0 0
      %2723 = vmatprep.subr.bf16.mxu0 0
      %2724 = vmatpush2.bf16.msra.mxu0 0
      %2725 = vmatprep.subr.bf16.mxu0 0
      %2726 = vmatpush2.bf16.msra.mxu0 0
      %2727 = vmatprep.subr.bf16.mxu0 0
      %2728 = vmatpush2.bf16.msra.mxu0 0
      %2729 = vmatprep.mubr.bf16.mxu0 0
      %2730 = vmatmul.mubr.bf16.gmra.mxu0 %v1625
      %v2731 = vpop.f32.mrf.mxu0
      %v2732 = vadd.f32 0.0, %v2731
      %v2733 = vpop.f32.mrf.mxu0
      %v2734 = vpop.f32.mrf.mxu0
      %v2735 = vpop.f32.mrf.mxu0
      %2736 = vdwg.mxu0
      %s2737 = scalar_lea.vmem %s15, 64
      %v2738 = vld [vmem:[%s2737] sm:$0xf]
      %v2739 = vld [vmem:[%s2737 + $0x4] sm:$0xf]
      %v2740 = vld [vmem:[%s2737 + $0x8] sm:$0xf]
      %v2741 = vld [vmem:[%s2737 + $0xc] sm:$0xf]
      %v2742 = vld [vmem:[%s2737 + $0x10] sm:$0xf]
      %v2743 = vld [vmem:[%s2737 + $0x14] sm:$0xf]
      %v2744 = vld [vmem:[%s2737 + $0x18] sm:$0xf]
      %v2745 = vld [vmem:[%s2737 + $0x1c] sm:$0xf]
      %v2746 = vld [vmem:[%s2737 + $0x20] sm:$0xf]
      %v2747 = vld [vmem:[%s2737 + $0x24] sm:$0xf]
      %v2748 = vld [vmem:[%s2737 + $0x28] sm:$0xf]
      %v2749 = vld [vmem:[%s2737 + $0x2c] sm:$0xf]
      %v2750 = vld [vmem:[%s2737 + $0x30] sm:$0xf]
      %v2751 = vld [vmem:[%s2737 + $0x34] sm:$0xf]
      %v2752 = vld [vmem:[%s2737 + $0x38] sm:$0xf]
      %v2753 = vld [vmem:[%s2737 + $0x3c] sm:$0xf]
      %v2754 = vpack.c.bf16 %v2732, %v2732
      %s2755 = scalar_lea.vmem %s16, 64
      %v2756 = vld [vmem:[%s2755] sm:$0xf]
      %v2757 = vld [vmem:[%s2755 + $0x4] sm:$0xf]
      %v2758 = vld [vmem:[%s2755 + $0x8] sm:$0xf]
      %v2759 = vld [vmem:[%s2755 + $0xc] sm:$0xf]
      %v2760 = vld [vmem:[%s2755 + $0x10] sm:$0xf]
      %v2761 = vld [vmem:[%s2755 + $0x14] sm:$0xf]
      %v2762 = vld [vmem:[%s2755 + $0x18] sm:$0xf]
      %v2763 = vld [vmem:[%s2755 + $0x1c] sm:$0xf]
      %v2764 = vld [vmem:[%s2755 + $0x20] sm:$0xf]
      %v2765 = vld [vmem:[%s2755 + $0x24] sm:$0xf]
      %v2766 = vld [vmem:[%s2755 + $0x28] sm:$0xf]
      %v2767 = vld [vmem:[%s2755 + $0x2c] sm:$0xf]
      %v2768 = vld [vmem:[%s2755 + $0x30] sm:$0xf]
      %v2769 = vld [vmem:[%s2755 + $0x34] sm:$0xf]
      %v2770 = vld [vmem:[%s2755 + $0x38] sm:$0xf]
      %v2771 = vld [vmem:[%s2755 + $0x3c] sm:$0xf]
      %v2788 = vunpack.c.l.b16 %v2756
      %v2789 = vunpack.c.l.b16 %v2757
      %v2790 = vunpack.c.l.b16 %v2758
      %v2791 = vunpack.c.l.b16 %v2759
      %v2792 = vunpack.c.l.b16 %v2760
      %v2793 = vunpack.c.l.b16 %v2761
      %v2794 = vunpack.c.l.b16 %v2762
      %v2795 = vunpack.c.l.b16 %v2763
      %v2796 = vunpack.c.l.b16 %v2764
      %v2797 = vunpack.c.l.b16 %v2765
      %v2798 = vunpack.c.l.b16 %v2766
      %v2799 = vunpack.c.l.b16 %v2767
      %v2800 = vunpack.c.l.b16 %v2768
      %v2801 = vunpack.c.l.b16 %v2769
      %v2802 = vunpack.c.l.b16 %v2770
      %v2803 = vunpack.c.l.b16 %v2771
      %v2804 = vpack.c.b16 %v2789, %v2788
      %v2805 = vpack.c.b16 %v2791, %v2790
      %v2806 = vpack.c.b16 %v2793, %v2792
      %v2807 = vpack.c.b16 %v2795, %v2794
      %v2808 = vpack.c.b16 %v2797, %v2796
      %v2809 = vpack.c.b16 %v2799, %v2798
      %v2810 = vpack.c.b16 %v2801, %v2800
      %v2811 = vpack.c.b16 %v2803, %v2802
      %2820 = vmatprep.subr.bf16.mxu0 0
      %2821 = vmatpush1.bf16.msra.mxu0 %v2811
      %2822 = vmatprep.subr.bf16.mxu0 0
      %2823 = vmatpush1.bf16.msra.mxu0 %v2810
      %2824 = vmatprep.subr.bf16.mxu0 0
      %2825 = vmatpush1.bf16.msra.mxu0 %v2809
      %2826 = vmatprep.subr.bf16.mxu0 0
      %2827 = vmatpush1.bf16.msra.mxu0 %v2808
      %2828 = vmatprep.subr.bf16.mxu0 0
      %2829 = vmatpush1.bf16.msra.mxu0 %v2807
      %2830 = vmatprep.subr.bf16.mxu0 0
      %2831 = vmatpush1.bf16.msra.mxu0 %v2806
      %2832 = vmatprep.subr.bf16.mxu0 0
      %2833 = vmatpush1.bf16.msra.mxu0 %v2805
      %2834 = vmatprep.subr.bf16.mxu0 0
      %2835 = vmatpush1.bf16.msra.mxu0 %v2804
      %2836 = vmatprep.subr.bf16.mxu0 0
      %2837 = vmatpush2.bf16.msra.mxu0 0
      %2838 = vmatprep.subr.bf16.mxu0 0
      %2839 = vmatpush2.bf16.msra.mxu0 0
      %2840 = vmatprep.subr.bf16.mxu0 0
      %2841 = vmatpush2.bf16.msra.mxu0 0
      %2842 = vmatprep.subr.bf16.mxu0 0
      %2843 = vmatpush2.bf16.msra.mxu0 0
      %2844 = vmatprep.subr.bf16.mxu0 0
      %2845 = vmatpush2.bf16.msra.mxu0 0
      %2846 = vmatprep.subr.bf16.mxu0 0
      %2847 = vmatpush2.bf16.msra.mxu0 0
      %2848 = vmatprep.subr.bf16.mxu0 0
      %2849 = vmatpush2.bf16.msra.mxu0 0
      %2850 = vmatprep.subr.bf16.mxu0 0
      %2851 = vmatpush2.bf16.msra.mxu0 0
      %2852 = vmatprep.mubr.bf16.mxu0 0
      %2853 = vmatmul.mubr.bf16.gmra.mxu0 %v2754
      %v2854 = vpop.f32.mrf.mxu0
      %v2855 = vadd.f32 0.0, %v2854
      %v2856 = vpop.f32.mrf.mxu0
      %v2857 = vpop.f32.mrf.mxu0
      %v2858 = vpop.f32.mrf.mxu0
      %2859 = vdwg.mxu0
      %v2876 = vunpack.c.l.b16 %v2738
      %v2877 = vunpack.c.l.b16 %v2739
      %v2878 = vunpack.c.l.b16 %v2740
      %v2879 = vunpack.c.l.b16 %v2741
      %v2880 = vunpack.c.l.b16 %v2742
      %v2881 = vunpack.c.l.b16 %v2743
      %v2882 = vunpack.c.l.b16 %v2744
      %v2883 = vunpack.c.l.b16 %v2745
      %v2884 = vunpack.c.l.b16 %v2746
      %v2885 = vunpack.c.l.b16 %v2747
      %v2886 = vunpack.c.l.b16 %v2748
      %v2887 = vunpack.c.l.b16 %v2749
      %v2888 = vunpack.c.l.b16 %v2750
      %v2889 = vunpack.c.l.b16 %v2751
      %v2890 = vunpack.c.l.b16 %v2752
      %v2891 = vunpack.c.l.b16 %v2753
      %v2892 = vpack.c.b16 %v2877, %v2876
      %v2893 = vpack.c.b16 %v2879, %v2878
      %v2894 = vpack.c.b16 %v2881, %v2880
      %v2895 = vpack.c.b16 %v2883, %v2882
      %v2896 = vpack.c.b16 %v2885, %v2884
      %v2897 = vpack.c.b16 %v2887, %v2886
      %v2898 = vpack.c.b16 %v2889, %v2888
      %v2899 = vpack.c.b16 %v2891, %v2890
      %2908 = vmatprep.subr.bf16.mxu0 0
      %2909 = vmatpush1.bf16.msra.mxu0 %v2899
      %2910 = vmatprep.subr.bf16.mxu0 0
      %2911 = vmatpush1.bf16.msra.mxu0 %v2898
      %2912 = vmatprep.subr.bf16.mxu0 0
      %2913 = vmatpush1.bf16.msra.mxu0 %v2897
      %2914 = vmatprep.subr.bf16.mxu0 0
      %2915 = vmatpush1.bf16.msra.mxu0 %v2896
      %2916 = vmatprep.subr.bf16.mxu0 0
      %2917 = vmatpush1.bf16.msra.mxu0 %v2895
      %2918 = vmatprep.subr.bf16.mxu0 0
      %2919 = vmatpush1.bf16.msra.mxu0 %v2894
      %2920 = vmatprep.subr.bf16.mxu0 0
      %2921 = vmatpush1.bf16.msra.mxu0 %v2893
      %2922 = vmatprep.subr.bf16.mxu0 0
      %2923 = vmatpush1.bf16.msra.mxu0 %v2892
      %2924 = vmatprep.subr.bf16.mxu0 0
      %2925 = vmatpush2.bf16.msra.mxu0 0
      %2926 = vmatprep.subr.bf16.mxu0 0
      %2927 = vmatpush2.bf16.msra.mxu0 0
      %2928 = vmatprep.subr.bf16.mxu0 0
      %2929 = vmatpush2.bf16.msra.mxu0 0
      %2930 = vmatprep.subr.bf16.mxu0 0
      %2931 = vmatpush2.bf16.msra.mxu0 0
      %2932 = vmatprep.subr.bf16.mxu0 0
      %2933 = vmatpush2.bf16.msra.mxu0 0
      %2934 = vmatprep.subr.bf16.mxu0 0
      %2935 = vmatpush2.bf16.msra.mxu0 0
      %2936 = vmatprep.subr.bf16.mxu0 0
      %2937 = vmatpush2.bf16.msra.mxu0 0
      %2938 = vmatprep.subr.bf16.mxu0 0
      %2939 = vmatpush2.bf16.msra.mxu0 0
      %2940 = vmatprep.mubr.bf16.mxu0 0
      %2941 = vmatmul.mubr.bf16.gmra.mxu0 %v2005
      %v2942 = vpop.f32.mrf.mxu0
      %v2943 = vadd.f32 %v2855, %v2942
      %v2944 = vpop.f32.mrf.mxu0
      %v2945 = vpop.f32.mrf.mxu0
      %v2946 = vpop.f32.mrf.mxu0
      %2947 = vdwg.mxu0
      %s2948 = scalar_lea.vmem %s17, 1
      %v2949 = vld [vmem:[%s2948] sm:$0x1]
      %v2951 = vlaneseq
      %v2952 = vshrl.u32 %v2951, 7
      %v2953 = vsub.s32 0, %v2952
      %v2954 = vrot.slane %v2949, %v2953
      %v2956 = vadd.f32 %v2943, %v2954
      %vm2957 = vcmp.gt.f32.partialorder %v2956, 0.0
      %v2958 = vmin.f32 %v2956, 0.0
      %v2959 = vmul.f32 %v2958, 1.442695
      %v2960 = vpow.pop %v2959
      %v2961 = vsub.f32 %v2960, 1.0
      %v2962 = vsel %vm2957, %v2956, %v2961
      %v2963 = vpack.c.bf16 %v2962, %v2962
      %s2964 = scalar_lea.vmem %s18, 64
      %v2965 = vld [vmem:[%s2964] sm:$0xf]
      %v2966 = vld [vmem:[%s2964 + $0x4] sm:$0xf]
      %v2967 = vld [vmem:[%s2964 + $0x8] sm:$0xf]
      %v2968 = vld [vmem:[%s2964 + $0xc] sm:$0xf]
      %v2969 = vld [vmem:[%s2964 + $0x10] sm:$0xf]
      %v2970 = vld [vmem:[%s2964 + $0x14] sm:$0xf]
      %v2971 = vld [vmem:[%s2964 + $0x18] sm:$0xf]
      %v2972 = vld [vmem:[%s2964 + $0x1c] sm:$0xf]
      %v2973 = vld [vmem:[%s2964 + $0x20] sm:$0xf]
      %v2974 = vld [vmem:[%s2964 + $0x24] sm:$0xf]
      %v2975 = vld [vmem:[%s2964 + $0x28] sm:$0xf]
      %v2976 = vld [vmem:[%s2964 + $0x2c] sm:$0xf]
      %v2977 = vld [vmem:[%s2964 + $0x30] sm:$0xf]
      %v2978 = vld [vmem:[%s2964 + $0x34] sm:$0xf]
      %v2979 = vld [vmem:[%s2964 + $0x38] sm:$0xf]
      %v2980 = vld [vmem:[%s2964 + $0x3c] sm:$0xf]
      %s2981 = scalar_lea.vmem %s19, 1
      %v2982 = vld [vmem:[%s2981] sm:$0x1]
      %v2984 = vlaneseq
      %v2985 = vshrl.u32 %v2984, 7
      %v2986 = vsub.s32 0, %v2985
      %v2987 = vrot.slane %v2982, %v2986
      %v3005 = vunpack.c.l.b16 %v2965
      %v3006 = vunpack.c.l.b16 %v2966
      %v3007 = vunpack.c.l.b16 %v2967
      %v3008 = vunpack.c.l.b16 %v2968
      %v3009 = vunpack.c.l.b16 %v2969
      %v3010 = vunpack.c.l.b16 %v2970
      %v3011 = vunpack.c.l.b16 %v2971
      %v3012 = vunpack.c.l.b16 %v2972
      %v3013 = vunpack.c.l.b16 %v2973
      %v3014 = vunpack.c.l.b16 %v2974
      %v3015 = vunpack.c.l.b16 %v2975
      %v3016 = vunpack.c.l.b16 %v2976
      %v3017 = vunpack.c.l.b16 %v2977
      %v3018 = vunpack.c.l.b16 %v2978
      %v3019 = vunpack.c.l.b16 %v2979
      %v3020 = vunpack.c.l.b16 %v2980
      %v3021 = vpack.c.b16 %v3006, %v3005
      %v3022 = vpack.c.b16 %v3008, %v3007
      %v3023 = vpack.c.b16 %v3010, %v3009
      %v3024 = vpack.c.b16 %v3012, %v3011
      %v3025 = vpack.c.b16 %v3014, %v3013
      %v3026 = vpack.c.b16 %v3016, %v3015
      %v3027 = vpack.c.b16 %v3018, %v3017
      %v3028 = vpack.c.b16 %v3020, %v3019
      %3037 = vmatprep.subr.bf16.mxu0 0
      %3038 = vmatpush1.bf16.msra.mxu0 %v3028
      %3039 = vmatprep.subr.bf16.mxu0 0
      %3040 = vmatpush1.bf16.msra.mxu0 %v3027
      %3041 = vmatprep.subr.bf16.mxu0 0
      %3042 = vmatpush1.bf16.msra.mxu0 %v3026
      %3043 = vmatprep.subr.bf16.mxu0 0
      %3044 = vmatpush1.bf16.msra.mxu0 %v3025
      %3045 = vmatprep.subr.bf16.mxu0 0
      %3046 = vmatpush1.bf16.msra.mxu0 %v3024
      %3047 = vmatprep.subr.bf16.mxu0 0
      %3048 = vmatpush1.bf16.msra.mxu0 %v3023
      %3049 = vmatprep.subr.bf16.mxu0 0
      %3050 = vmatpush1.bf16.msra.mxu0 %v3022
      %3051 = vmatprep.subr.bf16.mxu0 0
      %3052 = vmatpush1.bf16.msra.mxu0 %v3021
      %3053 = vmatprep.subr.bf16.mxu0 0
      %3054 = vmatpush2.bf16.msra.mxu0 0
      %3055 = vmatprep.subr.bf16.mxu0 0
      %3056 = vmatpush2.bf16.msra.mxu0 0
      %3057 = vmatprep.subr.bf16.mxu0 0
      %3058 = vmatpush2.bf16.msra.mxu0 0
      %3059 = vmatprep.subr.bf16.mxu0 0
      %3060 = vmatpush2.bf16.msra.mxu0 0
      %3061 = vmatprep.subr.bf16.mxu0 0
      %3062 = vmatpush2.bf16.msra.mxu0 0
      %3063 = vmatprep.subr.bf16.mxu0 0
      %3064 = vmatpush2.bf16.msra.mxu0 0
      %3065 = vmatprep.subr.bf16.mxu0 0
      %3066 = vmatpush2.bf16.msra.mxu0 0
      %3067 = vmatprep.subr.bf16.mxu0 0
      %3068 = vmatpush2.bf16.msra.mxu0 0
      %3069 = vmatprep.mubr.bf16.mxu0 0
      %3070 = vmatmul.mubr.bf16.gmra.mxu0 %v2963
      %v3071 = vpop.f32.mrf.mxu0
      %v3072 = vadd.f32 %v2987, %v3071
      %v3073 = vpop.f32.mrf.mxu0
      %v3074 = vpop.f32.mrf.mxu0
      %v3075 = vpop.f32.mrf.mxu0
      %3076 = vdwg.mxu0
      %3077 = vst [vmem:[%s721] sm:$0xff] %v3072
      %p3078 = scmp.lt.s32.totalorder %s31, 1
      %s3079 = scalar_select %p3078, %s31, 1
      %s3080 = smul.addr %s3079, 8
      %s3081 = scalar_lea.vmem %s20, %s3080
      // Predicated region
      $region101: #{encoder_forward.1} parent=99 // pred_check
        %p3082 = pneg %p499
      $region102: #{encoder_forward.1} parent=99 // pred_check_branch
        %3084 = sbr.rel (%p3082) target = $region104
      $region103: #{encoder_forward.1} parent=99 // pred_region
        _
      $region104: #{encoder_forward.1} parent=99 // pred_fallthru
        _
    $region100: #{encoder_forward.1} parent=5 // pred_fallthru
      _
    %p3085 = scmp.le.s32.totalorder 2, %s26
    // Predicated region
    $region105: #{encoder_forward.1} parent=5 // pred_check
      %p3086 = pneg %p3085
    $region106: #{encoder_forward.1} parent=5 // pred_check_branch
      %3088 = sbr.rel (%p3086) target = $region108
    $region107: #{encoder_forward.1} parent=5 // pred_region
      %s3089 = ssub.s32 %s26, 2
      // Predicated region
      $region109: #{encoder_forward.1} parent=107 // pred_check
        %p3090 = pneg %p505
      $region110: #{encoder_forward.1} parent=107 // pred_check_branch
        %3092 = sbr.rel (%p3090) target = $region112
      $region111: #{encoder_forward.1} parent=107 // pred_region
        %p3093 = scmp.lt.s32.totalorder %s32, 1
        %s3094 = scalar_select %p3093, %s32, 1
        %s3095 = smul.addr %s3094, 8
        %s3096 = scalar_lea.vmem %s20, %s3095
      $region112: #{encoder_forward.1} parent=107 // pred_fallthru
        _
    $region108: #{encoder_forward.1} parent=5 // pred_fallthru
      _
  $region6: #{encoder_forward.1} parent=0 // loop_footer
    %s30 = sadd.s32 1, %s26
  $region7: #{encoder_forward.1} parent=0 // loop_footer_branch
    %25 = sbr.rel target = $region3
  $region8: #{encoder_forward.1} parent=0 // loop_exit
    _

</llo_original>
